<compile_context>
chip_gen: v7x
topology: tpu7x:2x2x1
jax: 0.10.0
libtpu: 0.0.40
codegen_flags: <defaults>
</compile_context>

<pallas_src>
import math
import functools

import jax
import jax.numpy as jnp
from jax.experimental import pallas as pl
from jax.experimental.pallas import tpu as pltpu

LR_MUL = 0.01
HID = 1024
OUT_DIM = 512
LAYER_DIMS = [(HID, HID)] * 7 + [(HID, OUT_DIM)]
SQRT2 = math.sqrt(2.0)


# ------------------------------ Pallas kernel -------------------------------

def _mapper_fused_kernel(x_ref, w_ref, b_ref, o_ref, act_ref):
    """One grid step == one EqualLinear layer.

    x_ref   : (Bp, 1024)  f32   input latents (same block every step)
    w_ref   : (1024, 1024) bf16 this layer's weight, equalized-lr scale folded in
    b_ref   : (1, 1024)   f32   this layer's bias, lr_mul folded in
    o_ref   : (Bp, 512)   f32   final output (written on the last step)
    act_ref : (Bp, 1024)  f32   VMEM-resident activation carried across steps
    """
    l = pl.program_id(0)

    # Fused PixelNorm on the very first step.
    @pl.when(l == 0)
    def _():
        x0 = x_ref[...].astype(jnp.float32)
        ms = jnp.mean(x0 * x0, axis=-1, keepdims=True)
        act_ref[...] = x0 * jax.lax.rsqrt(ms + 1e-8)

    # EqualLinear + fused leaky-relu.  bf16 x bf16 on the MXU, f32 accumulate.
    x = act_ref[...]                                          # (Bp, 1024) f32
    w = w_ref[...]                                            # (1024, 1024) bf16
    y = jnp.dot(x.astype(w.dtype), w, preferred_element_type=jnp.float32)
    y = y + b_ref[...]                                        # bias (lr_mul folded)
    y = jnp.where(y >= 0.0, y, 0.2 * y) * jnp.float32(SQRT2)  # fused_lrelu
    act_ref[...] = y

    # Epilogue: only the first OUT_DIM columns of the zero-padded last layer are real.
    @pl.when(l == pl.num_programs(0) - 1)
    def _():
        o_ref[...] = y[:, : o_ref.shape[-1]].astype(o_ref.dtype)


# -------------------------------- wrapper ------------------------------------

def mapper_cat_forward(x, params):
    """x: (B, 1024) f32. params: (w_stacked (L,1024,1024) bf16, b_stacked (L,1,1024) f32)."""
    w_stacked, b_stacked = params
    num_layers, din, dpad = w_stacked.shape
    B = x.shape[0]

    # Pad batch to a sublane multiple (>=8): clean (unmasked) stores, trivial cost.
    b_pad = max(8, -(-B // 8) * 8)
    if b_pad != B:
        x = jnp.pad(x, ((0, b_pad - B), (0, 0)))

    out = pl.pallas_call(
        _mapper_fused_kernel,
        out_shape=jax.ShapeDtypeStruct((b_pad, OUT_DIM), jnp.float32),
        grid=(num_layers,),
        in_specs=[
            pl.BlockSpec((b_pad, din), lambda l: (0, 0)),        # x, resident
            pl.BlockSpec((None, din, dpad), lambda l: (l, 0, 0)),  # weight stream
            pl.BlockSpec((None, 1, dpad), lambda l: (l, 0, 0)),    # bias stream
        ],
        out_specs=pl.BlockSpec((b_pad, OUT_DIM), lambda l: (0, 0)),
        scratch_shapes=[pltpu.VMEM((b_pad, dpad), jnp.float32)],   # carried activation
        compiler_params=pltpu.CompilerParams(
            dimension_semantics=("arbitrary",),   # layers are a sequential carry
            vmem_limit_bytes=32 * 1024 * 1024,    # 2 MiB bf16 tiles x buffers + scratch
        ),
    )(x, w_stacked, b_stacked)
    return out[:B]


# ------------------------------ parameters -----------------------------------

def init_raw_params(key):
    """PyTorch-style EqualLinear parameters: weight (out,in) = randn/lr_mul, bias randn."""
    raw = []
    for (din, dout) in LAYER_DIMS:
        key, kw, kb = jax.random.split(key, 3)
        w = jax.random.normal(kw, (dout, din), dtype=jnp.float32) / LR_MUL
        b = jax.random.normal(kb, (dout,), dtype=jnp.float32)
        raw.append((w, b))
    return raw


def prepare_params(raw, weight_dtype=jnp.bfloat16):
    """Fold equalized-lr scale into W and lr_mul into b, transpose W to (in,out),
    zero-pad the last layer to HID outputs, stack, and cast weights to bf16."""
    ws, bs = [], []
    for (w, b) in raw:
        dout, din = w.shape
        scale = (1.0 / math.sqrt(din)) * LR_MUL
        w_t = jnp.transpose(w) * scale              # (din, dout) f32, |w_t| ~ 0.03
        b_s = b * LR_MUL
        if dout < HID:
            w_t = jnp.pad(w_t, ((0, 0), (0, HID - dout)))
            b_s = jnp.pad(b_s, (0, HID - dout))
        ws.append(w_t.astype(weight_dtype))
        bs.append(b_s.reshape(1, HID).astype(jnp.float32))
    return jnp.stack(ws), jnp.stack(bs)


# ------------------------------ references -----------------------------------

def mapper_cat_ref_f32(x, raw):
    """Exact f32 math of the PyTorch module."""
    x = x * jax.lax.rsqrt(jnp.mean(x * x, axis=-1, keepdims=True) + 1e-8)
    for (w, b) in raw:
        din = w.shape[1]
        scale = (1.0 / math.sqrt(din)) * LR_MUL
        y = jnp.dot(x, w.T * scale, precision=jax.lax.Precision.HIGHEST) + b * LR_MUL
        x = jnp.where(y >= 0.0, y, 0.2 * y) * math.sqrt(2.0)
    return x


def mapper_cat_ref_matched(x, params):
    """Same math with the same bf16 weight / bf16 matmul-input precision the
    kernel uses (f32 accumulation), for a tight apples-to-apples check."""
    w_stacked, b_stacked = params
    x = x * jax.lax.rsqrt(jnp.mean(x * x, axis=-1, keepdims=True) + 1e-8)
    for l in range(w_stacked.shape[0]):
        y = jnp.dot(x.astype(w_stacked.dtype), w_stacked[l],
                    preferred_element_type=jnp.float32) + b_stacked[l]
        x = jnp.where(y >= 0.0, y, 0.2 * y) * jnp.float32(SQRT2)
    return x[:, :OUT_DIM]


# --------------------------------- main ---------------------------------------

if __name__ == "__main__":
    key = jax.random.PRNGKey(0)
    key, pkey, xkey = jax.random.split(key, 3)

    raw = init_raw_params(pkey)
    params = prepare_params(raw)   # bf16 weights, scale / lr_mul pre-folded

    B = 2
    x = jax.random.normal(xkey, (B, HID), dtype=jnp.float32)

    fwd = jax.jit(mapper_cat_forward)
    out = jax.block_until_ready(fwd(x, params))
    assert out.shape == (B, OUT_DIM), out.shape

    # (1) tight check against a pure-JAX reference using the same mixed-precision
    #     choices as the kernel (bf16 weights/matmul inputs, f32 accumulation).
    ref_m = mapper_cat_ref_matched(x, params)
    err_m = float(jnp.max(jnp.abs(out - ref_m)))
    assert jnp.allclose(out, ref_m, atol=1e-2, rtol=1e-2), err_m

    # (2) sanity check against the exact f32 PyTorch math (bf16 weight storage
    #     introduces ~1e-2-level deviations across 8 layers of 1024-wide matmuls).
    ref_f = mapper_cat_ref_f32(x, raw)
    err_f = float(jnp.max(jnp.abs(out - ref_f)))
    assert jnp.allclose(out, ref_f, atol=5e-2, rtol=5e-2), err_f

    print("KERNEL_OK")
</pallas_src>

<mosaic_0001>
module attributes {stable_mosaic.version = 11 : i64} {
  func.func @_mapper_fused_kernel(%arg0: i32, %arg1: memref<8x1024xf32, #tpu.memory_space<vmem>>, %arg2: memref<1x1024x1024xbf16, #tpu.memory_space<vmem>>, %arg3: memref<1x1x1024xf32, #tpu.memory_space<vmem>>, %arg4: memref<8x512xf32, #tpu.memory_space<vmem>>, %arg5: memref<8x1024xf32, #tpu.memory_space<vmem>>) attributes {dimension_semantics = [#tpu.dimension_semantics<arbitrary>], iteration_bounds = array<i64: 8>, scalar_prefetch = 0 : i64, scratch_operands = 1 : i64, tpu.core_type = #tpu.core_type<tc>, window_params = [{pipeline_mode = #tpu.pipeline_mode<synchronous>, transform_indices = @transform_0, window_bounds = array<i64: 8, 1024>}, {transform_indices = @transform_1, window_bounds = array<i64: 1, 1024, 1024>}, {transform_indices = @transform_2, window_bounds = array<i64: 1, 1, 1024>}, {pipeline_mode = #tpu.pipeline_mode<synchronous>, transform_indices = @transform_3, window_bounds = array<i64: 8, 512>}]} {
    %c0_i32 = arith.constant 0 : i32
    %0 = arith.cmpi eq, %arg0, %c0_i32 : i32
    %1 = arith.extui %0 : i1 to i32
    %c0_i32_0 = arith.constant 0 : i32
    %2 = arith.cmpi ne, %1, %c0_i32_0 : i32
    scf.if %2 {
      %c0_14 = arith.constant 0 : index
      %c0_15 = arith.constant 0 : index
      %23 = vector.load %arg1[%c0_14, %c0_15] : memref<8x1024xf32, #tpu.memory_space<vmem>>, vector<8x1024xf32>
      %24 = arith.mulf %23, %23 : vector<8x1024xf32>
      %cst_16 = arith.constant dense<0.000000e+00> : vector<8xf32>
      %25 = vector.multi_reduction <add>, %24, %cst_16 [1] : vector<8x1024xf32> to vector<8xf32>
      %26 = vector.shape_cast %25 : vector<8xf32> to vector<8x1xf32>
      %cst_17 = arith.constant 1.024000e+03 : f32
      %27 = vector.broadcast %cst_17 : f32 to vector<8x1xf32>
      %28 = arith.divf %26, %27 : vector<8x1xf32>
      %cst_18 = arith.constant 9.99999993E-9 : f32
      %29 = vector.broadcast %cst_18 : f32 to vector<8x1xf32>
      %30 = arith.addf %28, %29 : vector<8x1xf32>
      %31 = math.rsqrt %30 : vector<8x1xf32>
      %32 = vector.broadcast %31 : vector<8x1xf32> to vector<8x1024xf32>
      %33 = arith.mulf %23, %32 : vector<8x1024xf32>
      %c0_19 = arith.constant 0 : index
      %c0_20 = arith.constant 0 : index
      %34 = vector.load %arg5[%c0_19, %c0_20] : memref<8x1024xf32, #tpu.memory_space<vmem>>, vector<8x1024xf32>
      tpu.vector_store %arg5[%c0_19, %c0_20], %33 {strides = array<i32>} : memref<8x1024xf32, #tpu.memory_space<vmem>>, vector<8x1024xf32>,
    } else {
    }
    %c0 = arith.constant 0 : index
    %c0_1 = arith.constant 0 : index
    %3 = vector.load %arg5[%c0, %c0_1] : memref<8x1024xf32, #tpu.memory_space<vmem>>, vector<8x1024xf32>
    %c0_2 = arith.constant 0 : index
    %c0_3 = arith.constant 0 : index
    %c0_4 = arith.constant 0 : index
    %4 = vector.load %arg2[%c0_2, %c0_3, %c0_4] : memref<1x1024x1024xbf16, #tpu.memory_space<vmem>>, vector<1x1024x1024xbf16>
    %5 = vector.shape_cast %4 : vector<1x1024x1024xbf16> to vector<1024x1024xbf16>
    %6 = arith.truncf %3 : vector<8x1024xf32> to vector<8x1024xbf16>
    %cst = arith.constant dense<0.000000e+00> : vector<8x1024xf32>
    %7 = tpu.matmul %6, %5, %cst {dimension_numbers = #tpu.dot_dimension_numbers<[1], [0], [0], [1], [0, 0, 1, 1], [], []>} : vector<8x1024xbf16>, vector<1024x1024xbf16>, vector<8x1024xf32> -> vector<8x1024xf32>
    %c0_5 = arith.constant 0 : index
    %c0_6 = arith.constant 0 : index
    %c0_7 = arith.constant 0 : index
    %8 = vector.load %arg3[%c0_5, %c0_6, %c0_7] : memref<1x1x1024xf32, #tpu.memory_space<vmem>>, vector<1x1x1024xf32>
    %9 = vector.shape_cast %8 : vector<1x1x1024xf32> to vector<1x1024xf32>
    %10 = vector.broadcast %9 : vector<1x1024xf32> to vector<8x1024xf32>
    %11 = arith.addf %7, %10 : vector<8x1024xf32>
    %cst_8 = arith.constant 0.000000e+00 : f32
    %12 = vector.broadcast %cst_8 : f32 to vector<8x1024xf32>
    %13 = arith.cmpf oge, %11, %12 : vector<8x1024xf32>
    %cst_9 = arith.constant 2.000000e-01 : f32
    %14 = vector.broadcast %cst_9 : f32 to vector<8x1024xf32>
    %15 = arith.mulf %14, %11 : vector<8x1024xf32>
    %16 = arith.select %13, %11, %15 : vector<8x1024xi1>, vector<8x1024xf32>
    %cst_10 = arith.constant 1.41421354 : f32
    %17 = vector.broadcast %cst_10 : f32 to vector<8x1024xf32>
    %18 = arith.mulf %16, %17 : vector<8x1024xf32>
    %c0_11 = arith.constant 0 : index
    %c0_12 = arith.constant 0 : index
    %19 = vector.load %arg5[%c0_11, %c0_12] : memref<8x1024xf32, #tpu.memory_space<vmem>>, vector<8x1024xf32>
    tpu.vector_store %arg5[%c0_11, %c0_12], %18 {strides = array<i32>} : memref<8x1024xf32, #tpu.memory_space<vmem>>, vector<8x1024xf32>,
    %c7_i32 = arith.constant 7 : i32
    %20 = arith.cmpi eq, %arg0, %c7_i32 : i32
    %21 = arith.extui %20 : i1 to i32
    %c0_i32_13 = arith.constant 0 : i32
    %22 = arith.cmpi ne, %21, %c0_i32_13 : i32
    scf.if %22 {
      %23 = vector.extract_strided_slice %18 {offsets = [0, 0], sizes = [8, 512], strides = [1, 1]} : vector<8x1024xf32> to vector<8x512xf32>
      %c0_14 = arith.constant 0 : index
      %c0_15 = arith.constant 0 : index
      %24 = vector.load %arg4[%c0_14, %c0_15] : memref<8x512xf32, #tpu.memory_space<vmem>>, vector<8x512xf32>
      tpu.vector_store %arg4[%c0_14, %c0_15], %23 {strides = array<i32>} : memref<8x512xf32, #tpu.memory_space<vmem>>, vector<8x512xf32>,
    } else {
    }
    return
  }
  func.func @transform_0(%arg0: i32) -> (i32, i32) {
    %c0_i32 = arith.constant 0 : i32
    %c0_i32_0 = arith.constant 0 : i32
    %c0_i32_1 = arith.constant 0 : i32
    return %c0_i32, %c0_i32_0 : i32, i32
  }
  func.func @transform_1(%arg0: i32) -> (i32, i32, i32) {
    %c0_i32 = arith.constant 0 : i32
    %c0_i32_0 = arith.constant 0 : i32
    %c0_i32_1 = arith.constant 0 : i32
    return %arg0, %c0_i32, %c0_i32_0 : i32, i32, i32
  }
  func.func @transform_2(%arg0: i32) -> (i32, i32, i32) {
    %c0_i32 = arith.constant 0 : i32
    %c0_i32_0 = arith.constant 0 : i32
    %c0_i32_1 = arith.constant 0 : i32
    return %arg0, %c0_i32, %c0_i32_0 : i32, i32, i32
  }
  func.func @transform_3(%arg0: i32) -> (i32, i32) {
    %c0_i32 = arith.constant 0 : i32
    %c0_i32_0 = arith.constant 0 : i32
    %c0_i32_1 = arith.constant 0 : i32
    return %c0_i32, %c0_i32_0 : i32, i32
  }
}

</mosaic_0001>

<llo_original>
// kernel: mapper_cat_forward.1
$region0: #{mapper_cat_forward.1}
  #allocation0 [shape = 'u32[]', space=smem, size = 0x4, offset = 0x4, fixed_abs, tag = 'smem constant byte address 0x4 - core index']
  #allocation1 [shape = 'u32[144,128]{1,0:T(1,128)}', space=vmem, size = 0x12000, scoped, tag = 'internal scratch']
  #allocation2 [shape = 'f32[8,1024]{1,0:T(8,128)}', space=vmem, size = 0x8000, scoped, tag = 'scratch operand']
  %s0 = inlined_call_operand.vmem [shape: f32[8,1024], index: 0, kind: input, shape index: {}]
  %s1 = inlined_call_operand.hbm [shape: bf16[8,1024,1024], index: 1, kind: input, shape index: {}]
  %s2 = inlined_call_operand.hbm [shape: f32[8,1,1024], index: 2, kind: input, shape index: {}]
  %s3 = inlined_call_operand.vmem [shape: f32[8,512], index: 3, kind: output, shape index: {}]
  %s4 = sld [smem:[#allocation0]]
  $region61: #{mapper_cat_forward.1} parent=0
    _
  %s6 = ssub.s32 1, %s4
  %s7 = scalar_select 0, %s6, %s4
  $region1: #{mapper_cat_forward.1} parent=0
    #allocation3 [shape = 'u8[4194304]{0}', space=vmem, size = 0x400000, scoped, tag = 'input window, operand 1']
    #allocation4 [shape = 's32[2]{0}', space=sflag, size = 0x8, scoped, tag = 'scoped memory for mapper_cat_forward.1']
    #allocation5 [shape = 'u8[8192]{0}', space=vmem, size = 0x2000, scoped, tag = 'input window, operand 2']
    #allocation6 [shape = 's32[2]{0}', space=sflag, size = 0x8, scoped, tag = 'scoped memory for mapper_cat_forward.1']
    %8 = vsyncpa [#allocation4], 0
    %s9 = scalar_lea.sflag [#allocation4], 1
    %10 = vsyncpa %s9, 0
    %11 = vsyncpa [#allocation6], 0
    %s12 = scalar_lea.sflag [#allocation6], 1
    %13 = vsyncpa %s12, 0
    loop: start=0, step=1, limit=10
    $region2: #{mapper_cat_forward.1} parent=1 // loop_pre_header
      _
    $region3: #{mapper_cat_forward.1} parent=1 // loop_header
      %s15 = sphi 0, %s19
      %p16 = scmp.ge.s32.totalorder %s15, 10
      %s23 = sphi 0, %s23
      %s25 = sphi 0, %s23
      %s26 = sphi 0, %s25
      %s40 = sphi 0, %s26
      %s46 = sphi 0, %s48
      %s49 = sphi 0, %s46
      %s50 = sphi 0, %s49
      %s66 = sphi 0, %s50
      %s72 = sphi 0, %s74
      %s75 = sphi 0, %s72
      %s76 = sphi 0, %s75
      %s92 = sphi 0, %s76
      %s96 = sphi 0, %s96
      %s98 = sphi 0, %s96
      %s99 = sphi 0, %s98
      %s113 = sphi 0, %s99
    $region4: #{mapper_cat_forward.1} parent=1 // loop_header_branch
      %18 = sbr.rel (%p16) target = $region8
    $region5: #{mapper_cat_forward.1} parent=1 // loop_body
      %s20 = ssub.s32 %s15, 1
      %s21 = ssub.s32 %s15, 2
      %s22 = sadd.s32 %s15, 1
      %s24 = sadd.s32 %s23, 1
      %p27 = scmp.eq.s32.totalorder %s15, 7
      %p28 = scmp.ne.s32.totalorder %s23, %s25
      %p29 = scmp.eq.s32.totalorder %s15, 0
      %p30 = por %p28, %p29
      %p31 = scmp.ne.s32.totalorder %s23, %s25
      %p32 = scmp.eq.s32.totalorder %s20, 7
      %p33 = por %p31, %p32
      %p34 = scmp.ne.s32.totalorder %s25, %s26
      %p35 = scmp.eq.s32.totalorder %s20, 0
      %p36 = por %p34, %p35
      %p37 = scmp.ne.s32.totalorder %s25, %s26
      %p38 = scmp.eq.s32.totalorder %s21, 7
      %p39 = por %p37, %p38
      %p41 = scmp.ne.s32.totalorder %s26, %s40
      %p42 = scmp.eq.s32.totalorder %s21, 0
      %p43 = por %p41, %p42
      %s44 = ssub.s32 %s15, %s22
      %p45 = scmp.eq.s32.totalorder %s44, 0
      %s47 = sadd.s32 %s46, 1
      %s48 = scalar_select %p45, %s46, %s47
      %p51 = pneg %p45
      %p52 = scmp.eq.s32.totalorder %s15, 7
      %p53 = por %p51, %p52
      %p54 = scmp.ne.s32.totalorder %s46, %s49
      %p55 = scmp.eq.s32.totalorder %s15, 0
      %p56 = por %p54, %p55
      %p57 = scmp.ne.s32.totalorder %s46, %s49
      %p58 = scmp.eq.s32.totalorder %s20, 7
      %p59 = por %p57, %p58
      %p60 = scmp.ne.s32.totalorder %s49, %s50
      %p61 = scmp.eq.s32.totalorder %s20, 0
      %p62 = por %p60, %p61
      %p63 = scmp.ne.s32.totalorder %s49, %s50
      %p64 = scmp.eq.s32.totalorder %s21, 7
      %p65 = por %p63, %p64
      %p67 = scmp.ne.s32.totalorder %s50, %s66
      %p68 = scmp.eq.s32.totalorder %s21, 0
      %p69 = por %p67, %p68
      %s70 = ssub.s32 %s15, %s22
      %p71 = scmp.eq.s32.totalorder %s70, 0
      %s73 = sadd.s32 %s72, 1
      %s74 = scalar_select %p71, %s72, %s73
      %p77 = pneg %p71
      %p78 = scmp.eq.s32.totalorder %s15, 7
      %p79 = por %p77, %p78
      %p80 = scmp.ne.s32.totalorder %s72, %s75
      %p81 = scmp.eq.s32.totalorder %s15, 0
      %p82 = por %p80, %p81
      %p83 = scmp.ne.s32.totalorder %s72, %s75
      %p84 = scmp.eq.s32.totalorder %s20, 7
      %p85 = por %p83, %p84
      %p86 = scmp.ne.s32.totalorder %s75, %s76
      %p87 = scmp.eq.s32.totalorder %s20, 0
      %p88 = por %p86, %p87
      %p89 = scmp.ne.s32.totalorder %s75, %s76
      %p90 = scmp.eq.s32.totalorder %s21, 7
      %p91 = por %p89, %p90
      %p93 = scmp.ne.s32.totalorder %s76, %s92
      %p94 = scmp.eq.s32.totalorder %s21, 0
      %p95 = por %p93, %p94
      %s97 = sadd.s32 %s96, 1
      %p100 = scmp.eq.s32.totalorder %s15, 7
      %p101 = scmp.ne.s32.totalorder %s96, %s98
      %p102 = scmp.eq.s32.totalorder %s15, 0
      %p103 = por %p101, %p102
      %p104 = scmp.ne.s32.totalorder %s96, %s98
      %p105 = scmp.eq.s32.totalorder %s20, 7
      %p106 = por %p104, %p105
      %p107 = scmp.ne.s32.totalorder %s98, %s99
      %p108 = scmp.eq.s32.totalorder %s20, 0
      %p109 = por %p107, %p108
      %p110 = scmp.ne.s32.totalorder %s98, %s99
      %p111 = scmp.eq.s32.totalorder %s21, 7
      %p112 = por %p110, %p111
      %p114 = scmp.ne.s32.totalorder %s99, %s113
      %p115 = scmp.eq.s32.totalorder %s21, 0
      %p116 = por %p114, %p115
      %p117 = scmp.le.s32.totalorder 1, %s15
      %p118 = scmp.lt.s32.totalorder %s15, 9
      %p119 = pnand %p117, %p118
      %p120 = pneg %p119
      // Predicated region
      $region9: #{mapper_cat_forward.1} parent=5 // pred_check
        _
      $region10: #{mapper_cat_forward.1} parent=5 // pred_check_branch
        %122 = sbr.rel (%p119) target = $region12
      $region11: #{mapper_cat_forward.1} parent=5 // pred_region
        %s123 = ssub.s32 %s15, 1
        // Predicated region
        $region13: #{mapper_cat_forward.1} parent=11 // pred_check
          %p124 = pneg %p36
        $region14: #{mapper_cat_forward.1} parent=11 // pred_check_branch
          %126 = sbr.rel (%p124) target = $region16
        $region15: #{mapper_cat_forward.1} parent=11 // pred_region
          _
        $region16: #{mapper_cat_forward.1} parent=11 // pred_fallthru
          _
      $region12: #{mapper_cat_forward.1} parent=5 // pred_fallthru
        _
      %p127 = scmp.lt.s32.totalorder %s15, 8
      // Predicated region
      $region17: #{mapper_cat_forward.1} parent=5 // pred_check
        %p128 = pneg %p127
      $region18: #{mapper_cat_forward.1} parent=5 // pred_check_branch
        %130 = sbr.rel (%p128) target = $region20
      $region19: #{mapper_cat_forward.1} parent=5 // pred_region
        // Predicated region
        $region21: #{mapper_cat_forward.1} parent=19 // pred_check
          %p131 = pneg %p56
        $region22: #{mapper_cat_forward.1} parent=19 // pred_check_branch
          %133 = sbr.rel (%p131) target = $region24
        $region23: #{mapper_cat_forward.1} parent=19 // pred_region
          %s134 = sand.u32 %s46, 1
          %s135 = scalar_lea.sflag [#allocation4], %s134
          %s136 = sand.u32 %s46, 1
          %s137 = smul.addr %s136, 4096
          %s138 = scalar_lea.vmem [#allocation3], %s137
          %s140 = ssub.s32 65536, 65536
          %141 = vsyncadd %s135, %s140
          %s142 = smul.addr %s15, 1024
          %s143 = smul.addr %s142, 64
          %s144 = scalar_lea.hbm %s1, %s143
          %s145 = sshll.u32 %s138, 4
          %s146 = int_to_ptr.vmem [resolvable:$true] %s145
          %151 = dma.hbm_to_vmem [thread:$0]  %s144, 65536, %s146, %s135, 512, 512, 32
        $region24: #{mapper_cat_forward.1} parent=19 // pred_fallthru
          _
        // Predicated region
        $region25: #{mapper_cat_forward.1} parent=19 // pred_check
          %p152 = pneg %p82
        $region26: #{mapper_cat_forward.1} parent=19 // pred_check_branch
          %154 = sbr.rel (%p152) target = $region28
        $region27: #{mapper_cat_forward.1} parent=19 // pred_region
          %s155 = sand.u32 %s72, 1
          %s156 = scalar_lea.sflag [#allocation6], %s155
          %s157 = sand.u32 %s72, 1
          %s158 = smul.addr %s157, 8
          %s159 = scalar_lea.vmem [#allocation5], %s158
          %s161 = ssub.s32 128, 128
          %162 = vsyncadd %s156, %s161
          %s163 = smul.addr %s15, 8
          %s164 = smul.addr %s163, 16
          %s165 = scalar_lea.hbm %s2, %s164
          %s167 = sshll.u32 %s159, 4
          %s168 = int_to_ptr.vmem [resolvable:$true] %s167
          %170 = dma.hbm_to_vmem [thread:$0]  %s165, 128, %s168, %s156
        $region28: #{mapper_cat_forward.1} parent=19 // pred_fallthru
          _
      $region20: #{mapper_cat_forward.1} parent=5 // pred_fallthru
        _
      %p171 = scmp.le.s32.totalorder 1, %s15
      %p172 = scmp.lt.s32.totalorder %s15, 9
      %p173 = pnand %p171, %p172
      %p174 = pneg %p173
      // Predicated region
      $region29: #{mapper_cat_forward.1} parent=5 // pred_check
        _
      $region30: #{mapper_cat_forward.1} parent=5 // pred_check_branch
        %176 = sbr.rel (%p173) target = $region32
      $region31: #{mapper_cat_forward.1} parent=5 // pred_region
        %s177 = ssub.s32 %s15, 1
        %s178 = sand.u32 %s49, 1
        %s179 = scalar_lea.sflag [#allocation4], %s178
        %s180 = sand.u32 %s49, 1
        %s181 = smul.addr %s180, 4096
        %s182 = scalar_lea.vmem [#allocation3], %s181
        // Predicated region
        $region33: #{mapper_cat_forward.1} parent=31 // pred_check
          %p183 = pneg %p62
        $region34: #{mapper_cat_forward.1} parent=31 // pred_check_branch
          %185 = sbr.rel (%p183) target = $region36
        $region35: #{mapper_cat_forward.1} parent=31 // pred_region
          %186 = dma.done %s179, 65536
        $region36: #{mapper_cat_forward.1} parent=31 // pred_fallthru
          _
        %s187 = sand.u32 %s75, 1
        %s188 = scalar_lea.sflag [#allocation6], %s187
        %s189 = sand.u32 %s75, 1
        %s190 = smul.addr %s189, 8
        %s191 = scalar_lea.vmem [#allocation5], %s190
        // Predicated region
        $region37: #{mapper_cat_forward.1} parent=31 // pred_check
          %p192 = pneg %p88
        $region38: #{mapper_cat_forward.1} parent=31 // pred_check_branch
          %194 = sbr.rel (%p192) target = $region40
        $region39: #{mapper_cat_forward.1} parent=31 // pred_region
          %195 = dma.done %s188, 128
        $region40: #{mapper_cat_forward.1} parent=31 // pred_fallthru
          _
        %p196 = pneg %p36
        %p197 = pneg %p33
        %s198 = sand.u32 %s49, 1
        %s199 = scalar_lea.sflag [#allocation4], %s198
        %s200 = sand.u32 %s49, 1
        %s201 = smul.addr %s200, 4096
        %s202 = scalar_lea.vmem [#allocation3], %s201
        %p203 = pneg %p62
        %p204 = pneg %p59
        %s205 = sand.u32 %s75, 1
        %s206 = scalar_lea.sflag [#allocation6], %s205
        %s207 = sand.u32 %s75, 1
        %s208 = smul.addr %s207, 8
        %s209 = scalar_lea.vmem [#allocation5], %s208
        %p210 = pneg %p88
        %p211 = pneg %p85
        %p212 = pneg %p109
        %p213 = pneg %p106
        %p214 = scmp.eq.s32.totalorder %s20, 0
        // Predicated region
        $region41: #{mapper_cat_forward.1} parent=31 // pred_check
          %p215 = pneg %p214
        $region42: #{mapper_cat_forward.1} parent=31 // pred_check_branch
          %217 = sbr.rel (%p215) target = $region44
        $region43: #{mapper_cat_forward.1} parent=31 // pred_region
          %v218 = vld [vmem:[%s0] sm:$0xff]
          %v219 = vld [vmem:[%s0 + $0x8] sm:$0xff]
          %v220 = vld [vmem:[%s0 + $0x10] sm:$0xff]
          %v221 = vld [vmem:[%s0 + $0x18] sm:$0xff]
          %v222 = vld [vmem:[%s0 + $0x20] sm:$0xff]
          %v223 = vld [vmem:[%s0 + $0x28] sm:$0xff]
          %v224 = vld [vmem:[%s0 + $0x30] sm:$0xff]
          %v225 = vld [vmem:[%s0 + $0x38] sm:$0xff]
          %v226 = vmul.f32 %v218, %v218
          %v227 = vmul.f32 %v219, %v219
          %v228 = vmul.f32 %v220, %v220
          %v229 = vmul.f32 %v221, %v221
          %v230 = vmul.f32 %v222, %v222
          %v231 = vmul.f32 %v223, %v223
          %v232 = vmul.f32 %v224, %v224
          %v233 = vmul.f32 %v225, %v225
          %v234 = vadd.f32 %v226, %v227
          %v235 = vadd.f32 %v234, %v228
          %v236 = vadd.f32 %v235, %v229
          %v237 = vadd.f32 %v236, %v230
          %v238 = vadd.f32 %v237, %v231
          %v239 = vadd.f32 %v238, %v232
          %v240 = vadd.f32 %v239, %v233
          %241 = vadd.xlane.f32.xlu0 %v240
          %v242 = vpop.xlane.xlu0 %241
          %v243 = vrcp.pop 1024.0
          %v244 = vmul.f32 %v242, %v243
          %v245 = vadd.f32 %v244, 1e-08
          %v246 = vrsqrt.pop %v245
          %v247 = vmul.f32 %v218, %v246
          %v248 = vmul.f32 %v219, %v246
          %v249 = vmul.f32 %v220, %v246
          %v250 = vmul.f32 %v221, %v246
          %v251 = vmul.f32 %v222, %v246
          %v252 = vmul.f32 %v223, %v246
          %v253 = vmul.f32 %v224, %v246
          %v254 = vmul.f32 %v225, %v246
          %255 = vst [vmem:[#allocation2] sm:$0xff] %v247
          %256 = vst [vmem:[#allocation2 + $0x8] sm:$0xff] %v248
          %257 = vst [vmem:[#allocation2 + $0x10] sm:$0xff] %v249
          %258 = vst [vmem:[#allocation2 + $0x18] sm:$0xff] %v250
          %259 = vst [vmem:[#allocation2 + $0x20] sm:$0xff] %v251
          %260 = vst [vmem:[#allocation2 + $0x28] sm:$0xff] %v252
          %261 = vst [vmem:[#allocation2 + $0x30] sm:$0xff] %v253
          %262 = vst [vmem:[#allocation2 + $0x38] sm:$0xff] %v254
        $region44: #{mapper_cat_forward.1} parent=31 // pred_fallthru
          _
        %v263 = vld [vmem:[#allocation2] sm:$0xff]
        %v264 = vld [vmem:[#allocation2 + $0x8] sm:$0xff]
        %v265 = vld [vmem:[#allocation2 + $0x10] sm:$0xff]
        %v266 = vld [vmem:[#allocation2 + $0x18] sm:$0xff]
        %v267 = vld [vmem:[#allocation2 + $0x20] sm:$0xff]
        %v268 = vld [vmem:[#allocation2 + $0x28] sm:$0xff]
        %v269 = vld [vmem:[#allocation2 + $0x30] sm:$0xff]
        %v270 = vld [vmem:[#allocation2 + $0x38] sm:$0xff]
        %v271 = vld [vmem:[%s182] sm:$0xff]
        %v272 = vld [vmem:[%s182 + $0x8] sm:$0xff]
        %v273 = vld [vmem:[%s182 + $0x10] sm:$0xff]
        %v274 = vld [vmem:[%s182 + $0x18] sm:$0xff]
        %v275 = vld [vmem:[%s182 + $0x20] sm:$0xff]
        %v276 = vld [vmem:[%s182 + $0x28] sm:$0xff]
        %v277 = vld [vmem:[%s182 + $0x30] sm:$0xff]
        %v278 = vld [vmem:[%s182 + $0x38] sm:$0xff]
        %v279 = vld [vmem:[%s182 + $0x40] sm:$0xff]
        %v280 = vld [vmem:[%s182 + $0x48] sm:$0xff]
        %v281 = vld [vmem:[%s182 + $0x50] sm:$0xff]
        %v282 = vld [vmem:[%s182 + $0x58] sm:$0xff]
        %v283 = vld [vmem:[%s182 + $0x60] sm:$0xff]
        %v284 = vld [vmem:[%s182 + $0x68] sm:$0xff]
        %v285 = vld [vmem:[%s182 + $0x70] sm:$0xff]
        %v286 = vld [vmem:[%s182 + $0x78] sm:$0xff]
        %v287 = vld [vmem:[%s182 + $0x80] sm:$0xff]
        %v288 = vld [vmem:[%s182 + $0x88] sm:$0xff]
        %v289 = vld [vmem:[%s182 + $0x90] sm:$0xff]
        %v290 = vld [vmem:[%s182 + $0x98] sm:$0xff]
        %v291 = vld [vmem:[%s182 + $0xa0] sm:$0xff]
        %v292 = vld [vmem:[%s182 + $0xa8] sm:$0xff]
        %v293 = vld [vmem:[%s182 + $0xb0] sm:$0xff]
        %v294 = vld [vmem:[%s182 + $0xb8] sm:$0xff]
        %v295 = vld [vmem:[%s182 + $0xc0] sm:$0xff]
        %v296 = vld [vmem:[%s182 + $0xc8] sm:$0xff]
        %v297 = vld [vmem:[%s182 + $0xd0] sm:$0xff]
        %v298 = vld [vmem:[%s182 + $0xd8] sm:$0xff]
        %v299 = vld [vmem:[%s182 + $0xe0] sm:$0xff]
        %v300 = vld [vmem:[%s182 + $0xe8] sm:$0xff]
        %v301 = vld [vmem:[%s182 + $0xf0] sm:$0xff]
        %v302 = vld [vmem:[%s182 + $0xf8] sm:$0xff]
        %v303 = vld [vmem:[%s182 + $0x100] sm:$0xff]
        %v304 = vld [vmem:[%s182 + $0x108] sm:$0xff]
        %v305 = vld [vmem:[%s182 + $0x110] sm:$0xff]
        %v306 = vld [vmem:[%s182 + $0x118] sm:$0xff]
        %v307 = vld [vmem:[%s182 + $0x120] sm:$0xff]
        %v308 = vld [vmem:[%s182 + $0x128] sm:$0xff]
        %v309 = vld [vmem:[%s182 + $0x130] sm:$0xff]
        %v310 = vld [vmem:[%s182 + $0x138] sm:$0xff]
        %v311 = vld [vmem:[%s182 + $0x140] sm:$0xff]
        %v312 = vld [vmem:[%s182 + $0x148] sm:$0xff]
        %v313 = vld [vmem:[%s182 + $0x150] sm:$0xff]
        %v314 = vld [vmem:[%s182 + $0x158] sm:$0xff]
        %v315 = vld [vmem:[%s182 + $0x160] sm:$0xff]
        %v316 = vld [vmem:[%s182 + $0x168] sm:$0xff]
        %v317 = vld [vmem:[%s182 + $0x170] sm:$0xff]
        %v318 = vld [vmem:[%s182 + $0x178] sm:$0xff]
        %v319 = vld [vmem:[%s182 + $0x180] sm:$0xff]
        %v320 = vld [vmem:[%s182 + $0x188] sm:$0xff]
        %v321 = vld [vmem:[%s182 + $0x190] sm:$0xff]
        %v322 = vld [vmem:[%s182 + $0x198] sm:$0xff]
        %v323 = vld [vmem:[%s182 + $0x1a0] sm:$0xff]
        %v324 = vld [vmem:[%s182 + $0x1a8] sm:$0xff]
        %v325 = vld [vmem:[%s182 + $0x1b0] sm:$0xff]
        %v326 = vld [vmem:[%s182 + $0x1b8] sm:$0xff]
        %v327 = vld [vmem:[%s182 + $0x1c0] sm:$0xff]
        %v328 = vld [vmem:[%s182 + $0x1c8] sm:$0xff]
        %v329 = vld [vmem:[%s182 + $0x1d0] sm:$0xff]
        %v330 = vld [vmem:[%s182 + $0x1d8] sm:$0xff]
        %v331 = vld [vmem:[%s182 + $0x1e0] sm:$0xff]
        %v332 = vld [vmem:[%s182 + $0x1e8] sm:$0xff]
        %v333 = vld [vmem:[%s182 + $0x1f0] sm:$0xff]
        %v334 = vld [vmem:[%s182 + $0x1f8] sm:$0xff]
        %v335 = vld [vmem:[%s182 + $0x200] sm:$0xff]
        %v336 = vld [vmem:[%s182 + $0x208] sm:$0xff]
        %v337 = vld [vmem:[%s182 + $0x210] sm:$0xff]
        %v338 = vld [vmem:[%s182 + $0x218] sm:$0xff]
        %v339 = vld [vmem:[%s182 + $0x220] sm:$0xff]
        %v340 = vld [vmem:[%s182 + $0x228] sm:$0xff]
        %v341 = vld [vmem:[%s182 + $0x230] sm:$0xff]
        %v342 = vld [vmem:[%s182 + $0x238] sm:$0xff]
        %v343 = vld [vmem:[%s182 + $0x240] sm:$0xff]
        %v344 = vld [vmem:[%s182 + $0x248] sm:$0xff]
        %v345 = vld [vmem:[%s182 + $0x250] sm:$0xff]
        %v346 = vld [vmem:[%s182 + $0x258] sm:$0xff]
        %v347 = vld [vmem:[%s182 + $0x260] sm:$0xff]
        %v348 = vld [vmem:[%s182 + $0x268] sm:$0xff]
        %v349 = vld [vmem:[%s182 + $0x270] sm:$0xff]
        %v350 = vld [vmem:[%s182 + $0x278] sm:$0xff]
        %v351 = vld [vmem:[%s182 + $0x280] sm:$0xff]
        %v352 = vld [vmem:[%s182 + $0x288] sm:$0xff]
        %v353 = vld [vmem:[%s182 + $0x290] sm:$0xff]
        %v354 = vld [vmem:[%s182 + $0x298] sm:$0xff]
        %v355 = vld [vmem:[%s182 + $0x2a0] sm:$0xff]
        %v356 = vld [vmem:[%s182 + $0x2a8] sm:$0xff]
        %v357 = vld [vmem:[%s182 + $0x2b0] sm:$0xff]
        %v358 = vld [vmem:[%s182 + $0x2b8] sm:$0xff]
        %v359 = vld [vmem:[%s182 + $0x2c0] sm:$0xff]
        %v360 = vld [vmem:[%s182 + $0x2c8] sm:$0xff]
        %v361 = vld [vmem:[%s182 + $0x2d0] sm:$0xff]
        %v362 = vld [vmem:[%s182 + $0x2d8] sm:$0xff]
        %v363 = vld [vmem:[%s182 + $0x2e0] sm:$0xff]
        %v364 = vld [vmem:[%s182 + $0x2e8] sm:$0xff]
        %v365 = vld [vmem:[%s182 + $0x2f0] sm:$0xff]
        %v366 = vld [vmem:[%s182 + $0x2f8] sm:$0xff]
        %v367 = vld [vmem:[%s182 + $0x300] sm:$0xff]
        %v368 = vld [vmem:[%s182 + $0x308] sm:$0xff]
        %v369 = vld [vmem:[%s182 + $0x310] sm:$0xff]
        %v370 = vld [vmem:[%s182 + $0x318] sm:$0xff]
        %v371 = vld [vmem:[%s182 + $0x320] sm:$0xff]
        %v372 = vld [vmem:[%s182 + $0x328] sm:$0xff]
        %v373 = vld [vmem:[%s182 + $0x330] sm:$0xff]
        %v374 = vld [vmem:[%s182 + $0x338] sm:$0xff]
        %v375 = vld [vmem:[%s182 + $0x340] sm:$0xff]
        %v376 = vld [vmem:[%s182 + $0x348] sm:$0xff]
        %v377 = vld [vmem:[%s182 + $0x350] sm:$0xff]
        %v378 = vld [vmem:[%s182 + $0x358] sm:$0xff]
        %v379 = vld [vmem:[%s182 + $0x360] sm:$0xff]
        %v380 = vld [vmem:[%s182 + $0x368] sm:$0xff]
        %v381 = vld [vmem:[%s182 + $0x370] sm:$0xff]
        %v382 = vld [vmem:[%s182 + $0x378] sm:$0xff]
        %v383 = vld [vmem:[%s182 + $0x380] sm:$0xff]
        %v384 = vld [vmem:[%s182 + $0x388] sm:$0xff]
        %v385 = vld [vmem:[%s182 + $0x390] sm:$0xff]
        %v386 = vld [vmem:[%s182 + $0x398] sm:$0xff]
        %v387 = vld [vmem:[%s182 + $0x3a0] sm:$0xff]
        %v388 = vld [vmem:[%s182 + $0x3a8] sm:$0xff]
        %v389 = vld [vmem:[%s182 + $0x3b0] sm:$0xff]
        %v390 = vld [vmem:[%s182 + $0x3b8] sm:$0xff]
        %v391 = vld [vmem:[%s182 + $0x3c0] sm:$0xff]
        %v392 = vld [vmem:[%s182 + $0x3c8] sm:$0xff]
        %v393 = vld [vmem:[%s182 + $0x3d0] sm:$0xff]
        %v394 = vld [vmem:[%s182 + $0x3d8] sm:$0xff]
        %v395 = vld [vmem:[%s182 + $0x3e0] sm:$0xff]
        %v396 = vld [vmem:[%s182 + $0x3e8] sm:$0xff]
        %v397 = vld [vmem:[%s182 + $0x3f0] sm:$0xff]
        %v398 = vld [vmem:[%s182 + $0x3f8] sm:$0xff]
        %v399 = vld [vmem:[%s182 + $0x400] sm:$0xff]
        %v400 = vld [vmem:[%s182 + $0x408] sm:$0xff]
        %v401 = vld [vmem:[%s182 + $0x410] sm:$0xff]
        %v402 = vld [vmem:[%s182 + $0x418] sm:$0xff]
        %v403 = vld [vmem:[%s182 + $0x420] sm:$0xff]
        %v404 = vld [vmem:[%s182 + $0x428] sm:$0xff]
        %v405 = vld [vmem:[%s182 + $0x430] sm:$0xff]
        %v406 = vld [vmem:[%s182 + $0x438] sm:$0xff]
        %v407 = vld [vmem:[%s182 + $0x440] sm:$0xff]
        %v408 = vld [vmem:[%s182 + $0x448] sm:$0xff]
        %v409 = vld [vmem:[%s182 + $0x450] sm:$0xff]
        %v410 = vld [vmem:[%s182 + $0x458] sm:$0xff]
        %v411 = vld [vmem:[%s182 + $0x460] sm:$0xff]
        %v412 = vld [vmem:[%s182 + $0x468] sm:$0xff]
        %v413 = vld [vmem:[%s182 + $0x470] sm:$0xff]
        %v414 = vld [vmem:[%s182 + $0x478] sm:$0xff]
        %v415 = vld [vmem:[%s182 + $0x480] sm:$0xff]
        %v416 = vld [vmem:[%s182 + $0x488] sm:$0xff]
        %v417 = vld [vmem:[%s182 + $0x490] sm:$0xff]
        %v418 = vld [vmem:[%s182 + $0x498] sm:$0xff]
        %v419 = vld [vmem:[%s182 + $0x4a0] sm:$0xff]
        %v420 = vld [vmem:[%s182 + $0x4a8] sm:$0xff]
        %v421 = vld [vmem:[%s182 + $0x4b0] sm:$0xff]
        %v422 = vld [vmem:[%s182 + $0x4b8] sm:$0xff]
        %v423 = vld [vmem:[%s182 + $0x4c0] sm:$0xff]
        %v424 = vld [vmem:[%s182 + $0x4c8] sm:$0xff]
        %v425 = vld [vmem:[%s182 + $0x4d0] sm:$0xff]
        %v426 = vld [vmem:[%s182 + $0x4d8] sm:$0xff]
        %v427 = vld [vmem:[%s182 + $0x4e0] sm:$0xff]
        %v428 = vld [vmem:[%s182 + $0x4e8] sm:$0xff]
        %v429 = vld [vmem:[%s182 + $0x4f0] sm:$0xff]
        %v430 = vld [vmem:[%s182 + $0x4f8] sm:$0xff]
        %v431 = vld [vmem:[%s182 + $0x500] sm:$0xff]
        %v432 = vld [vmem:[%s182 + $0x508] sm:$0xff]
        %v433 = vld [vmem:[%s182 + $0x510] sm:$0xff]
        %v434 = vld [vmem:[%s182 + $0x518] sm:$0xff]
        %v435 = vld [vmem:[%s182 + $0x520] sm:$0xff]
        %v436 = vld [vmem:[%s182 + $0x528] sm:$0xff]
        %v437 = vld [vmem:[%s182 + $0x530] sm:$0xff]
        %v438 = vld [vmem:[%s182 + $0x538] sm:$0xff]
        %v439 = vld [vmem:[%s182 + $0x540] sm:$0xff]
        %v440 = vld [vmem:[%s182 + $0x548] sm:$0xff]
        %v441 = vld [vmem:[%s182 + $0x550] sm:$0xff]
        %v442 = vld [vmem:[%s182 + $0x558] sm:$0xff]
        %v443 = vld [vmem:[%s182 + $0x560] sm:$0xff]
        %v444 = vld [vmem:[%s182 + $0x568] sm:$0xff]
        %v445 = vld [vmem:[%s182 + $0x570] sm:$0xff]
        %v446 = vld [vmem:[%s182 + $0x578] sm:$0xff]
        %v447 = vld [vmem:[%s182 + $0x580] sm:$0xff]
        %v448 = vld [vmem:[%s182 + $0x588] sm:$0xff]
        %v449 = vld [vmem:[%s182 + $0x590] sm:$0xff]
        %v450 = vld [vmem:[%s182 + $0x598] sm:$0xff]
        %v451 = vld [vmem:[%s182 + $0x5a0] sm:$0xff]
        %v452 = vld [vmem:[%s182 + $0x5a8] sm:$0xff]
        %v453 = vld [vmem:[%s182 + $0x5b0] sm:$0xff]
        %v454 = vld [vmem:[%s182 + $0x5b8] sm:$0xff]
        %v455 = vld [vmem:[%s182 + $0x5c0] sm:$0xff]
        %v456 = vld [vmem:[%s182 + $0x5c8] sm:$0xff]
        %v457 = vld [vmem:[%s182 + $0x5d0] sm:$0xff]
        %v458 = vld [vmem:[%s182 + $0x5d8] sm:$0xff]
        %v459 = vld [vmem:[%s182 + $0x5e0] sm:$0xff]
        %v460 = vld [vmem:[%s182 + $0x5e8] sm:$0xff]
        %v461 = vld [vmem:[%s182 + $0x5f0] sm:$0xff]
        %v462 = vld [vmem:[%s182 + $0x5f8] sm:$0xff]
        %v463 = vld [vmem:[%s182 + $0x600] sm:$0xff]
        %v464 = vld [vmem:[%s182 + $0x608] sm:$0xff]
        %v465 = vld [vmem:[%s182 + $0x610] sm:$0xff]
        %v466 = vld [vmem:[%s182 + $0x618] sm:$0xff]
        %v467 = vld [vmem:[%s182 + $0x620] sm:$0xff]
        %v468 = vld [vmem:[%s182 + $0x628] sm:$0xff]
        %v469 = vld [vmem:[%s182 + $0x630] sm:$0xff]
        %v470 = vld [vmem:[%s182 + $0x638] sm:$0xff]
        %v471 = vld [vmem:[%s182 + $0x640] sm:$0xff]
        %v472 = vld [vmem:[%s182 + $0x648] sm:$0xff]
        %v473 = vld [vmem:[%s182 + $0x650] sm:$0xff]
        %v474 = vld [vmem:[%s182 + $0x658] sm:$0xff]
        %v475 = vld [vmem:[%s182 + $0x660] sm:$0xff]
        %v476 = vld [vmem:[%s182 + $0x668] sm:$0xff]
        %v477 = vld [vmem:[%s182 + $0x670] sm:$0xff]
        %v478 = vld [vmem:[%s182 + $0x678] sm:$0xff]
        %v479 = vld [vmem:[%s182 + $0x680] sm:$0xff]
        %v480 = vld [vmem:[%s182 + $0x688] sm:$0xff]
        %v481 = vld [vmem:[%s182 + $0x690] sm:$0xff]
        %v482 = vld [vmem:[%s182 + $0x698] sm:$0xff]
        %v483 = vld [vmem:[%s182 + $0x6a0] sm:$0xff]
        %v484 = vld [vmem:[%s182 + $0x6a8] sm:$0xff]
        %v485 = vld [vmem:[%s182 + $0x6b0] sm:$0xff]
        %v486 = vld [vmem:[%s182 + $0x6b8] sm:$0xff]
        %v487 = vld [vmem:[%s182 + $0x6c0] sm:$0xff]
        %v488 = vld [vmem:[%s182 + $0x6c8] sm:$0xff]
        %v489 = vld [vmem:[%s182 + $0x6d0] sm:$0xff]
        %v490 = vld [vmem:[%s182 + $0x6d8] sm:$0xff]
        %v491 = vld [vmem:[%s182 + $0x6e0] sm:$0xff]
        %v492 = vld [vmem:[%s182 + $0x6e8] sm:$0xff]
        %v493 = vld [vmem:[%s182 + $0x6f0] sm:$0xff]
        %v494 = vld [vmem:[%s182 + $0x6f8] sm:$0xff]
        %v495 = vld [vmem:[%s182 + $0x700] sm:$0xff]
        %v496 = vld [vmem:[%s182 + $0x708] sm:$0xff]
        %v497 = vld [vmem:[%s182 + $0x710] sm:$0xff]
        %v498 = vld [vmem:[%s182 + $0x718] sm:$0xff]
        %v499 = vld [vmem:[%s182 + $0x720] sm:$0xff]
        %v500 = vld [vmem:[%s182 + $0x728] sm:$0xff]
        %v501 = vld [vmem:[%s182 + $0x730] sm:$0xff]
        %v502 = vld [vmem:[%s182 + $0x738] sm:$0xff]
        %v503 = vld [vmem:[%s182 + $0x740] sm:$0xff]
        %v504 = vld [vmem:[%s182 + $0x748] sm:$0xff]
        %v505 = vld [vmem:[%s182 + $0x750] sm:$0xff]
        %v506 = vld [vmem:[%s182 + $0x758] sm:$0xff]
        %v507 = vld [vmem:[%s182 + $0x760] sm:$0xff]
        %v508 = vld [vmem:[%s182 + $0x768] sm:$0xff]
        %v509 = vld [vmem:[%s182 + $0x770] sm:$0xff]
        %v510 = vld [vmem:[%s182 + $0x778] sm:$0xff]
        %v511 = vld [vmem:[%s182 + $0x780] sm:$0xff]
        %v512 = vld [vmem:[%s182 + $0x788] sm:$0xff]
        %v513 = vld [vmem:[%s182 + $0x790] sm:$0xff]
        %v514 = vld [vmem:[%s182 + $0x798] sm:$0xff]
        %v515 = vld [vmem:[%s182 + $0x7a0] sm:$0xff]
        %v516 = vld [vmem:[%s182 + $0x7a8] sm:$0xff]
        %v517 = vld [vmem:[%s182 + $0x7b0] sm:$0xff]
        %v518 = vld [vmem:[%s182 + $0x7b8] sm:$0xff]
        %v519 = vld [vmem:[%s182 + $0x7c0] sm:$0xff]
        %v520 = vld [vmem:[%s182 + $0x7c8] sm:$0xff]
        %v521 = vld [vmem:[%s182 + $0x7d0] sm:$0xff]
        %v522 = vld [vmem:[%s182 + $0x7d8] sm:$0xff]
        %v523 = vld [vmem:[%s182 + $0x7e0] sm:$0xff]
        %v524 = vld [vmem:[%s182 + $0x7e8] sm:$0xff]
        %v525 = vld [vmem:[%s182 + $0x7f0] sm:$0xff]
        %v526 = vld [vmem:[%s182 + $0x7f8] sm:$0xff]
        %v527 = vld [vmem:[%s182 + $0x800] sm:$0xff]
        %v528 = vld [vmem:[%s182 + $0x808] sm:$0xff]
        %v529 = vld [vmem:[%s182 + $0x810] sm:$0xff]
        %v530 = vld [vmem:[%s182 + $0x818] sm:$0xff]
        %v531 = vld [vmem:[%s182 + $0x820] sm:$0xff]
        %v532 = vld [vmem:[%s182 + $0x828] sm:$0xff]
        %v533 = vld [vmem:[%s182 + $0x830] sm:$0xff]
        %v534 = vld [vmem:[%s182 + $0x838] sm:$0xff]
        %v535 = vld [vmem:[%s182 + $0x840] sm:$0xff]
        %v536 = vld [vmem:[%s182 + $0x848] sm:$0xff]
        %v537 = vld [vmem:[%s182 + $0x850] sm:$0xff]
        %v538 = vld [vmem:[%s182 + $0x858] sm:$0xff]
        %v539 = vld [vmem:[%s182 + $0x860] sm:$0xff]
        %v540 = vld [vmem:[%s182 + $0x868] sm:$0xff]
        %v541 = vld [vmem:[%s182 + $0x870] sm:$0xff]
        %v542 = vld [vmem:[%s182 + $0x878] sm:$0xff]
        %v543 = vld [vmem:[%s182 + $0x880] sm:$0xff]
        %v544 = vld [vmem:[%s182 + $0x888] sm:$0xff]
        %v545 = vld [vmem:[%s182 + $0x890] sm:$0xff]
        %v546 = vld [vmem:[%s182 + $0x898] sm:$0xff]
        %v547 = vld [vmem:[%s182 + $0x8a0] sm:$0xff]
        %v548 = vld [vmem:[%s182 + $0x8a8] sm:$0xff]
        %v549 = vld [vmem:[%s182 + $0x8b0] sm:$0xff]
        %v550 = vld [vmem:[%s182 + $0x8b8] sm:$0xff]
        %v551 = vld [vmem:[%s182 + $0x8c0] sm:$0xff]
        %v552 = vld [vmem:[%s182 + $0x8c8] sm:$0xff]
        %v553 = vld [vmem:[%s182 + $0x8d0] sm:$0xff]
        %v554 = vld [vmem:[%s182 + $0x8d8] sm:$0xff]
        %v555 = vld [vmem:[%s182 + $0x8e0] sm:$0xff]
        %v556 = vld [vmem:[%s182 + $0x8e8] sm:$0xff]
        %v557 = vld [vmem:[%s182 + $0x8f0] sm:$0xff]
        %v558 = vld [vmem:[%s182 + $0x8f8] sm:$0xff]
        %v559 = vld [vmem:[%s182 + $0x900] sm:$0xff]
        %v560 = vld [vmem:[%s182 + $0x908] sm:$0xff]
        %v561 = vld [vmem:[%s182 + $0x910] sm:$0xff]
        %v562 = vld [vmem:[%s182 + $0x918] sm:$0xff]
        %v563 = vld [vmem:[%s182 + $0x920] sm:$0xff]
        %v564 = vld [vmem:[%s182 + $0x928] sm:$0xff]
        %v565 = vld [vmem:[%s182 + $0x930] sm:$0xff]
        %v566 = vld [vmem:[%s182 + $0x938] sm:$0xff]
        %v567 = vld [vmem:[%s182 + $0x940] sm:$0xff]
        %v568 = vld [vmem:[%s182 + $0x948] sm:$0xff]
        %v569 = vld [vmem:[%s182 + $0x950] sm:$0xff]
        %v570 = vld [vmem:[%s182 + $0x958] sm:$0xff]
        %v571 = vld [vmem:[%s182 + $0x960] sm:$0xff]
        %v572 = vld [vmem:[%s182 + $0x968] sm:$0xff]
        %v573 = vld [vmem:[%s182 + $0x970] sm:$0xff]
        %v574 = vld [vmem:[%s182 + $0x978] sm:$0xff]
        %v575 = vld [vmem:[%s182 + $0x980] sm:$0xff]
        %v576 = vld [vmem:[%s182 + $0x988] sm:$0xff]
        %v577 = vld [vmem:[%s182 + $0x990] sm:$0xff]
        %v578 = vld [vmem:[%s182 + $0x998] sm:$0xff]
        %v579 = vld [vmem:[%s182 + $0x9a0] sm:$0xff]
        %v580 = vld [vmem:[%s182 + $0x9a8] sm:$0xff]
        %v581 = vld [vmem:[%s182 + $0x9b0] sm:$0xff]
        %v582 = vld [vmem:[%s182 + $0x9b8] sm:$0xff]
        %v583 = vld [vmem:[%s182 + $0x9c0] sm:$0xff]
        %v584 = vld [vmem:[%s182 + $0x9c8] sm:$0xff]
        %v585 = vld [vmem:[%s182 + $0x9d0] sm:$0xff]
        %v586 = vld [vmem:[%s182 + $0x9d8] sm:$0xff]
        %v587 = vld [vmem:[%s182 + $0x9e0] sm:$0xff]
        %v588 = vld [vmem:[%s182 + $0x9e8] sm:$0xff]
        %v589 = vld [vmem:[%s182 + $0x9f0] sm:$0xff]
        %v590 = vld [vmem:[%s182 + $0x9f8] sm:$0xff]
        %v591 = vld [vmem:[%s182 + $0xa00] sm:$0xff]
        %v592 = vld [vmem:[%s182 + $0xa08] sm:$0xff]
        %v593 = vld [vmem:[%s182 + $0xa10] sm:$0xff]
        %v594 = vld [vmem:[%s182 + $0xa18] sm:$0xff]
        %v595 = vld [vmem:[%s182 + $0xa20] sm:$0xff]
        %v596 = vld [vmem:[%s182 + $0xa28] sm:$0xff]
        %v597 = vld [vmem:[%s182 + $0xa30] sm:$0xff]
        %v598 = vld [vmem:[%s182 + $0xa38] sm:$0xff]
        %v599 = vld [vmem:[%s182 + $0xa40] sm:$0xff]
        %v600 = vld [vmem:[%s182 + $0xa48] sm:$0xff]
        %v601 = vld [vmem:[%s182 + $0xa50] sm:$0xff]
        %v602 = vld [vmem:[%s182 + $0xa58] sm:$0xff]
        %v603 = vld [vmem:[%s182 + $0xa60] sm:$0xff]
        %v604 = vld [vmem:[%s182 + $0xa68] sm:$0xff]
        %v605 = vld [vmem:[%s182 + $0xa70] sm:$0xff]
        %v606 = vld [vmem:[%s182 + $0xa78] sm:$0xff]
        %v607 = vld [vmem:[%s182 + $0xa80] sm:$0xff]
        %v608 = vld [vmem:[%s182 + $0xa88] sm:$0xff]
        %v609 = vld [vmem:[%s182 + $0xa90] sm:$0xff]
        %v610 = vld [vmem:[%s182 + $0xa98] sm:$0xff]
        %v611 = vld [vmem:[%s182 + $0xaa0] sm:$0xff]
        %v612 = vld [vmem:[%s182 + $0xaa8] sm:$0xff]
        %v613 = vld [vmem:[%s182 + $0xab0] sm:$0xff]
        %v614 = vld [vmem:[%s182 + $0xab8] sm:$0xff]
        %v615 = vld [vmem:[%s182 + $0xac0] sm:$0xff]
        %v616 = vld [vmem:[%s182 + $0xac8] sm:$0xff]
        %v617 = vld [vmem:[%s182 + $0xad0] sm:$0xff]
        %v618 = vld [vmem:[%s182 + $0xad8] sm:$0xff]
        %v619 = vld [vmem:[%s182 + $0xae0] sm:$0xff]
        %v620 = vld [vmem:[%s182 + $0xae8] sm:$0xff]
        %v621 = vld [vmem:[%s182 + $0xaf0] sm:$0xff]
        %v622 = vld [vmem:[%s182 + $0xaf8] sm:$0xff]
        %v623 = vld [vmem:[%s182 + $0xb00] sm:$0xff]
        %v624 = vld [vmem:[%s182 + $0xb08] sm:$0xff]
        %v625 = vld [vmem:[%s182 + $0xb10] sm:$0xff]
        %v626 = vld [vmem:[%s182 + $0xb18] sm:$0xff]
        %v627 = vld [vmem:[%s182 + $0xb20] sm:$0xff]
        %v628 = vld [vmem:[%s182 + $0xb28] sm:$0xff]
        %v629 = vld [vmem:[%s182 + $0xb30] sm:$0xff]
        %v630 = vld [vmem:[%s182 + $0xb38] sm:$0xff]
        %v631 = vld [vmem:[%s182 + $0xb40] sm:$0xff]
        %v632 = vld [vmem:[%s182 + $0xb48] sm:$0xff]
        %v633 = vld [vmem:[%s182 + $0xb50] sm:$0xff]
        %v634 = vld [vmem:[%s182 + $0xb58] sm:$0xff]
        %v635 = vld [vmem:[%s182 + $0xb60] sm:$0xff]
        %v636 = vld [vmem:[%s182 + $0xb68] sm:$0xff]
        %v637 = vld [vmem:[%s182 + $0xb70] sm:$0xff]
        %v638 = vld [vmem:[%s182 + $0xb78] sm:$0xff]
        %v639 = vld [vmem:[%s182 + $0xb80] sm:$0xff]
        %v640 = vld [vmem:[%s182 + $0xb88] sm:$0xff]
        %v641 = vld [vmem:[%s182 + $0xb90] sm:$0xff]
        %v642 = vld [vmem:[%s182 + $0xb98] sm:$0xff]
        %v643 = vld [vmem:[%s182 + $0xba0] sm:$0xff]
        %v644 = vld [vmem:[%s182 + $0xba8] sm:$0xff]
        %v645 = vld [vmem:[%s182 + $0xbb0] sm:$0xff]
        %v646 = vld [vmem:[%s182 + $0xbb8] sm:$0xff]
        %v647 = vld [vmem:[%s182 + $0xbc0] sm:$0xff]
        %v648 = vld [vmem:[%s182 + $0xbc8] sm:$0xff]
        %v649 = vld [vmem:[%s182 + $0xbd0] sm:$0xff]
        %v650 = vld [vmem:[%s182 + $0xbd8] sm:$0xff]
        %v651 = vld [vmem:[%s182 + $0xbe0] sm:$0xff]
        %v652 = vld [vmem:[%s182 + $0xbe8] sm:$0xff]
        %v653 = vld [vmem:[%s182 + $0xbf0] sm:$0xff]
        %v654 = vld [vmem:[%s182 + $0xbf8] sm:$0xff]
        %v655 = vld [vmem:[%s182 + $0xc00] sm:$0xff]
        %v656 = vld [vmem:[%s182 + $0xc08] sm:$0xff]
        %v657 = vld [vmem:[%s182 + $0xc10] sm:$0xff]
        %v658 = vld [vmem:[%s182 + $0xc18] sm:$0xff]
        %v659 = vld [vmem:[%s182 + $0xc20] sm:$0xff]
        %v660 = vld [vmem:[%s182 + $0xc28] sm:$0xff]
        %v661 = vld [vmem:[%s182 + $0xc30] sm:$0xff]
        %v662 = vld [vmem:[%s182 + $0xc38] sm:$0xff]
        %v663 = vld [vmem:[%s182 + $0xc40] sm:$0xff]
        %v664 = vld [vmem:[%s182 + $0xc48] sm:$0xff]
        %v665 = vld [vmem:[%s182 + $0xc50] sm:$0xff]
        %v666 = vld [vmem:[%s182 + $0xc58] sm:$0xff]
        %v667 = vld [vmem:[%s182 + $0xc60] sm:$0xff]
        %v668 = vld [vmem:[%s182 + $0xc68] sm:$0xff]
        %v669 = vld [vmem:[%s182 + $0xc70] sm:$0xff]
        %v670 = vld [vmem:[%s182 + $0xc78] sm:$0xff]
        %v671 = vld [vmem:[%s182 + $0xc80] sm:$0xff]
        %v672 = vld [vmem:[%s182 + $0xc88] sm:$0xff]
        %v673 = vld [vmem:[%s182 + $0xc90] sm:$0xff]
        %v674 = vld [vmem:[%s182 + $0xc98] sm:$0xff]
        %v675 = vld [vmem:[%s182 + $0xca0] sm:$0xff]
        %v676 = vld [vmem:[%s182 + $0xca8] sm:$0xff]
        %v677 = vld [vmem:[%s182 + $0xcb0] sm:$0xff]
        %v678 = vld [vmem:[%s182 + $0xcb8] sm:$0xff]
        %v679 = vld [vmem:[%s182 + $0xcc0] sm:$0xff]
        %v680 = vld [vmem:[%s182 + $0xcc8] sm:$0xff]
        %v681 = vld [vmem:[%s182 + $0xcd0] sm:$0xff]
        %v682 = vld [vmem:[%s182 + $0xcd8] sm:$0xff]
        %v683 = vld [vmem:[%s182 + $0xce0] sm:$0xff]
        %v684 = vld [vmem:[%s182 + $0xce8] sm:$0xff]
        %v685 = vld [vmem:[%s182 + $0xcf0] sm:$0xff]
        %v686 = vld [vmem:[%s182 + $0xcf8] sm:$0xff]
        %v687 = vld [vmem:[%s182 + $0xd00] sm:$0xff]
        %v688 = vld [vmem:[%s182 + $0xd08] sm:$0xff]
        %v689 = vld [vmem:[%s182 + $0xd10] sm:$0xff]
        %v690 = vld [vmem:[%s182 + $0xd18] sm:$0xff]
        %v691 = vld [vmem:[%s182 + $0xd20] sm:$0xff]
        %v692 = vld [vmem:[%s182 + $0xd28] sm:$0xff]
        %v693 = vld [vmem:[%s182 + $0xd30] sm:$0xff]
        %v694 = vld [vmem:[%s182 + $0xd38] sm:$0xff]
        %v695 = vld [vmem:[%s182 + $0xd40] sm:$0xff]
        %v696 = vld [vmem:[%s182 + $0xd48] sm:$0xff]
        %v697 = vld [vmem:[%s182 + $0xd50] sm:$0xff]
        %v698 = vld [vmem:[%s182 + $0xd58] sm:$0xff]
        %v699 = vld [vmem:[%s182 + $0xd60] sm:$0xff]
        %v700 = vld [vmem:[%s182 + $0xd68] sm:$0xff]
        %v701 = vld [vmem:[%s182 + $0xd70] sm:$0xff]
        %v702 = vld [vmem:[%s182 + $0xd78] sm:$0xff]
        %v703 = vld [vmem:[%s182 + $0xd80] sm:$0xff]
        %v704 = vld [vmem:[%s182 + $0xd88] sm:$0xff]
        %v705 = vld [vmem:[%s182 + $0xd90] sm:$0xff]
        %v706 = vld [vmem:[%s182 + $0xd98] sm:$0xff]
        %v707 = vld [vmem:[%s182 + $0xda0] sm:$0xff]
        %v708 = vld [vmem:[%s182 + $0xda8] sm:$0xff]
        %v709 = vld [vmem:[%s182 + $0xdb0] sm:$0xff]
        %v710 = vld [vmem:[%s182 + $0xdb8] sm:$0xff]
        %v711 = vld [vmem:[%s182 + $0xdc0] sm:$0xff]
        %v712 = vld [vmem:[%s182 + $0xdc8] sm:$0xff]
        %v713 = vld [vmem:[%s182 + $0xdd0] sm:$0xff]
        %v714 = vld [vmem:[%s182 + $0xdd8] sm:$0xff]
        %v715 = vld [vmem:[%s182 + $0xde0] sm:$0xff]
        %v716 = vld [vmem:[%s182 + $0xde8] sm:$0xff]
        %v717 = vld [vmem:[%s182 + $0xdf0] sm:$0xff]
        %v718 = vld [vmem:[%s182 + $0xdf8] sm:$0xff]
        %v719 = vld [vmem:[%s182 + $0xe00] sm:$0xff]
        %v720 = vld [vmem:[%s182 + $0xe08] sm:$0xff]
        %v721 = vld [vmem:[%s182 + $0xe10] sm:$0xff]
        %v722 = vld [vmem:[%s182 + $0xe18] sm:$0xff]
        %v723 = vld [vmem:[%s182 + $0xe20] sm:$0xff]
        %v724 = vld [vmem:[%s182 + $0xe28] sm:$0xff]
        %v725 = vld [vmem:[%s182 + $0xe30] sm:$0xff]
        %v726 = vld [vmem:[%s182 + $0xe38] sm:$0xff]
        %v727 = vld [vmem:[%s182 + $0xe40] sm:$0xff]
        %v728 = vld [vmem:[%s182 + $0xe48] sm:$0xff]
        %v729 = vld [vmem:[%s182 + $0xe50] sm:$0xff]
        %v730 = vld [vmem:[%s182 + $0xe58] sm:$0xff]
        %v731 = vld [vmem:[%s182 + $0xe60] sm:$0xff]
        %v732 = vld [vmem:[%s182 + $0xe68] sm:$0xff]
        %v733 = vld [vmem:[%s182 + $0xe70] sm:$0xff]
        %v734 = vld [vmem:[%s182 + $0xe78] sm:$0xff]
        %v735 = vld [vmem:[%s182 + $0xe80] sm:$0xff]
        %v736 = vld [vmem:[%s182 + $0xe88] sm:$0xff]
        %v737 = vld [vmem:[%s182 + $0xe90] sm:$0xff]
        %v738 = vld [vmem:[%s182 + $0xe98] sm:$0xff]
        %v739 = vld [vmem:[%s182 + $0xea0] sm:$0xff]
        %v740 = vld [vmem:[%s182 + $0xea8] sm:$0xff]
        %v741 = vld [vmem:[%s182 + $0xeb0] sm:$0xff]
        %v742 = vld [vmem:[%s182 + $0xeb8] sm:$0xff]
        %v743 = vld [vmem:[%s182 + $0xec0] sm:$0xff]
        %v744 = vld [vmem:[%s182 + $0xec8] sm:$0xff]
        %v745 = vld [vmem:[%s182 + $0xed0] sm:$0xff]
        %v746 = vld [vmem:[%s182 + $0xed8] sm:$0xff]
        %v747 = vld [vmem:[%s182 + $0xee0] sm:$0xff]
        %v748 = vld [vmem:[%s182 + $0xee8] sm:$0xff]
        %v749 = vld [vmem:[%s182 + $0xef0] sm:$0xff]
        %v750 = vld [vmem:[%s182 + $0xef8] sm:$0xff]
        %v751 = vld [vmem:[%s182 + $0xf00] sm:$0xff]
        %v752 = vld [vmem:[%s182 + $0xf08] sm:$0xff]
        %v753 = vld [vmem:[%s182 + $0xf10] sm:$0xff]
        %v754 = vld [vmem:[%s182 + $0xf18] sm:$0xff]
        %v755 = vld [vmem:[%s182 + $0xf20] sm:$0xff]
        %v756 = vld [vmem:[%s182 + $0xf28] sm:$0xff]
        %v757 = vld [vmem:[%s182 + $0xf30] sm:$0xff]
        %v758 = vld [vmem:[%s182 + $0xf38] sm:$0xff]
        %v759 = vld [vmem:[%s182 + $0xf40] sm:$0xff]
        %v760 = vld [vmem:[%s182 + $0xf48] sm:$0xff]
        %v761 = vld [vmem:[%s182 + $0xf50] sm:$0xff]
        %v762 = vld [vmem:[%s182 + $0xf58] sm:$0xff]
        %v763 = vld [vmem:[%s182 + $0xf60] sm:$0xff]
        %v764 = vld [vmem:[%s182 + $0xf68] sm:$0xff]
        %v765 = vld [vmem:[%s182 + $0xf70] sm:$0xff]
        %v766 = vld [vmem:[%s182 + $0xf78] sm:$0xff]
        %v767 = vld [vmem:[%s182 + $0xf80] sm:$0xff]
        %v768 = vld [vmem:[%s182 + $0xf88] sm:$0xff]
        %v769 = vld [vmem:[%s182 + $0xf90] sm:$0xff]
        %v770 = vld [vmem:[%s182 + $0xf98] sm:$0xff]
        %v771 = vld [vmem:[%s182 + $0xfa0] sm:$0xff]
        %v772 = vld [vmem:[%s182 + $0xfa8] sm:$0xff]
        %v773 = vld [vmem:[%s182 + $0xfb0] sm:$0xff]
        %v774 = vld [vmem:[%s182 + $0xfb8] sm:$0xff]
        %v775 = vld [vmem:[%s182 + $0xfc0] sm:$0xff]
        %v776 = vld [vmem:[%s182 + $0xfc8] sm:$0xff]
        %v777 = vld [vmem:[%s182 + $0xfd0] sm:$0xff]
        %v778 = vld [vmem:[%s182 + $0xfd8] sm:$0xff]
        %v779 = vld [vmem:[%s182 + $0xfe0] sm:$0xff]
        %v780 = vld [vmem:[%s182 + $0xfe8] sm:$0xff]
        %v781 = vld [vmem:[%s182 + $0xff0] sm:$0xff]
        %v782 = vld [vmem:[%s182 + $0xff8] sm:$0xff]
        %v783 = vpack.c.bf16 %v263, %v263
        %v784 = vpack.c.bf16 %v264, %v264
        %v785 = vpack.c.bf16 %v265, %v265
        %v786 = vpack.c.bf16 %v266, %v266
        %v787 = vpack.c.bf16 %v267, %v267
        %v788 = vpack.c.bf16 %v268, %v268
        %v789 = vpack.c.bf16 %v269, %v269
        %v790 = vpack.c.bf16 %v270, %v270
        %v791 = vld [vmem:[%s191] sm:$0xff]
        %v793 = vlaneseq
        %v794 = vshrl.u32 %v793, 7
        %v795 = vsub.s32 0, %v794
        %v796 = vrot.slane %v791, %v795
        %v797 = vlaneseq
        %v798 = vshrl.u32 %v797, 7
        %v799 = vsub.s32 1, %v798
        %v800 = vrot.slane %v791, %v799
        %v801 = vlaneseq
        %v802 = vshrl.u32 %v801, 7
        %v803 = vsub.s32 2, %v802
        %v804 = vrot.slane %v791, %v803
        %v805 = vlaneseq
        %v806 = vshrl.u32 %v805, 7
        %v807 = vsub.s32 3, %v806
        %v808 = vrot.slane %v791, %v807
        %v809 = vlaneseq
        %v810 = vshrl.u32 %v809, 7
        %v811 = vsub.s32 4, %v810
        %v812 = vrot.slane %v791, %v811
        %v813 = vlaneseq
        %v814 = vshrl.u32 %v813, 7
        %v815 = vsub.s32 5, %v814
        %v816 = vrot.slane %v791, %v815
        %v817 = vlaneseq
        %v818 = vshrl.u32 %v817, 7
        %v819 = vsub.s32 6, %v818
        %v820 = vrot.slane %v791, %v819
        %v821 = vlaneseq
        %v822 = vshrl.u32 %v821, 7
        %v823 = vsub.s32 7, %v822
        %v824 = vrot.slane %v791, %v823
        %v1345 = vunpack.c.l.b16 %v271
        %v1346 = vunpack.c.h.b16 %v271
        %v1347 = vunpack.c.l.b16 %v272
        %v1348 = vunpack.c.h.b16 %v272
        %v1349 = vunpack.c.l.b16 %v273
        %v1350 = vunpack.c.h.b16 %v273
        %v1351 = vunpack.c.l.b16 %v274
        %v1352 = vunpack.c.h.b16 %v274
        %v1353 = vunpack.c.l.b16 %v275
        %v1354 = vunpack.c.h.b16 %v275
        %v1355 = vunpack.c.l.b16 %v276
        %v1356 = vunpack.c.h.b16 %v276
        %v1357 = vunpack.c.l.b16 %v277
        %v1358 = vunpack.c.h.b16 %v277
        %v1359 = vunpack.c.l.b16 %v278
        %v1360 = vunpack.c.h.b16 %v278
        %v1361 = vunpack.c.l.b16 %v279
        %v1362 = vunpack.c.h.b16 %v279
        %v1363 = vunpack.c.l.b16 %v280
        %v1364 = vunpack.c.h.b16 %v280
        %v1365 = vunpack.c.l.b16 %v281
        %v1366 = vunpack.c.h.b16 %v281
        %v1367 = vunpack.c.l.b16 %v282
        %v1368 = vunpack.c.h.b16 %v282
        %v1369 = vunpack.c.l.b16 %v283
        %v1370 = vunpack.c.h.b16 %v283
        %v1371 = vunpack.c.l.b16 %v284
        %v1372 = vunpack.c.h.b16 %v284
        %v1373 = vunpack.c.l.b16 %v285
        %v1374 = vunpack.c.h.b16 %v285
        %v1375 = vunpack.c.l.b16 %v286
        %v1376 = vunpack.c.h.b16 %v286
        %v1377 = vunpack.c.l.b16 %v287
        %v1378 = vunpack.c.h.b16 %v287
        %v1379 = vunpack.c.l.b16 %v288
        %v1380 = vunpack.c.h.b16 %v288
        %v1381 = vunpack.c.l.b16 %v289
        %v1382 = vunpack.c.h.b16 %v289
        %v1383 = vunpack.c.l.b16 %v290
        %v1384 = vunpack.c.h.b16 %v290
        %v1385 = vunpack.c.l.b16 %v291
        %v1386 = vunpack.c.h.b16 %v291
        %v1387 = vunpack.c.l.b16 %v292
        %v1388 = vunpack.c.h.b16 %v292
        %v1389 = vunpack.c.l.b16 %v293
        %v1390 = vunpack.c.h.b16 %v293
        %v1391 = vunpack.c.l.b16 %v294
        %v1392 = vunpack.c.h.b16 %v294
        %v1393 = vunpack.c.l.b16 %v295
        %v1394 = vunpack.c.h.b16 %v295
        %v1395 = vunpack.c.l.b16 %v296
        %v1396 = vunpack.c.h.b16 %v296
        %v1397 = vunpack.c.l.b16 %v297
        %v1398 = vunpack.c.h.b16 %v297
        %v1399 = vunpack.c.l.b16 %v298
        %v1400 = vunpack.c.h.b16 %v298
        %v1401 = vunpack.c.l.b16 %v299
        %v1402 = vunpack.c.h.b16 %v299
        %v1403 = vunpack.c.l.b16 %v300
        %v1404 = vunpack.c.h.b16 %v300
        %v1405 = vunpack.c.l.b16 %v301
        %v1406 = vunpack.c.h.b16 %v301
        %v1407 = vunpack.c.l.b16 %v302
        %v1408 = vunpack.c.h.b16 %v302
        %v1409 = vunpack.c.l.b16 %v303
        %v1410 = vunpack.c.h.b16 %v303
        %v1411 = vunpack.c.l.b16 %v304
        %v1412 = vunpack.c.h.b16 %v304
        %v1413 = vunpack.c.l.b16 %v305
        %v1414 = vunpack.c.h.b16 %v305
        %v1415 = vunpack.c.l.b16 %v306
        %v1416 = vunpack.c.h.b16 %v306
        %v1417 = vunpack.c.l.b16 %v307
        %v1418 = vunpack.c.h.b16 %v307
        %v1419 = vunpack.c.l.b16 %v308
        %v1420 = vunpack.c.h.b16 %v308
        %v1421 = vunpack.c.l.b16 %v309
        %v1422 = vunpack.c.h.b16 %v309
        %v1423 = vunpack.c.l.b16 %v310
        %v1424 = vunpack.c.h.b16 %v310
        %v1425 = vunpack.c.l.b16 %v311
        %v1426 = vunpack.c.h.b16 %v311
        %v1427 = vunpack.c.l.b16 %v312
        %v1428 = vunpack.c.h.b16 %v312
        %v1429 = vunpack.c.l.b16 %v313
        %v1430 = vunpack.c.h.b16 %v313
        %v1431 = vunpack.c.l.b16 %v314
        %v1432 = vunpack.c.h.b16 %v314
        %v1433 = vunpack.c.l.b16 %v315
        %v1434 = vunpack.c.h.b16 %v315
        %v1435 = vunpack.c.l.b16 %v316
        %v1436 = vunpack.c.h.b16 %v316
        %v1437 = vunpack.c.l.b16 %v317
        %v1438 = vunpack.c.h.b16 %v317
        %v1439 = vunpack.c.l.b16 %v318
        %v1440 = vunpack.c.h.b16 %v318
        %v1441 = vunpack.c.l.b16 %v319
        %v1442 = vunpack.c.h.b16 %v319
        %v1443 = vunpack.c.l.b16 %v320
        %v1444 = vunpack.c.h.b16 %v320
        %v1445 = vunpack.c.l.b16 %v321
        %v1446 = vunpack.c.h.b16 %v321
        %v1447 = vunpack.c.l.b16 %v322
        %v1448 = vunpack.c.h.b16 %v322
        %v1449 = vunpack.c.l.b16 %v323
        %v1450 = vunpack.c.h.b16 %v323
        %v1451 = vunpack.c.l.b16 %v324
        %v1452 = vunpack.c.h.b16 %v324
        %v1453 = vunpack.c.l.b16 %v325
        %v1454 = vunpack.c.h.b16 %v325
        %v1455 = vunpack.c.l.b16 %v326
        %v1456 = vunpack.c.h.b16 %v326
        %v1457 = vunpack.c.l.b16 %v327
        %v1458 = vunpack.c.h.b16 %v327
        %v1459 = vunpack.c.l.b16 %v328
        %v1460 = vunpack.c.h.b16 %v328
        %v1461 = vunpack.c.l.b16 %v329
        %v1462 = vunpack.c.h.b16 %v329
        %v1463 = vunpack.c.l.b16 %v330
        %v1464 = vunpack.c.h.b16 %v330
        %v1465 = vunpack.c.l.b16 %v331
        %v1466 = vunpack.c.h.b16 %v331
        %v1467 = vunpack.c.l.b16 %v332
        %v1468 = vunpack.c.h.b16 %v332
        %v1469 = vunpack.c.l.b16 %v333
        %v1470 = vunpack.c.h.b16 %v333
        %v1471 = vunpack.c.l.b16 %v334
        %v1472 = vunpack.c.h.b16 %v334
        %v1473 = vunpack.c.l.b16 %v335
        %v1474 = vunpack.c.h.b16 %v335
        %v1475 = vunpack.c.l.b16 %v336
        %v1476 = vunpack.c.h.b16 %v336
        %v1477 = vunpack.c.l.b16 %v337
        %v1478 = vunpack.c.h.b16 %v337
        %v1479 = vunpack.c.l.b16 %v338
        %v1480 = vunpack.c.h.b16 %v338
        %v1481 = vunpack.c.l.b16 %v339
        %v1482 = vunpack.c.h.b16 %v339
        %v1483 = vunpack.c.l.b16 %v340
        %v1484 = vunpack.c.h.b16 %v340
        %v1485 = vunpack.c.l.b16 %v341
        %v1486 = vunpack.c.h.b16 %v341
        %v1487 = vunpack.c.l.b16 %v342
        %v1488 = vunpack.c.h.b16 %v342
        %v1489 = vunpack.c.l.b16 %v343
        %v1490 = vunpack.c.h.b16 %v343
        %v1491 = vunpack.c.l.b16 %v344
        %v1492 = vunpack.c.h.b16 %v344
        %v1493 = vunpack.c.l.b16 %v345
        %v1494 = vunpack.c.h.b16 %v345
        %v1495 = vunpack.c.l.b16 %v346
        %v1496 = vunpack.c.h.b16 %v346
        %v1497 = vunpack.c.l.b16 %v347
        %v1498 = vunpack.c.h.b16 %v347
        %v1499 = vunpack.c.l.b16 %v348
        %v1500 = vunpack.c.h.b16 %v348
        %v1501 = vunpack.c.l.b16 %v349
        %v1502 = vunpack.c.h.b16 %v349
        %v1503 = vunpack.c.l.b16 %v350
        %v1504 = vunpack.c.h.b16 %v350
        %v1505 = vunpack.c.l.b16 %v351
        %v1506 = vunpack.c.h.b16 %v351
        %v1507 = vunpack.c.l.b16 %v352
        %v1508 = vunpack.c.h.b16 %v352
        %v1509 = vunpack.c.l.b16 %v353
        %v1510 = vunpack.c.h.b16 %v353
        %v1511 = vunpack.c.l.b16 %v354
        %v1512 = vunpack.c.h.b16 %v354
        %v1513 = vunpack.c.l.b16 %v355
        %v1514 = vunpack.c.h.b16 %v355
        %v1515 = vunpack.c.l.b16 %v356
        %v1516 = vunpack.c.h.b16 %v356
        %v1517 = vunpack.c.l.b16 %v357
        %v1518 = vunpack.c.h.b16 %v357
        %v1519 = vunpack.c.l.b16 %v358
        %v1520 = vunpack.c.h.b16 %v358
        %v1521 = vunpack.c.l.b16 %v359
        %v1522 = vunpack.c.h.b16 %v359
        %v1523 = vunpack.c.l.b16 %v360
        %v1524 = vunpack.c.h.b16 %v360
        %v1525 = vunpack.c.l.b16 %v361
        %v1526 = vunpack.c.h.b16 %v361
        %v1527 = vunpack.c.l.b16 %v362
        %v1528 = vunpack.c.h.b16 %v362
        %v1529 = vunpack.c.l.b16 %v363
        %v1530 = vunpack.c.h.b16 %v363
        %v1531 = vunpack.c.l.b16 %v364
        %v1532 = vunpack.c.h.b16 %v364
        %v1533 = vunpack.c.l.b16 %v365
        %v1534 = vunpack.c.h.b16 %v365
        %v1535 = vunpack.c.l.b16 %v366
        %v1536 = vunpack.c.h.b16 %v366
        %v1537 = vunpack.c.l.b16 %v367
        %v1538 = vunpack.c.h.b16 %v367
        %v1539 = vunpack.c.l.b16 %v368
        %v1540 = vunpack.c.h.b16 %v368
        %v1541 = vunpack.c.l.b16 %v369
        %v1542 = vunpack.c.h.b16 %v369
        %v1543 = vunpack.c.l.b16 %v370
        %v1544 = vunpack.c.h.b16 %v370
        %v1545 = vunpack.c.l.b16 %v371
        %v1546 = vunpack.c.h.b16 %v371
        %v1547 = vunpack.c.l.b16 %v372
        %v1548 = vunpack.c.h.b16 %v372
        %v1549 = vunpack.c.l.b16 %v373
        %v1550 = vunpack.c.h.b16 %v373
        %v1551 = vunpack.c.l.b16 %v374
        %v1552 = vunpack.c.h.b16 %v374
        %v1553 = vunpack.c.l.b16 %v375
        %v1554 = vunpack.c.h.b16 %v375
        %v1555 = vunpack.c.l.b16 %v376
        %v1556 = vunpack.c.h.b16 %v376
        %v1557 = vunpack.c.l.b16 %v377
        %v1558 = vunpack.c.h.b16 %v377
        %v1559 = vunpack.c.l.b16 %v378
        %v1560 = vunpack.c.h.b16 %v378
        %v1561 = vunpack.c.l.b16 %v379
        %v1562 = vunpack.c.h.b16 %v379
        %v1563 = vunpack.c.l.b16 %v380
        %v1564 = vunpack.c.h.b16 %v380
        %v1565 = vunpack.c.l.b16 %v381
        %v1566 = vunpack.c.h.b16 %v381
        %v1567 = vunpack.c.l.b16 %v382
        %v1568 = vunpack.c.h.b16 %v382
        %v1569 = vunpack.c.l.b16 %v383
        %v1570 = vunpack.c.h.b16 %v383
        %v1571 = vunpack.c.l.b16 %v384
        %v1572 = vunpack.c.h.b16 %v384
        %v1573 = vunpack.c.l.b16 %v385
        %v1574 = vunpack.c.h.b16 %v385
        %v1575 = vunpack.c.l.b16 %v386
        %v1576 = vunpack.c.h.b16 %v386
        %v1577 = vunpack.c.l.b16 %v387
        %v1578 = vunpack.c.h.b16 %v387
        %v1579 = vunpack.c.l.b16 %v388
        %v1580 = vunpack.c.h.b16 %v388
        %v1581 = vunpack.c.l.b16 %v389
        %v1582 = vunpack.c.h.b16 %v389
        %v1583 = vunpack.c.l.b16 %v390
        %v1584 = vunpack.c.h.b16 %v390
        %v1585 = vunpack.c.l.b16 %v391
        %v1586 = vunpack.c.h.b16 %v391
        %v1587 = vunpack.c.l.b16 %v392
        %v1588 = vunpack.c.h.b16 %v392
        %v1589 = vunpack.c.l.b16 %v393
        %v1590 = vunpack.c.h.b16 %v393
        %v1591 = vunpack.c.l.b16 %v394
        %v1592 = vunpack.c.h.b16 %v394
        %v1593 = vunpack.c.l.b16 %v395
        %v1594 = vunpack.c.h.b16 %v395
        %v1595 = vunpack.c.l.b16 %v396
        %v1596 = vunpack.c.h.b16 %v396
        %v1597 = vunpack.c.l.b16 %v397
        %v1598 = vunpack.c.h.b16 %v397
        %v1599 = vunpack.c.l.b16 %v398
        %v1600 = vunpack.c.h.b16 %v398
        %v1601 = vunpack.c.l.b16 %v399
        %v1602 = vunpack.c.h.b16 %v399
        %v1603 = vunpack.c.l.b16 %v400
        %v1604 = vunpack.c.h.b16 %v400
        %v1605 = vunpack.c.l.b16 %v401
        %v1606 = vunpack.c.h.b16 %v401
        %v1607 = vunpack.c.l.b16 %v402
        %v1608 = vunpack.c.h.b16 %v402
        %v1609 = vunpack.c.l.b16 %v403
        %v1610 = vunpack.c.h.b16 %v403
        %v1611 = vunpack.c.l.b16 %v404
        %v1612 = vunpack.c.h.b16 %v404
        %v1613 = vunpack.c.l.b16 %v405
        %v1614 = vunpack.c.h.b16 %v405
        %v1615 = vunpack.c.l.b16 %v406
        %v1616 = vunpack.c.h.b16 %v406
        %v1617 = vunpack.c.l.b16 %v407
        %v1618 = vunpack.c.h.b16 %v407
        %v1619 = vunpack.c.l.b16 %v408
        %v1620 = vunpack.c.h.b16 %v408
        %v1621 = vunpack.c.l.b16 %v409
        %v1622 = vunpack.c.h.b16 %v409
        %v1623 = vunpack.c.l.b16 %v410
        %v1624 = vunpack.c.h.b16 %v410
        %v1625 = vunpack.c.l.b16 %v411
        %v1626 = vunpack.c.h.b16 %v411
        %v1627 = vunpack.c.l.b16 %v412
        %v1628 = vunpack.c.h.b16 %v412
        %v1629 = vunpack.c.l.b16 %v413
        %v1630 = vunpack.c.h.b16 %v413
        %v1631 = vunpack.c.l.b16 %v414
        %v1632 = vunpack.c.h.b16 %v414
        %v1633 = vunpack.c.l.b16 %v415
        %v1634 = vunpack.c.h.b16 %v415
        %v1635 = vunpack.c.l.b16 %v416
        %v1636 = vunpack.c.h.b16 %v416
        %v1637 = vunpack.c.l.b16 %v417
        %v1638 = vunpack.c.h.b16 %v417
        %v1639 = vunpack.c.l.b16 %v418
        %v1640 = vunpack.c.h.b16 %v418
        %v1641 = vunpack.c.l.b16 %v419
        %v1642 = vunpack.c.h.b16 %v419
        %v1643 = vunpack.c.l.b16 %v420
        %v1644 = vunpack.c.h.b16 %v420
        %v1645 = vunpack.c.l.b16 %v421
        %v1646 = vunpack.c.h.b16 %v421
        %v1647 = vunpack.c.l.b16 %v422
        %v1648 = vunpack.c.h.b16 %v422
        %v1649 = vunpack.c.l.b16 %v423
        %v1650 = vunpack.c.h.b16 %v423
        %v1651 = vunpack.c.l.b16 %v424
        %v1652 = vunpack.c.h.b16 %v424
        %v1653 = vunpack.c.l.b16 %v425
        %v1654 = vunpack.c.h.b16 %v425
        %v1655 = vunpack.c.l.b16 %v426
        %v1656 = vunpack.c.h.b16 %v426
        %v1657 = vunpack.c.l.b16 %v427
        %v1658 = vunpack.c.h.b16 %v427
        %v1659 = vunpack.c.l.b16 %v428
        %v1660 = vunpack.c.h.b16 %v428
        %v1661 = vunpack.c.l.b16 %v429
        %v1662 = vunpack.c.h.b16 %v429
        %v1663 = vunpack.c.l.b16 %v430
        %v1664 = vunpack.c.h.b16 %v430
        %v1665 = vunpack.c.l.b16 %v431
        %v1666 = vunpack.c.h.b16 %v431
        %v1667 = vunpack.c.l.b16 %v432
        %v1668 = vunpack.c.h.b16 %v432
        %v1669 = vunpack.c.l.b16 %v433
        %v1670 = vunpack.c.h.b16 %v433
        %v1671 = vunpack.c.l.b16 %v434
        %v1672 = vunpack.c.h.b16 %v434
        %v1673 = vunpack.c.l.b16 %v435
        %v1674 = vunpack.c.h.b16 %v435
        %v1675 = vunpack.c.l.b16 %v436
        %v1676 = vunpack.c.h.b16 %v436
        %v1677 = vunpack.c.l.b16 %v437
        %v1678 = vunpack.c.h.b16 %v437
        %v1679 = vunpack.c.l.b16 %v438
        %v1680 = vunpack.c.h.b16 %v438
        %v1681 = vunpack.c.l.b16 %v439
        %v1682 = vunpack.c.h.b16 %v439
        %v1683 = vunpack.c.l.b16 %v440
        %v1684 = vunpack.c.h.b16 %v440
        %v1685 = vunpack.c.l.b16 %v441
        %v1686 = vunpack.c.h.b16 %v441
        %v1687 = vunpack.c.l.b16 %v442
        %v1688 = vunpack.c.h.b16 %v442
        %v1689 = vunpack.c.l.b16 %v443
        %v1690 = vunpack.c.h.b16 %v443
        %v1691 = vunpack.c.l.b16 %v444
        %v1692 = vunpack.c.h.b16 %v444
        %v1693 = vunpack.c.l.b16 %v445
        %v1694 = vunpack.c.h.b16 %v445
        %v1695 = vunpack.c.l.b16 %v446
        %v1696 = vunpack.c.h.b16 %v446
        %v1697 = vunpack.c.l.b16 %v447
        %v1698 = vunpack.c.h.b16 %v447
        %v1699 = vunpack.c.l.b16 %v448
        %v1700 = vunpack.c.h.b16 %v448
        %v1701 = vunpack.c.l.b16 %v449
        %v1702 = vunpack.c.h.b16 %v449
        %v1703 = vunpack.c.l.b16 %v450
        %v1704 = vunpack.c.h.b16 %v450
        %v1705 = vunpack.c.l.b16 %v451
        %v1706 = vunpack.c.h.b16 %v451
        %v1707 = vunpack.c.l.b16 %v452
        %v1708 = vunpack.c.h.b16 %v452
        %v1709 = vunpack.c.l.b16 %v453
        %v1710 = vunpack.c.h.b16 %v453
        %v1711 = vunpack.c.l.b16 %v454
        %v1712 = vunpack.c.h.b16 %v454
        %v1713 = vunpack.c.l.b16 %v455
        %v1714 = vunpack.c.h.b16 %v455
        %v1715 = vunpack.c.l.b16 %v456
        %v1716 = vunpack.c.h.b16 %v456
        %v1717 = vunpack.c.l.b16 %v457
        %v1718 = vunpack.c.h.b16 %v457
        %v1719 = vunpack.c.l.b16 %v458
        %v1720 = vunpack.c.h.b16 %v458
        %v1721 = vunpack.c.l.b16 %v459
        %v1722 = vunpack.c.h.b16 %v459
        %v1723 = vunpack.c.l.b16 %v460
        %v1724 = vunpack.c.h.b16 %v460
        %v1725 = vunpack.c.l.b16 %v461
        %v1726 = vunpack.c.h.b16 %v461
        %v1727 = vunpack.c.l.b16 %v462
        %v1728 = vunpack.c.h.b16 %v462
        %v1729 = vunpack.c.l.b16 %v463
        %v1730 = vunpack.c.h.b16 %v463
        %v1731 = vunpack.c.l.b16 %v464
        %v1732 = vunpack.c.h.b16 %v464
        %v1733 = vunpack.c.l.b16 %v465
        %v1734 = vunpack.c.h.b16 %v465
        %v1735 = vunpack.c.l.b16 %v466
        %v1736 = vunpack.c.h.b16 %v466
        %v1737 = vunpack.c.l.b16 %v467
        %v1738 = vunpack.c.h.b16 %v467
        %v1739 = vunpack.c.l.b16 %v468
        %v1740 = vunpack.c.h.b16 %v468
        %v1741 = vunpack.c.l.b16 %v469
        %v1742 = vunpack.c.h.b16 %v469
        %v1743 = vunpack.c.l.b16 %v470
        %v1744 = vunpack.c.h.b16 %v470
        %v1745 = vunpack.c.l.b16 %v471
        %v1746 = vunpack.c.h.b16 %v471
        %v1747 = vunpack.c.l.b16 %v472
        %v1748 = vunpack.c.h.b16 %v472
        %v1749 = vunpack.c.l.b16 %v473
        %v1750 = vunpack.c.h.b16 %v473
        %v1751 = vunpack.c.l.b16 %v474
        %v1752 = vunpack.c.h.b16 %v474
        %v1753 = vunpack.c.l.b16 %v475
        %v1754 = vunpack.c.h.b16 %v475
        %v1755 = vunpack.c.l.b16 %v476
        %v1756 = vunpack.c.h.b16 %v476
        %v1757 = vunpack.c.l.b16 %v477
        %v1758 = vunpack.c.h.b16 %v477
        %v1759 = vunpack.c.l.b16 %v478
        %v1760 = vunpack.c.h.b16 %v478
        %v1761 = vunpack.c.l.b16 %v479
        %v1762 = vunpack.c.h.b16 %v479
        %v1763 = vunpack.c.l.b16 %v480
        %v1764 = vunpack.c.h.b16 %v480
        %v1765 = vunpack.c.l.b16 %v481
        %v1766 = vunpack.c.h.b16 %v481
        %v1767 = vunpack.c.l.b16 %v482
        %v1768 = vunpack.c.h.b16 %v482
        %v1769 = vunpack.c.l.b16 %v483
        %v1770 = vunpack.c.h.b16 %v483
        %v1771 = vunpack.c.l.b16 %v484
        %v1772 = vunpack.c.h.b16 %v484
        %v1773 = vunpack.c.l.b16 %v485
        %v1774 = vunpack.c.h.b16 %v485
        %v1775 = vunpack.c.l.b16 %v486
        %v1776 = vunpack.c.h.b16 %v486
        %v1777 = vunpack.c.l.b16 %v487
        %v1778 = vunpack.c.h.b16 %v487
        %v1779 = vunpack.c.l.b16 %v488
        %v1780 = vunpack.c.h.b16 %v488
        %v1781 = vunpack.c.l.b16 %v489
        %v1782 = vunpack.c.h.b16 %v489
        %v1783 = vunpack.c.l.b16 %v490
        %v1784 = vunpack.c.h.b16 %v490
        %v1785 = vunpack.c.l.b16 %v491
        %v1786 = vunpack.c.h.b16 %v491
        %v1787 = vunpack.c.l.b16 %v492
        %v1788 = vunpack.c.h.b16 %v492
        %v1789 = vunpack.c.l.b16 %v493
        %v1790 = vunpack.c.h.b16 %v493
        %v1791 = vunpack.c.l.b16 %v494
        %v1792 = vunpack.c.h.b16 %v494
        %v1793 = vunpack.c.l.b16 %v495
        %v1794 = vunpack.c.h.b16 %v495
        %v1795 = vunpack.c.l.b16 %v496
        %v1796 = vunpack.c.h.b16 %v496
        %v1797 = vunpack.c.l.b16 %v497
        %v1798 = vunpack.c.h.b16 %v497
        %v1799 = vunpack.c.l.b16 %v498
        %v1800 = vunpack.c.h.b16 %v498
        %v1801 = vunpack.c.l.b16 %v499
        %v1802 = vunpack.c.h.b16 %v499
        %v1803 = vunpack.c.l.b16 %v500
        %v1804 = vunpack.c.h.b16 %v500
        %v1805 = vunpack.c.l.b16 %v501
        %v1806 = vunpack.c.h.b16 %v501
        %v1807 = vunpack.c.l.b16 %v502
        %v1808 = vunpack.c.h.b16 %v502
        %v1809 = vunpack.c.l.b16 %v503
        %v1810 = vunpack.c.h.b16 %v503
        %v1811 = vunpack.c.l.b16 %v504
        %v1812 = vunpack.c.h.b16 %v504
        %v1813 = vunpack.c.l.b16 %v505
        %v1814 = vunpack.c.h.b16 %v505
        %v1815 = vunpack.c.l.b16 %v506
        %v1816 = vunpack.c.h.b16 %v506
        %v1817 = vunpack.c.l.b16 %v507
        %v1818 = vunpack.c.h.b16 %v507
        %v1819 = vunpack.c.l.b16 %v508
        %v1820 = vunpack.c.h.b16 %v508
        %v1821 = vunpack.c.l.b16 %v509
        %v1822 = vunpack.c.h.b16 %v509
        %v1823 = vunpack.c.l.b16 %v510
        %v1824 = vunpack.c.h.b16 %v510
        %v1825 = vunpack.c.l.b16 %v511
        %v1826 = vunpack.c.h.b16 %v511
        %v1827 = vunpack.c.l.b16 %v512
        %v1828 = vunpack.c.h.b16 %v512
        %v1829 = vunpack.c.l.b16 %v513
        %v1830 = vunpack.c.h.b16 %v513
        %v1831 = vunpack.c.l.b16 %v514
        %v1832 = vunpack.c.h.b16 %v514
        %v1833 = vunpack.c.l.b16 %v515
        %v1834 = vunpack.c.h.b16 %v515
        %v1835 = vunpack.c.l.b16 %v516
        %v1836 = vunpack.c.h.b16 %v516
        %v1837 = vunpack.c.l.b16 %v517
        %v1838 = vunpack.c.h.b16 %v517
        %v1839 = vunpack.c.l.b16 %v518
        %v1840 = vunpack.c.h.b16 %v518
        %v1841 = vunpack.c.l.b16 %v519
        %v1842 = vunpack.c.h.b16 %v519
        %v1843 = vunpack.c.l.b16 %v520
        %v1844 = vunpack.c.h.b16 %v520
        %v1845 = vunpack.c.l.b16 %v521
        %v1846 = vunpack.c.h.b16 %v521
        %v1847 = vunpack.c.l.b16 %v522
        %v1848 = vunpack.c.h.b16 %v522
        %v1849 = vunpack.c.l.b16 %v523
        %v1850 = vunpack.c.h.b16 %v523
        %v1851 = vunpack.c.l.b16 %v524
        %v1852 = vunpack.c.h.b16 %v524
        %v1853 = vunpack.c.l.b16 %v525
        %v1854 = vunpack.c.h.b16 %v525
        %v1855 = vunpack.c.l.b16 %v526
        %v1856 = vunpack.c.h.b16 %v526
        %v1857 = vunpack.c.l.b16 %v527
        %v1858 = vunpack.c.h.b16 %v527
        %v1859 = vunpack.c.l.b16 %v528
        %v1860 = vunpack.c.h.b16 %v528
        %v1861 = vunpack.c.l.b16 %v529
        %v1862 = vunpack.c.h.b16 %v529
        %v1863 = vunpack.c.l.b16 %v530
        %v1864 = vunpack.c.h.b16 %v530
        %v1865 = vunpack.c.l.b16 %v531
        %v1866 = vunpack.c.h.b16 %v531
        %v1867 = vunpack.c.l.b16 %v532
        %v1868 = vunpack.c.h.b16 %v532
        %v1869 = vunpack.c.l.b16 %v533
        %v1870 = vunpack.c.h.b16 %v533
        %v1871 = vunpack.c.l.b16 %v534
        %v1872 = vunpack.c.h.b16 %v534
        %v1873 = vunpack.c.l.b16 %v535
        %v1874 = vunpack.c.h.b16 %v535
        %v1875 = vunpack.c.l.b16 %v536
        %v1876 = vunpack.c.h.b16 %v536
        %v1877 = vunpack.c.l.b16 %v537
        %v1878 = vunpack.c.h.b16 %v537
        %v1879 = vunpack.c.l.b16 %v538
        %v1880 = vunpack.c.h.b16 %v538
        %v1881 = vunpack.c.l.b16 %v539
        %v1882 = vunpack.c.h.b16 %v539
        %v1883 = vunpack.c.l.b16 %v540
        %v1884 = vunpack.c.h.b16 %v540
        %v1885 = vunpack.c.l.b16 %v541
        %v1886 = vunpack.c.h.b16 %v541
        %v1887 = vunpack.c.l.b16 %v542
        %v1888 = vunpack.c.h.b16 %v542
        %v1889 = vunpack.c.l.b16 %v543
        %v1890 = vunpack.c.h.b16 %v543
        %v1891 = vunpack.c.l.b16 %v544
        %v1892 = vunpack.c.h.b16 %v544
        %v1893 = vunpack.c.l.b16 %v545
        %v1894 = vunpack.c.h.b16 %v545
        %v1895 = vunpack.c.l.b16 %v546
        %v1896 = vunpack.c.h.b16 %v546
        %v1897 = vunpack.c.l.b16 %v547
        %v1898 = vunpack.c.h.b16 %v547
        %v1899 = vunpack.c.l.b16 %v548
        %v1900 = vunpack.c.h.b16 %v548
        %v1901 = vunpack.c.l.b16 %v549
        %v1902 = vunpack.c.h.b16 %v549
        %v1903 = vunpack.c.l.b16 %v550
        %v1904 = vunpack.c.h.b16 %v550
        %v1905 = vunpack.c.l.b16 %v551
        %v1906 = vunpack.c.h.b16 %v551
        %v1907 = vunpack.c.l.b16 %v552
        %v1908 = vunpack.c.h.b16 %v552
        %v1909 = vunpack.c.l.b16 %v553
        %v1910 = vunpack.c.h.b16 %v553
        %v1911 = vunpack.c.l.b16 %v554
        %v1912 = vunpack.c.h.b16 %v554
        %v1913 = vunpack.c.l.b16 %v555
        %v1914 = vunpack.c.h.b16 %v555
        %v1915 = vunpack.c.l.b16 %v556
        %v1916 = vunpack.c.h.b16 %v556
        %v1917 = vunpack.c.l.b16 %v557
        %v1918 = vunpack.c.h.b16 %v557
        %v1919 = vunpack.c.l.b16 %v558
        %v1920 = vunpack.c.h.b16 %v558
        %v1921 = vunpack.c.l.b16 %v559
        %v1922 = vunpack.c.h.b16 %v559
        %v1923 = vunpack.c.l.b16 %v560
        %v1924 = vunpack.c.h.b16 %v560
        %v1925 = vunpack.c.l.b16 %v561
        %v1926 = vunpack.c.h.b16 %v561
        %v1927 = vunpack.c.l.b16 %v562
        %v1928 = vunpack.c.h.b16 %v562
        %v1929 = vunpack.c.l.b16 %v563
        %v1930 = vunpack.c.h.b16 %v563
        %v1931 = vunpack.c.l.b16 %v564
        %v1932 = vunpack.c.h.b16 %v564
        %v1933 = vunpack.c.l.b16 %v565
        %v1934 = vunpack.c.h.b16 %v565
        %v1935 = vunpack.c.l.b16 %v566
        %v1936 = vunpack.c.h.b16 %v566
        %v1937 = vunpack.c.l.b16 %v567
        %v1938 = vunpack.c.h.b16 %v567
        %v1939 = vunpack.c.l.b16 %v568
        %v1940 = vunpack.c.h.b16 %v568
        %v1941 = vunpack.c.l.b16 %v569
        %v1942 = vunpack.c.h.b16 %v569
        %v1943 = vunpack.c.l.b16 %v570
        %v1944 = vunpack.c.h.b16 %v570
        %v1945 = vunpack.c.l.b16 %v571
        %v1946 = vunpack.c.h.b16 %v571
        %v1947 = vunpack.c.l.b16 %v572
        %v1948 = vunpack.c.h.b16 %v572
        %v1949 = vunpack.c.l.b16 %v573
        %v1950 = vunpack.c.h.b16 %v573
        %v1951 = vunpack.c.l.b16 %v574
        %v1952 = vunpack.c.h.b16 %v574
        %v1953 = vunpack.c.l.b16 %v575
        %v1954 = vunpack.c.h.b16 %v575
        %v1955 = vunpack.c.l.b16 %v576
        %v1956 = vunpack.c.h.b16 %v576
        %v1957 = vunpack.c.l.b16 %v577
        %v1958 = vunpack.c.h.b16 %v577
        %v1959 = vunpack.c.l.b16 %v578
        %v1960 = vunpack.c.h.b16 %v578
        %v1961 = vunpack.c.l.b16 %v579
        %v1962 = vunpack.c.h.b16 %v579
        %v1963 = vunpack.c.l.b16 %v580
        %v1964 = vunpack.c.h.b16 %v580
        %v1965 = vunpack.c.l.b16 %v581
        %v1966 = vunpack.c.h.b16 %v581
        %v1967 = vunpack.c.l.b16 %v582
        %v1968 = vunpack.c.h.b16 %v582
        %v1969 = vunpack.c.l.b16 %v583
        %v1970 = vunpack.c.h.b16 %v583
        %v1971 = vunpack.c.l.b16 %v584
        %v1972 = vunpack.c.h.b16 %v584
        %v1973 = vunpack.c.l.b16 %v585
        %v1974 = vunpack.c.h.b16 %v585
        %v1975 = vunpack.c.l.b16 %v586
        %v1976 = vunpack.c.h.b16 %v586
        %v1977 = vunpack.c.l.b16 %v587
        %v1978 = vunpack.c.h.b16 %v587
        %v1979 = vunpack.c.l.b16 %v588
        %v1980 = vunpack.c.h.b16 %v588
        %v1981 = vunpack.c.l.b16 %v589
        %v1982 = vunpack.c.h.b16 %v589
        %v1983 = vunpack.c.l.b16 %v590
        %v1984 = vunpack.c.h.b16 %v590
        %v1985 = vunpack.c.l.b16 %v591
        %v1986 = vunpack.c.h.b16 %v591
        %v1987 = vunpack.c.l.b16 %v592
        %v1988 = vunpack.c.h.b16 %v592
        %v1989 = vunpack.c.l.b16 %v593
        %v1990 = vunpack.c.h.b16 %v593
        %v1991 = vunpack.c.l.b16 %v594
        %v1992 = vunpack.c.h.b16 %v594
        %v1993 = vunpack.c.l.b16 %v595
        %v1994 = vunpack.c.h.b16 %v595
        %v1995 = vunpack.c.l.b16 %v596
        %v1996 = vunpack.c.h.b16 %v596
        %v1997 = vunpack.c.l.b16 %v597
        %v1998 = vunpack.c.h.b16 %v597
        %v1999 = vunpack.c.l.b16 %v598
        %v2000 = vunpack.c.h.b16 %v598
        %v2001 = vunpack.c.l.b16 %v599
        %v2002 = vunpack.c.h.b16 %v599
        %v2003 = vunpack.c.l.b16 %v600
        %v2004 = vunpack.c.h.b16 %v600
        %v2005 = vunpack.c.l.b16 %v601
        %v2006 = vunpack.c.h.b16 %v601
        %v2007 = vunpack.c.l.b16 %v602
        %v2008 = vunpack.c.h.b16 %v602
        %v2009 = vunpack.c.l.b16 %v603
        %v2010 = vunpack.c.h.b16 %v603
        %v2011 = vunpack.c.l.b16 %v604
        %v2012 = vunpack.c.h.b16 %v604
        %v2013 = vunpack.c.l.b16 %v605
        %v2014 = vunpack.c.h.b16 %v605
        %v2015 = vunpack.c.l.b16 %v606
        %v2016 = vunpack.c.h.b16 %v606
        %v2017 = vunpack.c.l.b16 %v607
        %v2018 = vunpack.c.h.b16 %v607
        %v2019 = vunpack.c.l.b16 %v608
        %v2020 = vunpack.c.h.b16 %v608
        %v2021 = vunpack.c.l.b16 %v609
        %v2022 = vunpack.c.h.b16 %v609
        %v2023 = vunpack.c.l.b16 %v610
        %v2024 = vunpack.c.h.b16 %v610
        %v2025 = vunpack.c.l.b16 %v611
        %v2026 = vunpack.c.h.b16 %v611
        %v2027 = vunpack.c.l.b16 %v612
        %v2028 = vunpack.c.h.b16 %v612
        %v2029 = vunpack.c.l.b16 %v613
        %v2030 = vunpack.c.h.b16 %v613
        %v2031 = vunpack.c.l.b16 %v614
        %v2032 = vunpack.c.h.b16 %v614
        %v2033 = vunpack.c.l.b16 %v615
        %v2034 = vunpack.c.h.b16 %v615
        %v2035 = vunpack.c.l.b16 %v616
        %v2036 = vunpack.c.h.b16 %v616
        %v2037 = vunpack.c.l.b16 %v617
        %v2038 = vunpack.c.h.b16 %v617
        %v2039 = vunpack.c.l.b16 %v618
        %v2040 = vunpack.c.h.b16 %v618
        %v2041 = vunpack.c.l.b16 %v619
        %v2042 = vunpack.c.h.b16 %v619
        %v2043 = vunpack.c.l.b16 %v620
        %v2044 = vunpack.c.h.b16 %v620
        %v2045 = vunpack.c.l.b16 %v621
        %v2046 = vunpack.c.h.b16 %v621
        %v2047 = vunpack.c.l.b16 %v622
        %v2048 = vunpack.c.h.b16 %v622
        %v2049 = vunpack.c.l.b16 %v623
        %v2050 = vunpack.c.h.b16 %v623
        %v2051 = vunpack.c.l.b16 %v624
        %v2052 = vunpack.c.h.b16 %v624
        %v2053 = vunpack.c.l.b16 %v625
        %v2054 = vunpack.c.h.b16 %v625
        %v2055 = vunpack.c.l.b16 %v626
        %v2056 = vunpack.c.h.b16 %v626
        %v2057 = vunpack.c.l.b16 %v627
        %v2058 = vunpack.c.h.b16 %v627
        %v2059 = vunpack.c.l.b16 %v628
        %v2060 = vunpack.c.h.b16 %v628
        %v2061 = vunpack.c.l.b16 %v629
        %v2062 = vunpack.c.h.b16 %v629
        %v2063 = vunpack.c.l.b16 %v630
        %v2064 = vunpack.c.h.b16 %v630
        %v2065 = vunpack.c.l.b16 %v631
        %v2066 = vunpack.c.h.b16 %v631
        %v2067 = vunpack.c.l.b16 %v632
        %v2068 = vunpack.c.h.b16 %v632
        %v2069 = vunpack.c.l.b16 %v633
        %v2070 = vunpack.c.h.b16 %v633
        %v2071 = vunpack.c.l.b16 %v634
        %v2072 = vunpack.c.h.b16 %v634
        %v2073 = vunpack.c.l.b16 %v635
        %v2074 = vunpack.c.h.b16 %v635
        %v2075 = vunpack.c.l.b16 %v636
        %v2076 = vunpack.c.h.b16 %v636
        %v2077 = vunpack.c.l.b16 %v637
        %v2078 = vunpack.c.h.b16 %v637
        %v2079 = vunpack.c.l.b16 %v638
        %v2080 = vunpack.c.h.b16 %v638
        %v2081 = vunpack.c.l.b16 %v639
        %v2082 = vunpack.c.h.b16 %v639
        %v2083 = vunpack.c.l.b16 %v640
        %v2084 = vunpack.c.h.b16 %v640
        %v2085 = vunpack.c.l.b16 %v641
        %v2086 = vunpack.c.h.b16 %v641
        %v2087 = vunpack.c.l.b16 %v642
        %v2088 = vunpack.c.h.b16 %v642
        %v2089 = vunpack.c.l.b16 %v643
        %v2090 = vunpack.c.h.b16 %v643
        %v2091 = vunpack.c.l.b16 %v644
        %v2092 = vunpack.c.h.b16 %v644
        %v2093 = vunpack.c.l.b16 %v645
        %v2094 = vunpack.c.h.b16 %v645
        %v2095 = vunpack.c.l.b16 %v646
        %v2096 = vunpack.c.h.b16 %v646
        %v2097 = vunpack.c.l.b16 %v647
        %v2098 = vunpack.c.h.b16 %v647
        %v2099 = vunpack.c.l.b16 %v648
        %v2100 = vunpack.c.h.b16 %v648
        %v2101 = vunpack.c.l.b16 %v649
        %v2102 = vunpack.c.h.b16 %v649
        %v2103 = vunpack.c.l.b16 %v650
        %v2104 = vunpack.c.h.b16 %v650
        %v2105 = vunpack.c.l.b16 %v651
        %v2106 = vunpack.c.h.b16 %v651
        %v2107 = vunpack.c.l.b16 %v652
        %v2108 = vunpack.c.h.b16 %v652
        %v2109 = vunpack.c.l.b16 %v653
        %v2110 = vunpack.c.h.b16 %v653
        %v2111 = vunpack.c.l.b16 %v654
        %v2112 = vunpack.c.h.b16 %v654
        %v2113 = vunpack.c.l.b16 %v655
        %v2114 = vunpack.c.h.b16 %v655
        %v2115 = vunpack.c.l.b16 %v656
        %v2116 = vunpack.c.h.b16 %v656
        %v2117 = vunpack.c.l.b16 %v657
        %v2118 = vunpack.c.h.b16 %v657
        %v2119 = vunpack.c.l.b16 %v658
        %v2120 = vunpack.c.h.b16 %v658
        %v2121 = vunpack.c.l.b16 %v659
        %v2122 = vunpack.c.h.b16 %v659
        %v2123 = vunpack.c.l.b16 %v660
        %v2124 = vunpack.c.h.b16 %v660
        %v2125 = vunpack.c.l.b16 %v661
        %v2126 = vunpack.c.h.b16 %v661
        %v2127 = vunpack.c.l.b16 %v662
        %v2128 = vunpack.c.h.b16 %v662
        %v2129 = vunpack.c.l.b16 %v663
        %v2130 = vunpack.c.h.b16 %v663
        %v2131 = vunpack.c.l.b16 %v664
        %v2132 = vunpack.c.h.b16 %v664
        %v2133 = vunpack.c.l.b16 %v665
        %v2134 = vunpack.c.h.b16 %v665
        %v2135 = vunpack.c.l.b16 %v666
        %v2136 = vunpack.c.h.b16 %v666
        %v2137 = vunpack.c.l.b16 %v667
        %v2138 = vunpack.c.h.b16 %v667
        %v2139 = vunpack.c.l.b16 %v668
        %v2140 = vunpack.c.h.b16 %v668
        %v2141 = vunpack.c.l.b16 %v669
        %v2142 = vunpack.c.h.b16 %v669
        %v2143 = vunpack.c.l.b16 %v670
        %v2144 = vunpack.c.h.b16 %v670
        %v2145 = vunpack.c.l.b16 %v671
        %v2146 = vunpack.c.h.b16 %v671
        %v2147 = vunpack.c.l.b16 %v672
        %v2148 = vunpack.c.h.b16 %v672
        %v2149 = vunpack.c.l.b16 %v673
        %v2150 = vunpack.c.h.b16 %v673
        %v2151 = vunpack.c.l.b16 %v674
        %v2152 = vunpack.c.h.b16 %v674
        %v2153 = vunpack.c.l.b16 %v675
        %v2154 = vunpack.c.h.b16 %v675
        %v2155 = vunpack.c.l.b16 %v676
        %v2156 = vunpack.c.h.b16 %v676
        %v2157 = vunpack.c.l.b16 %v677
        %v2158 = vunpack.c.h.b16 %v677
        %v2159 = vunpack.c.l.b16 %v678
        %v2160 = vunpack.c.h.b16 %v678
        %v2161 = vunpack.c.l.b16 %v679
        %v2162 = vunpack.c.h.b16 %v679
        %v2163 = vunpack.c.l.b16 %v680
        %v2164 = vunpack.c.h.b16 %v680
        %v2165 = vunpack.c.l.b16 %v681
        %v2166 = vunpack.c.h.b16 %v681
        %v2167 = vunpack.c.l.b16 %v682
        %v2168 = vunpack.c.h.b16 %v682
        %v2169 = vunpack.c.l.b16 %v683
        %v2170 = vunpack.c.h.b16 %v683
        %v2171 = vunpack.c.l.b16 %v684
        %v2172 = vunpack.c.h.b16 %v684
        %v2173 = vunpack.c.l.b16 %v685
        %v2174 = vunpack.c.h.b16 %v685
        %v2175 = vunpack.c.l.b16 %v686
        %v2176 = vunpack.c.h.b16 %v686
        %v2177 = vunpack.c.l.b16 %v687
        %v2178 = vunpack.c.h.b16 %v687
        %v2179 = vunpack.c.l.b16 %v688
        %v2180 = vunpack.c.h.b16 %v688
        %v2181 = vunpack.c.l.b16 %v689
        %v2182 = vunpack.c.h.b16 %v689
        %v2183 = vunpack.c.l.b16 %v690
        %v2184 = vunpack.c.h.b16 %v690
        %v2185 = vunpack.c.l.b16 %v691
        %v2186 = vunpack.c.h.b16 %v691
        %v2187 = vunpack.c.l.b16 %v692
        %v2188 = vunpack.c.h.b16 %v692
        %v2189 = vunpack.c.l.b16 %v693
        %v2190 = vunpack.c.h.b16 %v693
        %v2191 = vunpack.c.l.b16 %v694
        %v2192 = vunpack.c.h.b16 %v694
        %v2193 = vunpack.c.l.b16 %v695
        %v2194 = vunpack.c.h.b16 %v695
        %v2195 = vunpack.c.l.b16 %v696
        %v2196 = vunpack.c.h.b16 %v696
        %v2197 = vunpack.c.l.b16 %v697
        %v2198 = vunpack.c.h.b16 %v697
        %v2199 = vunpack.c.l.b16 %v698
        %v2200 = vunpack.c.h.b16 %v698
        %v2201 = vunpack.c.l.b16 %v699
        %v2202 = vunpack.c.h.b16 %v699
        %v2203 = vunpack.c.l.b16 %v700
        %v2204 = vunpack.c.h.b16 %v700
        %v2205 = vunpack.c.l.b16 %v701
        %v2206 = vunpack.c.h.b16 %v701
        %v2207 = vunpack.c.l.b16 %v702
        %v2208 = vunpack.c.h.b16 %v702
        %v2209 = vunpack.c.l.b16 %v703
        %v2210 = vunpack.c.h.b16 %v703
        %v2211 = vunpack.c.l.b16 %v704
        %v2212 = vunpack.c.h.b16 %v704
        %v2213 = vunpack.c.l.b16 %v705
        %v2214 = vunpack.c.h.b16 %v705
        %v2215 = vunpack.c.l.b16 %v706
        %v2216 = vunpack.c.h.b16 %v706
        %v2217 = vunpack.c.l.b16 %v707
        %v2218 = vunpack.c.h.b16 %v707
        %v2219 = vunpack.c.l.b16 %v708
        %v2220 = vunpack.c.h.b16 %v708
        %v2221 = vunpack.c.l.b16 %v709
        %v2222 = vunpack.c.h.b16 %v709
        %v2223 = vunpack.c.l.b16 %v710
        %v2224 = vunpack.c.h.b16 %v710
        %v2225 = vunpack.c.l.b16 %v711
        %v2226 = vunpack.c.h.b16 %v711
        %v2227 = vunpack.c.l.b16 %v712
        %v2228 = vunpack.c.h.b16 %v712
        %v2229 = vunpack.c.l.b16 %v713
        %v2230 = vunpack.c.h.b16 %v713
        %v2231 = vunpack.c.l.b16 %v714
        %v2232 = vunpack.c.h.b16 %v714
        %v2233 = vunpack.c.l.b16 %v715
        %v2234 = vunpack.c.h.b16 %v715
        %v2235 = vunpack.c.l.b16 %v716
        %v2236 = vunpack.c.h.b16 %v716
        %v2237 = vunpack.c.l.b16 %v717
        %v2238 = vunpack.c.h.b16 %v717
        %v2239 = vunpack.c.l.b16 %v718
        %v2240 = vunpack.c.h.b16 %v718
        %v2241 = vunpack.c.l.b16 %v719
        %v2242 = vunpack.c.h.b16 %v719
        %v2243 = vunpack.c.l.b16 %v720
        %v2244 = vunpack.c.h.b16 %v720
        %v2245 = vunpack.c.l.b16 %v721
        %v2246 = vunpack.c.h.b16 %v721
        %v2247 = vunpack.c.l.b16 %v722
        %v2248 = vunpack.c.h.b16 %v722
        %v2249 = vunpack.c.l.b16 %v723
        %v2250 = vunpack.c.h.b16 %v723
        %v2251 = vunpack.c.l.b16 %v724
        %v2252 = vunpack.c.h.b16 %v724
        %v2253 = vunpack.c.l.b16 %v725
        %v2254 = vunpack.c.h.b16 %v725
        %v2255 = vunpack.c.l.b16 %v726
        %v2256 = vunpack.c.h.b16 %v726
        %v2257 = vunpack.c.l.b16 %v727
        %v2258 = vunpack.c.h.b16 %v727
        %v2259 = vunpack.c.l.b16 %v728
        %v2260 = vunpack.c.h.b16 %v728
        %v2261 = vunpack.c.l.b16 %v729
        %v2262 = vunpack.c.h.b16 %v729
        %v2263 = vunpack.c.l.b16 %v730
        %v2264 = vunpack.c.h.b16 %v730
        %v2265 = vunpack.c.l.b16 %v731
        %v2266 = vunpack.c.h.b16 %v731
        %v2267 = vunpack.c.l.b16 %v732
        %v2268 = vunpack.c.h.b16 %v732
        %v2269 = vunpack.c.l.b16 %v733
        %v2270 = vunpack.c.h.b16 %v733
        %v2271 = vunpack.c.l.b16 %v734
        %v2272 = vunpack.c.h.b16 %v734
        %v2273 = vunpack.c.l.b16 %v735
        %v2274 = vunpack.c.h.b16 %v735
        %v2275 = vunpack.c.l.b16 %v736
        %v2276 = vunpack.c.h.b16 %v736
        %v2277 = vunpack.c.l.b16 %v737
        %v2278 = vunpack.c.h.b16 %v737
        %v2279 = vunpack.c.l.b16 %v738
        %v2280 = vunpack.c.h.b16 %v738
        %v2281 = vunpack.c.l.b16 %v739
        %v2282 = vunpack.c.h.b16 %v739
        %v2283 = vunpack.c.l.b16 %v740
        %v2284 = vunpack.c.h.b16 %v740
        %v2285 = vunpack.c.l.b16 %v741
        %v2286 = vunpack.c.h.b16 %v741
        %v2287 = vunpack.c.l.b16 %v742
        %v2288 = vunpack.c.h.b16 %v742
        %v2289 = vunpack.c.l.b16 %v743
        %v2290 = vunpack.c.h.b16 %v743
        %v2291 = vunpack.c.l.b16 %v744
        %v2292 = vunpack.c.h.b16 %v744
        %v2293 = vunpack.c.l.b16 %v745
        %v2294 = vunpack.c.h.b16 %v745
        %v2295 = vunpack.c.l.b16 %v746
        %v2296 = vunpack.c.h.b16 %v746
        %v2297 = vunpack.c.l.b16 %v747
        %v2298 = vunpack.c.h.b16 %v747
        %v2299 = vunpack.c.l.b16 %v748
        %v2300 = vunpack.c.h.b16 %v748
        %v2301 = vunpack.c.l.b16 %v749
        %v2302 = vunpack.c.h.b16 %v749
        %v2303 = vunpack.c.l.b16 %v750
        %v2304 = vunpack.c.h.b16 %v750
        %v2305 = vunpack.c.l.b16 %v751
        %v2306 = vunpack.c.h.b16 %v751
        %v2307 = vunpack.c.l.b16 %v752
        %v2308 = vunpack.c.h.b16 %v752
        %v2309 = vunpack.c.l.b16 %v753
        %v2310 = vunpack.c.h.b16 %v753
        %v2311 = vunpack.c.l.b16 %v754
        %v2312 = vunpack.c.h.b16 %v754
        %v2313 = vunpack.c.l.b16 %v755
        %v2314 = vunpack.c.h.b16 %v755
        %v2315 = vunpack.c.l.b16 %v756
        %v2316 = vunpack.c.h.b16 %v756
        %v2317 = vunpack.c.l.b16 %v757
        %v2318 = vunpack.c.h.b16 %v757
        %v2319 = vunpack.c.l.b16 %v758
        %v2320 = vunpack.c.h.b16 %v758
        %v2321 = vunpack.c.l.b16 %v759
        %v2322 = vunpack.c.h.b16 %v759
        %v2323 = vunpack.c.l.b16 %v760
        %v2324 = vunpack.c.h.b16 %v760
        %v2325 = vunpack.c.l.b16 %v761
        %v2326 = vunpack.c.h.b16 %v761
        %v2327 = vunpack.c.l.b16 %v762
        %v2328 = vunpack.c.h.b16 %v762
        %v2329 = vunpack.c.l.b16 %v763
        %v2330 = vunpack.c.h.b16 %v763
        %v2331 = vunpack.c.l.b16 %v764
        %v2332 = vunpack.c.h.b16 %v764
        %v2333 = vunpack.c.l.b16 %v765
        %v2334 = vunpack.c.h.b16 %v765
        %v2335 = vunpack.c.l.b16 %v766
        %v2336 = vunpack.c.h.b16 %v766
        %v2337 = vunpack.c.l.b16 %v767
        %v2338 = vunpack.c.h.b16 %v767
        %v2339 = vunpack.c.l.b16 %v768
        %v2340 = vunpack.c.h.b16 %v768
        %v2341 = vunpack.c.l.b16 %v769
        %v2342 = vunpack.c.h.b16 %v769
        %v2343 = vunpack.c.l.b16 %v770
        %v2344 = vunpack.c.h.b16 %v770
        %v2345 = vunpack.c.l.b16 %v771
        %v2346 = vunpack.c.h.b16 %v771
        %v2347 = vunpack.c.l.b16 %v772
        %v2348 = vunpack.c.h.b16 %v772
        %v2349 = vunpack.c.l.b16 %v773
        %v2350 = vunpack.c.h.b16 %v773
        %v2351 = vunpack.c.l.b16 %v774
        %v2352 = vunpack.c.h.b16 %v774
        %v2353 = vunpack.c.l.b16 %v775
        %v2354 = vunpack.c.h.b16 %v775
        %v2355 = vunpack.c.l.b16 %v776
        %v2356 = vunpack.c.h.b16 %v776
        %v2357 = vunpack.c.l.b16 %v777
        %v2358 = vunpack.c.h.b16 %v777
        %v2359 = vunpack.c.l.b16 %v778
        %v2360 = vunpack.c.h.b16 %v778
        %v2361 = vunpack.c.l.b16 %v779
        %v2362 = vunpack.c.h.b16 %v779
        %v2363 = vunpack.c.l.b16 %v780
        %v2364 = vunpack.c.h.b16 %v780
        %v2365 = vunpack.c.l.b16 %v781
        %v2366 = vunpack.c.h.b16 %v781
        %v2367 = vunpack.c.l.b16 %v782
        %v2368 = vunpack.c.h.b16 %v782
        %v2369 = vpack.c.b16 %v1353, %v1345
        %v2370 = vpack.c.b16 %v1354, %v1346
        %v2371 = vpack.c.b16 %v1355, %v1347
        %v2372 = vpack.c.b16 %v1356, %v1348
        %v2373 = vpack.c.b16 %v1357, %v1349
        %v2374 = vpack.c.b16 %v1358, %v1350
        %v2375 = vpack.c.b16 %v1359, %v1351
        %v2376 = vpack.c.b16 %v1360, %v1352
        %v2377 = vpack.c.b16 %v1369, %v1361
        %v2378 = vpack.c.b16 %v1370, %v1362
        %v2379 = vpack.c.b16 %v1371, %v1363
        %v2380 = vpack.c.b16 %v1372, %v1364
        %v2381 = vpack.c.b16 %v1373, %v1365
        %v2382 = vpack.c.b16 %v1374, %v1366
        %v2383 = vpack.c.b16 %v1375, %v1367
        %v2384 = vpack.c.b16 %v1376, %v1368
        %v2385 = vpack.c.b16 %v1385, %v1377
        %v2386 = vpack.c.b16 %v1386, %v1378
        %v2387 = vpack.c.b16 %v1387, %v1379
        %v2388 = vpack.c.b16 %v1388, %v1380
        %v2389 = vpack.c.b16 %v1389, %v1381
        %v2390 = vpack.c.b16 %v1390, %v1382
        %v2391 = vpack.c.b16 %v1391, %v1383
        %v2392 = vpack.c.b16 %v1392, %v1384
        %v2393 = vpack.c.b16 %v1401, %v1393
        %v2394 = vpack.c.b16 %v1402, %v1394
        %v2395 = vpack.c.b16 %v1403, %v1395
        %v2396 = vpack.c.b16 %v1404, %v1396
        %v2397 = vpack.c.b16 %v1405, %v1397
        %v2398 = vpack.c.b16 %v1406, %v1398
        %v2399 = vpack.c.b16 %v1407, %v1399
        %v2400 = vpack.c.b16 %v1408, %v1400
        %v2401 = vpack.c.b16 %v1417, %v1409
        %v2402 = vpack.c.b16 %v1418, %v1410
        %v2403 = vpack.c.b16 %v1419, %v1411
        %v2404 = vpack.c.b16 %v1420, %v1412
        %v2405 = vpack.c.b16 %v1421, %v1413
        %v2406 = vpack.c.b16 %v1422, %v1414
        %v2407 = vpack.c.b16 %v1423, %v1415
        %v2408 = vpack.c.b16 %v1424, %v1416
        %v2409 = vpack.c.b16 %v1433, %v1425
        %v2410 = vpack.c.b16 %v1434, %v1426
        %v2411 = vpack.c.b16 %v1435, %v1427
        %v2412 = vpack.c.b16 %v1436, %v1428
        %v2413 = vpack.c.b16 %v1437, %v1429
        %v2414 = vpack.c.b16 %v1438, %v1430
        %v2415 = vpack.c.b16 %v1439, %v1431
        %v2416 = vpack.c.b16 %v1440, %v1432
        %v2417 = vpack.c.b16 %v1449, %v1441
        %v2418 = vpack.c.b16 %v1450, %v1442
        %v2419 = vpack.c.b16 %v1451, %v1443
        %v2420 = vpack.c.b16 %v1452, %v1444
        %v2421 = vpack.c.b16 %v1453, %v1445
        %v2422 = vpack.c.b16 %v1454, %v1446
        %v2423 = vpack.c.b16 %v1455, %v1447
        %v2424 = vpack.c.b16 %v1456, %v1448
        %v2425 = vpack.c.b16 %v1465, %v1457
        %v2426 = vpack.c.b16 %v1466, %v1458
        %v2427 = vpack.c.b16 %v1467, %v1459
        %v2428 = vpack.c.b16 %v1468, %v1460
        %v2429 = vpack.c.b16 %v1469, %v1461
        %v2430 = vpack.c.b16 %v1470, %v1462
        %v2431 = vpack.c.b16 %v1471, %v1463
        %v2432 = vpack.c.b16 %v1472, %v1464
        %v2433 = vpack.c.b16 %v1481, %v1473
        %v2434 = vpack.c.b16 %v1482, %v1474
        %v2435 = vpack.c.b16 %v1483, %v1475
        %v2436 = vpack.c.b16 %v1484, %v1476
        %v2437 = vpack.c.b16 %v1485, %v1477
        %v2438 = vpack.c.b16 %v1486, %v1478
        %v2439 = vpack.c.b16 %v1487, %v1479
        %v2440 = vpack.c.b16 %v1488, %v1480
        %v2441 = vpack.c.b16 %v1497, %v1489
        %v2442 = vpack.c.b16 %v1498, %v1490
        %v2443 = vpack.c.b16 %v1499, %v1491
        %v2444 = vpack.c.b16 %v1500, %v1492
        %v2445 = vpack.c.b16 %v1501, %v1493
        %v2446 = vpack.c.b16 %v1502, %v1494
        %v2447 = vpack.c.b16 %v1503, %v1495
        %v2448 = vpack.c.b16 %v1504, %v1496
        %v2449 = vpack.c.b16 %v1513, %v1505
        %v2450 = vpack.c.b16 %v1514, %v1506
        %v2451 = vpack.c.b16 %v1515, %v1507
        %v2452 = vpack.c.b16 %v1516, %v1508
        %v2453 = vpack.c.b16 %v1517, %v1509
        %v2454 = vpack.c.b16 %v1518, %v1510
        %v2455 = vpack.c.b16 %v1519, %v1511
        %v2456 = vpack.c.b16 %v1520, %v1512
        %v2457 = vpack.c.b16 %v1529, %v1521
        %v2458 = vpack.c.b16 %v1530, %v1522
        %v2459 = vpack.c.b16 %v1531, %v1523
        %v2460 = vpack.c.b16 %v1532, %v1524
        %v2461 = vpack.c.b16 %v1533, %v1525
        %v2462 = vpack.c.b16 %v1534, %v1526
        %v2463 = vpack.c.b16 %v1535, %v1527
        %v2464 = vpack.c.b16 %v1536, %v1528
        %v2465 = vpack.c.b16 %v1545, %v1537
        %v2466 = vpack.c.b16 %v1546, %v1538
        %v2467 = vpack.c.b16 %v1547, %v1539
        %v2468 = vpack.c.b16 %v1548, %v1540
        %v2469 = vpack.c.b16 %v1549, %v1541
        %v2470 = vpack.c.b16 %v1550, %v1542
        %v2471 = vpack.c.b16 %v1551, %v1543
        %v2472 = vpack.c.b16 %v1552, %v1544
        %v2473 = vpack.c.b16 %v1561, %v1553
        %v2474 = vpack.c.b16 %v1562, %v1554
        %v2475 = vpack.c.b16 %v1563, %v1555
        %v2476 = vpack.c.b16 %v1564, %v1556
        %v2477 = vpack.c.b16 %v1565, %v1557
        %v2478 = vpack.c.b16 %v1566, %v1558
        %v2479 = vpack.c.b16 %v1567, %v1559
        %v2480 = vpack.c.b16 %v1568, %v1560
        %v2481 = vpack.c.b16 %v1577, %v1569
        %v2482 = vpack.c.b16 %v1578, %v1570
        %v2483 = vpack.c.b16 %v1579, %v1571
        %v2484 = vpack.c.b16 %v1580, %v1572
        %v2485 = vpack.c.b16 %v1581, %v1573
        %v2486 = vpack.c.b16 %v1582, %v1574
        %v2487 = vpack.c.b16 %v1583, %v1575
        %v2488 = vpack.c.b16 %v1584, %v1576
        %v2489 = vpack.c.b16 %v1593, %v1585
        %v2490 = vpack.c.b16 %v1594, %v1586
        %v2491 = vpack.c.b16 %v1595, %v1587
        %v2492 = vpack.c.b16 %v1596, %v1588
        %v2493 = vpack.c.b16 %v1597, %v1589
        %v2494 = vpack.c.b16 %v1598, %v1590
        %v2495 = vpack.c.b16 %v1599, %v1591
        %v2496 = vpack.c.b16 %v1600, %v1592
        %v2497 = vpack.c.b16 %v1609, %v1601
        %v2498 = vpack.c.b16 %v1610, %v1602
        %v2499 = vpack.c.b16 %v1611, %v1603
        %v2500 = vpack.c.b16 %v1612, %v1604
        %v2501 = vpack.c.b16 %v1613, %v1605
        %v2502 = vpack.c.b16 %v1614, %v1606
        %v2503 = vpack.c.b16 %v1615, %v1607
        %v2504 = vpack.c.b16 %v1616, %v1608
        %v2505 = vpack.c.b16 %v1625, %v1617
        %v2506 = vpack.c.b16 %v1626, %v1618
        %v2507 = vpack.c.b16 %v1627, %v1619
        %v2508 = vpack.c.b16 %v1628, %v1620
        %v2509 = vpack.c.b16 %v1629, %v1621
        %v2510 = vpack.c.b16 %v1630, %v1622
        %v2511 = vpack.c.b16 %v1631, %v1623
        %v2512 = vpack.c.b16 %v1632, %v1624
        %v2513 = vpack.c.b16 %v1641, %v1633
        %v2514 = vpack.c.b16 %v1642, %v1634
        %v2515 = vpack.c.b16 %v1643, %v1635
        %v2516 = vpack.c.b16 %v1644, %v1636
        %v2517 = vpack.c.b16 %v1645, %v1637
        %v2518 = vpack.c.b16 %v1646, %v1638
        %v2519 = vpack.c.b16 %v1647, %v1639
        %v2520 = vpack.c.b16 %v1648, %v1640
        %v2521 = vpack.c.b16 %v1657, %v1649
        %v2522 = vpack.c.b16 %v1658, %v1650
        %v2523 = vpack.c.b16 %v1659, %v1651
        %v2524 = vpack.c.b16 %v1660, %v1652
        %v2525 = vpack.c.b16 %v1661, %v1653
        %v2526 = vpack.c.b16 %v1662, %v1654
        %v2527 = vpack.c.b16 %v1663, %v1655
        %v2528 = vpack.c.b16 %v1664, %v1656
        %v2529 = vpack.c.b16 %v1673, %v1665
        %v2530 = vpack.c.b16 %v1674, %v1666
        %v2531 = vpack.c.b16 %v1675, %v1667
        %v2532 = vpack.c.b16 %v1676, %v1668
        %v2533 = vpack.c.b16 %v1677, %v1669
        %v2534 = vpack.c.b16 %v1678, %v1670
        %v2535 = vpack.c.b16 %v1679, %v1671
        %v2536 = vpack.c.b16 %v1680, %v1672
        %v2537 = vpack.c.b16 %v1689, %v1681
        %v2538 = vpack.c.b16 %v1690, %v1682
        %v2539 = vpack.c.b16 %v1691, %v1683
        %v2540 = vpack.c.b16 %v1692, %v1684
        %v2541 = vpack.c.b16 %v1693, %v1685
        %v2542 = vpack.c.b16 %v1694, %v1686
        %v2543 = vpack.c.b16 %v1695, %v1687
        %v2544 = vpack.c.b16 %v1696, %v1688
        %v2545 = vpack.c.b16 %v1705, %v1697
        %v2546 = vpack.c.b16 %v1706, %v1698
        %v2547 = vpack.c.b16 %v1707, %v1699
        %v2548 = vpack.c.b16 %v1708, %v1700
        %v2549 = vpack.c.b16 %v1709, %v1701
        %v2550 = vpack.c.b16 %v1710, %v1702
        %v2551 = vpack.c.b16 %v1711, %v1703
        %v2552 = vpack.c.b16 %v1712, %v1704
        %v2553 = vpack.c.b16 %v1721, %v1713
        %v2554 = vpack.c.b16 %v1722, %v1714
        %v2555 = vpack.c.b16 %v1723, %v1715
        %v2556 = vpack.c.b16 %v1724, %v1716
        %v2557 = vpack.c.b16 %v1725, %v1717
        %v2558 = vpack.c.b16 %v1726, %v1718
        %v2559 = vpack.c.b16 %v1727, %v1719
        %v2560 = vpack.c.b16 %v1728, %v1720
        %v2561 = vpack.c.b16 %v1737, %v1729
        %v2562 = vpack.c.b16 %v1738, %v1730
        %v2563 = vpack.c.b16 %v1739, %v1731
        %v2564 = vpack.c.b16 %v1740, %v1732
        %v2565 = vpack.c.b16 %v1741, %v1733
        %v2566 = vpack.c.b16 %v1742, %v1734
        %v2567 = vpack.c.b16 %v1743, %v1735
        %v2568 = vpack.c.b16 %v1744, %v1736
        %v2569 = vpack.c.b16 %v1753, %v1745
        %v2570 = vpack.c.b16 %v1754, %v1746
        %v2571 = vpack.c.b16 %v1755, %v1747
        %v2572 = vpack.c.b16 %v1756, %v1748
        %v2573 = vpack.c.b16 %v1757, %v1749
        %v2574 = vpack.c.b16 %v1758, %v1750
        %v2575 = vpack.c.b16 %v1759, %v1751
        %v2576 = vpack.c.b16 %v1760, %v1752
        %v2577 = vpack.c.b16 %v1769, %v1761
        %v2578 = vpack.c.b16 %v1770, %v1762
        %v2579 = vpack.c.b16 %v1771, %v1763
        %v2580 = vpack.c.b16 %v1772, %v1764
        %v2581 = vpack.c.b16 %v1773, %v1765
        %v2582 = vpack.c.b16 %v1774, %v1766
        %v2583 = vpack.c.b16 %v1775, %v1767
        %v2584 = vpack.c.b16 %v1776, %v1768
        %v2585 = vpack.c.b16 %v1785, %v1777
        %v2586 = vpack.c.b16 %v1786, %v1778
        %v2587 = vpack.c.b16 %v1787, %v1779
        %v2588 = vpack.c.b16 %v1788, %v1780
        %v2589 = vpack.c.b16 %v1789, %v1781
        %v2590 = vpack.c.b16 %v1790, %v1782
        %v2591 = vpack.c.b16 %v1791, %v1783
        %v2592 = vpack.c.b16 %v1792, %v1784
        %v2593 = vpack.c.b16 %v1801, %v1793
        %v2594 = vpack.c.b16 %v1802, %v1794
        %v2595 = vpack.c.b16 %v1803, %v1795
        %v2596 = vpack.c.b16 %v1804, %v1796
        %v2597 = vpack.c.b16 %v1805, %v1797
        %v2598 = vpack.c.b16 %v1806, %v1798
        %v2599 = vpack.c.b16 %v1807, %v1799
        %v2600 = vpack.c.b16 %v1808, %v1800
        %v2601 = vpack.c.b16 %v1817, %v1809
        %v2602 = vpack.c.b16 %v1818, %v1810
        %v2603 = vpack.c.b16 %v1819, %v1811
        %v2604 = vpack.c.b16 %v1820, %v1812
        %v2605 = vpack.c.b16 %v1821, %v1813
        %v2606 = vpack.c.b16 %v1822, %v1814
        %v2607 = vpack.c.b16 %v1823, %v1815
        %v2608 = vpack.c.b16 %v1824, %v1816
        %v2609 = vpack.c.b16 %v1833, %v1825
        %v2610 = vpack.c.b16 %v1834, %v1826
        %v2611 = vpack.c.b16 %v1835, %v1827
        %v2612 = vpack.c.b16 %v1836, %v1828
        %v2613 = vpack.c.b16 %v1837, %v1829
        %v2614 = vpack.c.b16 %v1838, %v1830
        %v2615 = vpack.c.b16 %v1839, %v1831
        %v2616 = vpack.c.b16 %v1840, %v1832
        %v2617 = vpack.c.b16 %v1849, %v1841
        %v2618 = vpack.c.b16 %v1850, %v1842
        %v2619 = vpack.c.b16 %v1851, %v1843
        %v2620 = vpack.c.b16 %v1852, %v1844
        %v2621 = vpack.c.b16 %v1853, %v1845
        %v2622 = vpack.c.b16 %v1854, %v1846
        %v2623 = vpack.c.b16 %v1855, %v1847
        %v2624 = vpack.c.b16 %v1856, %v1848
        %v2625 = vpack.c.b16 %v1865, %v1857
        %v2626 = vpack.c.b16 %v1866, %v1858
        %v2627 = vpack.c.b16 %v1867, %v1859
        %v2628 = vpack.c.b16 %v1868, %v1860
        %v2629 = vpack.c.b16 %v1869, %v1861
        %v2630 = vpack.c.b16 %v1870, %v1862
        %v2631 = vpack.c.b16 %v1871, %v1863
        %v2632 = vpack.c.b16 %v1872, %v1864
        %v2633 = vpack.c.b16 %v1881, %v1873
        %v2634 = vpack.c.b16 %v1882, %v1874
        %v2635 = vpack.c.b16 %v1883, %v1875
        %v2636 = vpack.c.b16 %v1884, %v1876
        %v2637 = vpack.c.b16 %v1885, %v1877
        %v2638 = vpack.c.b16 %v1886, %v1878
        %v2639 = vpack.c.b16 %v1887, %v1879
        %v2640 = vpack.c.b16 %v1888, %v1880
        %v2641 = vpack.c.b16 %v1897, %v1889
        %v2642 = vpack.c.b16 %v1898, %v1890
        %v2643 = vpack.c.b16 %v1899, %v1891
        %v2644 = vpack.c.b16 %v1900, %v1892
        %v2645 = vpack.c.b16 %v1901, %v1893
        %v2646 = vpack.c.b16 %v1902, %v1894
        %v2647 = vpack.c.b16 %v1903, %v1895
        %v2648 = vpack.c.b16 %v1904, %v1896
        %v2649 = vpack.c.b16 %v1913, %v1905
        %v2650 = vpack.c.b16 %v1914, %v1906
        %v2651 = vpack.c.b16 %v1915, %v1907
        %v2652 = vpack.c.b16 %v1916, %v1908
        %v2653 = vpack.c.b16 %v1917, %v1909
        %v2654 = vpack.c.b16 %v1918, %v1910
        %v2655 = vpack.c.b16 %v1919, %v1911
        %v2656 = vpack.c.b16 %v1920, %v1912
        %v2657 = vpack.c.b16 %v1929, %v1921
        %v2658 = vpack.c.b16 %v1930, %v1922
        %v2659 = vpack.c.b16 %v1931, %v1923
        %v2660 = vpack.c.b16 %v1932, %v1924
        %v2661 = vpack.c.b16 %v1933, %v1925
        %v2662 = vpack.c.b16 %v1934, %v1926
        %v2663 = vpack.c.b16 %v1935, %v1927
        %v2664 = vpack.c.b16 %v1936, %v1928
        %v2665 = vpack.c.b16 %v1945, %v1937
        %v2666 = vpack.c.b16 %v1946, %v1938
        %v2667 = vpack.c.b16 %v1947, %v1939
        %v2668 = vpack.c.b16 %v1948, %v1940
        %v2669 = vpack.c.b16 %v1949, %v1941
        %v2670 = vpack.c.b16 %v1950, %v1942
        %v2671 = vpack.c.b16 %v1951, %v1943
        %v2672 = vpack.c.b16 %v1952, %v1944
        %v2673 = vpack.c.b16 %v1961, %v1953
        %v2674 = vpack.c.b16 %v1962, %v1954
        %v2675 = vpack.c.b16 %v1963, %v1955
        %v2676 = vpack.c.b16 %v1964, %v1956
        %v2677 = vpack.c.b16 %v1965, %v1957
        %v2678 = vpack.c.b16 %v1966, %v1958
        %v2679 = vpack.c.b16 %v1967, %v1959
        %v2680 = vpack.c.b16 %v1968, %v1960
        %v2681 = vpack.c.b16 %v1977, %v1969
        %v2682 = vpack.c.b16 %v1978, %v1970
        %v2683 = vpack.c.b16 %v1979, %v1971
        %v2684 = vpack.c.b16 %v1980, %v1972
        %v2685 = vpack.c.b16 %v1981, %v1973
        %v2686 = vpack.c.b16 %v1982, %v1974
        %v2687 = vpack.c.b16 %v1983, %v1975
        %v2688 = vpack.c.b16 %v1984, %v1976
        %v2689 = vpack.c.b16 %v1993, %v1985
        %v2690 = vpack.c.b16 %v1994, %v1986
        %v2691 = vpack.c.b16 %v1995, %v1987
        %v2692 = vpack.c.b16 %v1996, %v1988
        %v2693 = vpack.c.b16 %v1997, %v1989
        %v2694 = vpack.c.b16 %v1998, %v1990
        %v2695 = vpack.c.b16 %v1999, %v1991
        %v2696 = vpack.c.b16 %v2000, %v1992
        %v2697 = vpack.c.b16 %v2009, %v2001
        %v2698 = vpack.c.b16 %v2010, %v2002
        %v2699 = vpack.c.b16 %v2011, %v2003
        %v2700 = vpack.c.b16 %v2012, %v2004
        %v2701 = vpack.c.b16 %v2013, %v2005
        %v2702 = vpack.c.b16 %v2014, %v2006
        %v2703 = vpack.c.b16 %v2015, %v2007
        %v2704 = vpack.c.b16 %v2016, %v2008
        %v2705 = vpack.c.b16 %v2025, %v2017
        %v2706 = vpack.c.b16 %v2026, %v2018
        %v2707 = vpack.c.b16 %v2027, %v2019
        %v2708 = vpack.c.b16 %v2028, %v2020
        %v2709 = vpack.c.b16 %v2029, %v2021
        %v2710 = vpack.c.b16 %v2030, %v2022
        %v2711 = vpack.c.b16 %v2031, %v2023
        %v2712 = vpack.c.b16 %v2032, %v2024
        %v2713 = vpack.c.b16 %v2041, %v2033
        %v2714 = vpack.c.b16 %v2042, %v2034
        %v2715 = vpack.c.b16 %v2043, %v2035
        %v2716 = vpack.c.b16 %v2044, %v2036
        %v2717 = vpack.c.b16 %v2045, %v2037
        %v2718 = vpack.c.b16 %v2046, %v2038
        %v2719 = vpack.c.b16 %v2047, %v2039
        %v2720 = vpack.c.b16 %v2048, %v2040
        %v2721 = vpack.c.b16 %v2057, %v2049
        %v2722 = vpack.c.b16 %v2058, %v2050
        %v2723 = vpack.c.b16 %v2059, %v2051
        %v2724 = vpack.c.b16 %v2060, %v2052
        %v2725 = vpack.c.b16 %v2061, %v2053
        %v2726 = vpack.c.b16 %v2062, %v2054
        %v2727 = vpack.c.b16 %v2063, %v2055
        %v2728 = vpack.c.b16 %v2064, %v2056
        %v2729 = vpack.c.b16 %v2073, %v2065
        %v2730 = vpack.c.b16 %v2074, %v2066
        %v2731 = vpack.c.b16 %v2075, %v2067
        %v2732 = vpack.c.b16 %v2076, %v2068
        %v2733 = vpack.c.b16 %v2077, %v2069
        %v2734 = vpack.c.b16 %v2078, %v2070
        %v2735 = vpack.c.b16 %v2079, %v2071
        %v2736 = vpack.c.b16 %v2080, %v2072
        %v2737 = vpack.c.b16 %v2089, %v2081
        %v2738 = vpack.c.b16 %v2090, %v2082
        %v2739 = vpack.c.b16 %v2091, %v2083
        %v2740 = vpack.c.b16 %v2092, %v2084
        %v2741 = vpack.c.b16 %v2093, %v2085
        %v2742 = vpack.c.b16 %v2094, %v2086
        %v2743 = vpack.c.b16 %v2095, %v2087
        %v2744 = vpack.c.b16 %v2096, %v2088
        %v2745 = vpack.c.b16 %v2105, %v2097
        %v2746 = vpack.c.b16 %v2106, %v2098
        %v2747 = vpack.c.b16 %v2107, %v2099
        %v2748 = vpack.c.b16 %v2108, %v2100
        %v2749 = vpack.c.b16 %v2109, %v2101
        %v2750 = vpack.c.b16 %v2110, %v2102
        %v2751 = vpack.c.b16 %v2111, %v2103
        %v2752 = vpack.c.b16 %v2112, %v2104
        %v2753 = vpack.c.b16 %v2121, %v2113
        %v2754 = vpack.c.b16 %v2122, %v2114
        %v2755 = vpack.c.b16 %v2123, %v2115
        %v2756 = vpack.c.b16 %v2124, %v2116
        %v2757 = vpack.c.b16 %v2125, %v2117
        %v2758 = vpack.c.b16 %v2126, %v2118
        %v2759 = vpack.c.b16 %v2127, %v2119
        %v2760 = vpack.c.b16 %v2128, %v2120
        %v2761 = vpack.c.b16 %v2137, %v2129
        %v2762 = vpack.c.b16 %v2138, %v2130
        %v2763 = vpack.c.b16 %v2139, %v2131
        %v2764 = vpack.c.b16 %v2140, %v2132
        %v2765 = vpack.c.b16 %v2141, %v2133
        %v2766 = vpack.c.b16 %v2142, %v2134
        %v2767 = vpack.c.b16 %v2143, %v2135
        %v2768 = vpack.c.b16 %v2144, %v2136
        %v2769 = vpack.c.b16 %v2153, %v2145
        %v2770 = vpack.c.b16 %v2154, %v2146
        %v2771 = vpack.c.b16 %v2155, %v2147
        %v2772 = vpack.c.b16 %v2156, %v2148
        %v2773 = vpack.c.b16 %v2157, %v2149
        %v2774 = vpack.c.b16 %v2158, %v2150
        %v2775 = vpack.c.b16 %v2159, %v2151
        %v2776 = vpack.c.b16 %v2160, %v2152
        %v2777 = vpack.c.b16 %v2169, %v2161
        %v2778 = vpack.c.b16 %v2170, %v2162
        %v2779 = vpack.c.b16 %v2171, %v2163
        %v2780 = vpack.c.b16 %v2172, %v2164
        %v2781 = vpack.c.b16 %v2173, %v2165
        %v2782 = vpack.c.b16 %v2174, %v2166
        %v2783 = vpack.c.b16 %v2175, %v2167
        %v2784 = vpack.c.b16 %v2176, %v2168
        %v2785 = vpack.c.b16 %v2185, %v2177
        %v2786 = vpack.c.b16 %v2186, %v2178
        %v2787 = vpack.c.b16 %v2187, %v2179
        %v2788 = vpack.c.b16 %v2188, %v2180
        %v2789 = vpack.c.b16 %v2189, %v2181
        %v2790 = vpack.c.b16 %v2190, %v2182
        %v2791 = vpack.c.b16 %v2191, %v2183
        %v2792 = vpack.c.b16 %v2192, %v2184
        %v2793 = vpack.c.b16 %v2201, %v2193
        %v2794 = vpack.c.b16 %v2202, %v2194
        %v2795 = vpack.c.b16 %v2203, %v2195
        %v2796 = vpack.c.b16 %v2204, %v2196
        %v2797 = vpack.c.b16 %v2205, %v2197
        %v2798 = vpack.c.b16 %v2206, %v2198
        %v2799 = vpack.c.b16 %v2207, %v2199
        %v2800 = vpack.c.b16 %v2208, %v2200
        %v2801 = vpack.c.b16 %v2217, %v2209
        %v2802 = vpack.c.b16 %v2218, %v2210
        %v2803 = vpack.c.b16 %v2219, %v2211
        %v2804 = vpack.c.b16 %v2220, %v2212
        %v2805 = vpack.c.b16 %v2221, %v2213
        %v2806 = vpack.c.b16 %v2222, %v2214
        %v2807 = vpack.c.b16 %v2223, %v2215
        %v2808 = vpack.c.b16 %v2224, %v2216
        %v2809 = vpack.c.b16 %v2233, %v2225
        %v2810 = vpack.c.b16 %v2234, %v2226
        %v2811 = vpack.c.b16 %v2235, %v2227
        %v2812 = vpack.c.b16 %v2236, %v2228
        %v2813 = vpack.c.b16 %v2237, %v2229
        %v2814 = vpack.c.b16 %v2238, %v2230
        %v2815 = vpack.c.b16 %v2239, %v2231
        %v2816 = vpack.c.b16 %v2240, %v2232
        %v2817 = vpack.c.b16 %v2249, %v2241
        %v2818 = vpack.c.b16 %v2250, %v2242
        %v2819 = vpack.c.b16 %v2251, %v2243
        %v2820 = vpack.c.b16 %v2252, %v2244
        %v2821 = vpack.c.b16 %v2253, %v2245
        %v2822 = vpack.c.b16 %v2254, %v2246
        %v2823 = vpack.c.b16 %v2255, %v2247
        %v2824 = vpack.c.b16 %v2256, %v2248
        %v2825 = vpack.c.b16 %v2265, %v2257
        %v2826 = vpack.c.b16 %v2266, %v2258
        %v2827 = vpack.c.b16 %v2267, %v2259
        %v2828 = vpack.c.b16 %v2268, %v2260
        %v2829 = vpack.c.b16 %v2269, %v2261
        %v2830 = vpack.c.b16 %v2270, %v2262
        %v2831 = vpack.c.b16 %v2271, %v2263
        %v2832 = vpack.c.b16 %v2272, %v2264
        %v2833 = vpack.c.b16 %v2281, %v2273
        %v2834 = vpack.c.b16 %v2282, %v2274
        %v2835 = vpack.c.b16 %v2283, %v2275
        %v2836 = vpack.c.b16 %v2284, %v2276
        %v2837 = vpack.c.b16 %v2285, %v2277
        %v2838 = vpack.c.b16 %v2286, %v2278
        %v2839 = vpack.c.b16 %v2287, %v2279
        %v2840 = vpack.c.b16 %v2288, %v2280
        %v2841 = vpack.c.b16 %v2297, %v2289
        %v2842 = vpack.c.b16 %v2298, %v2290
        %v2843 = vpack.c.b16 %v2299, %v2291
        %v2844 = vpack.c.b16 %v2300, %v2292
        %v2845 = vpack.c.b16 %v2301, %v2293
        %v2846 = vpack.c.b16 %v2302, %v2294
        %v2847 = vpack.c.b16 %v2303, %v2295
        %v2848 = vpack.c.b16 %v2304, %v2296
        %v2849 = vpack.c.b16 %v2313, %v2305
        %v2850 = vpack.c.b16 %v2314, %v2306
        %v2851 = vpack.c.b16 %v2315, %v2307
        %v2852 = vpack.c.b16 %v2316, %v2308
        %v2853 = vpack.c.b16 %v2317, %v2309
        %v2854 = vpack.c.b16 %v2318, %v2310
        %v2855 = vpack.c.b16 %v2319, %v2311
        %v2856 = vpack.c.b16 %v2320, %v2312
        %v2857 = vpack.c.b16 %v2329, %v2321
        %v2858 = vpack.c.b16 %v2330, %v2322
        %v2859 = vpack.c.b16 %v2331, %v2323
        %v2860 = vpack.c.b16 %v2332, %v2324
        %v2861 = vpack.c.b16 %v2333, %v2325
        %v2862 = vpack.c.b16 %v2334, %v2326
        %v2863 = vpack.c.b16 %v2335, %v2327
        %v2864 = vpack.c.b16 %v2336, %v2328
        %v2865 = vpack.c.b16 %v2345, %v2337
        %v2866 = vpack.c.b16 %v2346, %v2338
        %v2867 = vpack.c.b16 %v2347, %v2339
        %v2868 = vpack.c.b16 %v2348, %v2340
        %v2869 = vpack.c.b16 %v2349, %v2341
        %v2870 = vpack.c.b16 %v2350, %v2342
        %v2871 = vpack.c.b16 %v2351, %v2343
        %v2872 = vpack.c.b16 %v2352, %v2344
        %v2873 = vpack.c.b16 %v2361, %v2353
        %v2874 = vpack.c.b16 %v2362, %v2354
        %v2875 = vpack.c.b16 %v2363, %v2355
        %v2876 = vpack.c.b16 %v2364, %v2356
        %v2877 = vpack.c.b16 %v2365, %v2357
        %v2878 = vpack.c.b16 %v2366, %v2358
        %v2879 = vpack.c.b16 %v2367, %v2359
        %v2880 = vpack.c.b16 %v2368, %v2360
        %3393 = vmatprep.subr.bf16.mxu0 %v2370
        %3394 = vmatpush1.bf16.msra.mxu0 %v2369
        %3395 = vmatprep.subr.bf16.mxu0 %v2378
        %3396 = vmatpush1.bf16.msra.mxu0 %v2377
        %3397 = vmatprep.subr.bf16.mxu0 %v2386
        %3398 = vmatpush1.bf16.msra.mxu0 %v2385
        %3399 = vmatprep.subr.bf16.mxu0 %v2394
        %3400 = vmatpush1.bf16.msra.mxu0 %v2393
        %3401 = vmatprep.subr.bf16.mxu0 %v2402
        %3402 = vmatpush1.bf16.msra.mxu0 %v2401
        %3403 = vmatprep.subr.bf16.mxu0 %v2410
        %3404 = vmatpush1.bf16.msra.mxu0 %v2409
        %3405 = vmatprep.subr.bf16.mxu0 %v2418
        %3406 = vmatpush1.bf16.msra.mxu0 %v2417
        %3407 = vmatprep.subr.bf16.mxu0 %v2426
        %3408 = vmatpush1.bf16.msra.mxu0 %v2425
        %3409 = vmatprep.subr.bf16.mxu0 %v2434
        %3410 = vmatpush1.bf16.msra.mxu0 %v2433
        %3411 = vmatprep.subr.bf16.mxu0 %v2442
        %3412 = vmatpush1.bf16.msra.mxu0 %v2441
        %3413 = vmatprep.subr.bf16.mxu0 %v2450
        %3414 = vmatpush1.bf16.msra.mxu0 %v2449
        %3415 = vmatprep.subr.bf16.mxu0 %v2458
        %3416 = vmatpush1.bf16.msra.mxu0 %v2457
        %3417 = vmatprep.subr.bf16.mxu0 %v2466
        %3418 = vmatpush1.bf16.msra.mxu0 %v2465
        %3419 = vmatprep.subr.bf16.mxu0 %v2474
        %3420 = vmatpush1.bf16.msra.mxu0 %v2473
        %3421 = vmatprep.subr.bf16.mxu0 %v2482
        %3422 = vmatpush1.bf16.msra.mxu0 %v2481
        %3423 = vmatprep.subr.bf16.mxu0 %v2490
        %3424 = vmatpush1.bf16.msra.mxu0 %v2489
        %3425 = vmatprep.mubr.bf16.mxu0 %v784
        %3426 = vmatmul.mubr.bf16.gmra.mrb[0].mxu0 %v783
        %v3427 = vpop.f32.mrb[0].mxu0
        %v3428 = vadd.f32 %v796, %v3427
        %v3429 = vpop.f32.mrb[0].mxu0
        %v3430 = vadd.f32 %v800, %v3429
        %v3431 = vpop.f32.mrb[0].mxu0
        %v3432 = vpop.f32.mrb[0].mxu0
        %3433 = vdwg.mxu0
        %3434 = vmatprep.subr.bf16.mxu0 %v2498
        %3435 = vmatpush1.bf16.msra.mxu0 %v2497
        %3436 = vmatprep.subr.bf16.mxu0 %v2506
        %3437 = vmatpush1.bf16.msra.mxu0 %v2505
        %3438 = vmatprep.subr.bf16.mxu0 %v2514
        %3439 = vmatpush1.bf16.msra.mxu0 %v2513
        %3440 = vmatprep.subr.bf16.mxu0 %v2522
        %3441 = vmatpush1.bf16.msra.mxu0 %v2521
        %3442 = vmatprep.subr.bf16.mxu0 %v2530
        %3443 = vmatpush1.bf16.msra.mxu0 %v2529
        %3444 = vmatprep.subr.bf16.mxu0 %v2538
        %3445 = vmatpush1.bf16.msra.mxu0 %v2537
        %3446 = vmatprep.subr.bf16.mxu0 %v2546
        %3447 = vmatpush1.bf16.msra.mxu0 %v2545
        %3448 = vmatprep.subr.bf16.mxu0 %v2554
        %3449 = vmatpush1.bf16.msra.mxu0 %v2553
        %3450 = vmatprep.subr.bf16.mxu0 %v2562
        %3451 = vmatpush1.bf16.msra.mxu0 %v2561
        %3452 = vmatprep.subr.bf16.mxu0 %v2570
        %3453 = vmatpush1.bf16.msra.mxu0 %v2569
        %3454 = vmatprep.subr.bf16.mxu0 %v2578
        %3455 = vmatpush1.bf16.msra.mxu0 %v2577
        %3456 = vmatprep.subr.bf16.mxu0 %v2586
        %3457 = vmatpush1.bf16.msra.mxu0 %v2585
        %3458 = vmatprep.subr.bf16.mxu0 %v2594
        %3459 = vmatpush1.bf16.msra.mxu0 %v2593
        %3460 = vmatprep.subr.bf16.mxu0 %v2602
        %3461 = vmatpush1.bf16.msra.mxu0 %v2601
        %3462 = vmatprep.subr.bf16.mxu0 %v2610
        %3463 = vmatpush1.bf16.msra.mxu0 %v2609
        %3464 = vmatprep.subr.bf16.mxu0 %v2618
        %3465 = vmatpush1.bf16.msra.mxu0 %v2617
        %3466 = vmatprep.mubr.bf16.mxu0 %v786
        %3467 = vmatmul.mubr.bf16.gmra.mrb[0].mxu0 %v785
        %v3468 = vpop.f32.mrb[0].mxu0
        %v3469 = vadd.f32 %v3428, %v3468
        %v3470 = vpop.f32.mrb[0].mxu0
        %v3471 = vadd.f32 %v3430, %v3470
        %v3472 = vpop.f32.mrb[0].mxu0
        %v3473 = vpop.f32.mrb[0].mxu0
        %3474 = vdwg.mxu0
        %3475 = vmatprep.subr.bf16.mxu0 %v2626
        %3476 = vmatpush1.bf16.msra.mxu0 %v2625
        %3477 = vmatprep.subr.bf16.mxu0 %v2634
        %3478 = vmatpush1.bf16.msra.mxu0 %v2633
        %3479 = vmatprep.subr.bf16.mxu0 %v2642
        %3480 = vmatpush1.bf16.msra.mxu0 %v2641
        %3481 = vmatprep.subr.bf16.mxu0 %v2650
        %3482 = vmatpush1.bf16.msra.mxu0 %v2649
        %3483 = vmatprep.subr.bf16.mxu0 %v2658
        %3484 = vmatpush1.bf16.msra.mxu0 %v2657
        %3485 = vmatprep.subr.bf16.mxu0 %v2666
        %3486 = vmatpush1.bf16.msra.mxu0 %v2665
        %3487 = vmatprep.subr.bf16.mxu0 %v2674
        %3488 = vmatpush1.bf16.msra.mxu0 %v2673
        %3489 = vmatprep.subr.bf16.mxu0 %v2682
        %3490 = vmatpush1.bf16.msra.mxu0 %v2681
        %3491 = vmatprep.subr.bf16.mxu0 %v2690
        %3492 = vmatpush1.bf16.msra.mxu0 %v2689
        %3493 = vmatprep.subr.bf16.mxu0 %v2698
        %3494 = vmatpush1.bf16.msra.mxu0 %v2697
        %3495 = vmatprep.subr.bf16.mxu0 %v2706
        %3496 = vmatpush1.bf16.msra.mxu0 %v2705
        %3497 = vmatprep.subr.bf16.mxu0 %v2714
        %3498 = vmatpush1.bf16.msra.mxu0 %v2713
        %3499 = vmatprep.subr.bf16.mxu0 %v2722
        %3500 = vmatpush1.bf16.msra.mxu0 %v2721
        %3501 = vmatprep.subr.bf16.mxu0 %v2730
        %3502 = vmatpush1.bf16.msra.mxu0 %v2729
        %3503 = vmatprep.subr.bf16.mxu0 %v2738
        %3504 = vmatpush1.bf16.msra.mxu0 %v2737
        %3505 = vmatprep.subr.bf16.mxu0 %v2746
        %3506 = vmatpush1.bf16.msra.mxu0 %v2745
        %3507 = vmatprep.mubr.bf16.mxu0 %v788
        %3508 = vmatmul.mubr.bf16.gmra.mrb[0].mxu0 %v787
        %v3509 = vpop.f32.mrb[0].mxu0
        %v3510 = vadd.f32 %v3469, %v3509
        %v3511 = vpop.f32.mrb[0].mxu0
        %v3512 = vadd.f32 %v3471, %v3511
        %v3513 = vpop.f32.mrb[0].mxu0
        %v3514 = vpop.f32.mrb[0].mxu0
        %3515 = vdwg.mxu0
        %3516 = vmatprep.subr.bf16.mxu0 %v2754
        %3517 = vmatpush1.bf16.msra.mxu0 %v2753
        %3518 = vmatprep.subr.bf16.mxu0 %v2762
        %3519 = vmatpush1.bf16.msra.mxu0 %v2761
        %3520 = vmatprep.subr.bf16.mxu0 %v2770
        %3521 = vmatpush1.bf16.msra.mxu0 %v2769
        %3522 = vmatprep.subr.bf16.mxu0 %v2778
        %3523 = vmatpush1.bf16.msra.mxu0 %v2777
        %3524 = vmatprep.subr.bf16.mxu0 %v2786
        %3525 = vmatpush1.bf16.msra.mxu0 %v2785
        %3526 = vmatprep.subr.bf16.mxu0 %v2794
        %3527 = vmatpush1.bf16.msra.mxu0 %v2793
        %3528 = vmatprep.subr.bf16.mxu0 %v2802
        %3529 = vmatpush1.bf16.msra.mxu0 %v2801
        %3530 = vmatprep.subr.bf16.mxu0 %v2810
        %3531 = vmatpush1.bf16.msra.mxu0 %v2809
        %3532 = vmatprep.subr.bf16.mxu0 %v2818
        %3533 = vmatpush1.bf16.msra.mxu0 %v2817
        %3534 = vmatprep.subr.bf16.mxu0 %v2826
        %3535 = vmatpush1.bf16.msra.mxu0 %v2825
        %3536 = vmatprep.subr.bf16.mxu0 %v2834
        %3537 = vmatpush1.bf16.msra.mxu0 %v2833
        %3538 = vmatprep.subr.bf16.mxu0 %v2842
        %3539 = vmatpush1.bf16.msra.mxu0 %v2841
        %3540 = vmatprep.subr.bf16.mxu0 %v2850
        %3541 = vmatpush1.bf16.msra.mxu0 %v2849
        %3542 = vmatprep.subr.bf16.mxu0 %v2858
        %3543 = vmatpush1.bf16.msra.mxu0 %v2857
        %3544 = vmatprep.subr.bf16.mxu0 %v2866
        %3545 = vmatpush1.bf16.msra.mxu0 %v2865
        %3546 = vmatprep.subr.bf16.mxu0 %v2874
        %3547 = vmatpush1.bf16.msra.mxu0 %v2873
        %3548 = vmatprep.mubr.bf16.mxu0 %v790
        %3549 = vmatmul.mubr.bf16.gmra.mrb[0].mxu0 %v789
        %v3550 = vpop.f32.mrb[0].mxu0
        %v3551 = vadd.f32 %v3510, %v3550
        %v3552 = vpop.f32.mrb[0].mxu0
        %v3553 = vadd.f32 %v3512, %v3552
        %v3554 = vpop.f32.mrb[0].mxu0
        %v3555 = vpop.f32.mrb[0].mxu0
        %3556 = vdwg.mxu0
        %3557 = vmatprep.subr.bf16.mxu0 %v2372
        %3558 = vmatpush1.bf16.msra.mxu0 %v2371
        %3559 = vmatprep.subr.bf16.mxu0 %v2380
        %3560 = vmatpush1.bf16.msra.mxu0 %v2379
        %3561 = vmatprep.subr.bf16.mxu0 %v2388
        %3562 = vmatpush1.bf16.msra.mxu0 %v2387
        %3563 = vmatprep.subr.bf16.mxu0 %v2396
        %3564 = vmatpush1.bf16.msra.mxu0 %v2395
        %3565 = vmatprep.subr.bf16.mxu0 %v2404
        %3566 = vmatpush1.bf16.msra.mxu0 %v2403
        %3567 = vmatprep.subr.bf16.mxu0 %v2412
        %3568 = vmatpush1.bf16.msra.mxu0 %v2411
        %3569 = vmatprep.subr.bf16.mxu0 %v2420
        %3570 = vmatpush1.bf16.msra.mxu0 %v2419
        %3571 = vmatprep.subr.bf16.mxu0 %v2428
        %3572 = vmatpush1.bf16.msra.mxu0 %v2427
        %3573 = vmatprep.subr.bf16.mxu0 %v2436
        %3574 = vmatpush1.bf16.msra.mxu0 %v2435
        %3575 = vmatprep.subr.bf16.mxu0 %v2444
        %3576 = vmatpush1.bf16.msra.mxu0 %v2443
        %3577 = vmatprep.subr.bf16.mxu0 %v2452
        %3578 = vmatpush1.bf16.msra.mxu0 %v2451
        %3579 = vmatprep.subr.bf16.mxu0 %v2460
        %3580 = vmatpush1.bf16.msra.mxu0 %v2459
        %3581 = vmatprep.subr.bf16.mxu0 %v2468
        %3582 = vmatpush1.bf16.msra.mxu0 %v2467
        %3583 = vmatprep.subr.bf16.mxu0 %v2476
        %3584 = vmatpush1.bf16.msra.mxu0 %v2475
        %3585 = vmatprep.subr.bf16.mxu0 %v2484
        %3586 = vmatpush1.bf16.msra.mxu0 %v2483
        %3587 = vmatprep.subr.bf16.mxu0 %v2492
        %3588 = vmatpush1.bf16.msra.mxu0 %v2491
        %3589 = vmatprep.mubr.bf16.mxu0 %v784
        %3590 = vmatmul.mubr.bf16.gmra.mrb[0].mxu0 %v783
        %v3591 = vpop.f32.mrb[0].mxu0
        %v3592 = vadd.f32 %v804, %v3591
        %v3593 = vpop.f32.mrb[0].mxu0
        %v3594 = vadd.f32 %v808, %v3593
        %v3595 = vpop.f32.mrb[0].mxu0
        %v3596 = vpop.f32.mrb[0].mxu0
        %3597 = vdwg.mxu0
        %3598 = vmatprep.subr.bf16.mxu0 %v2500
        %3599 = vmatpush1.bf16.msra.mxu0 %v2499
        %3600 = vmatprep.subr.bf16.mxu0 %v2508
        %3601 = vmatpush1.bf16.msra.mxu0 %v2507
        %3602 = vmatprep.subr.bf16.mxu0 %v2516
        %3603 = vmatpush1.bf16.msra.mxu0 %v2515
        %3604 = vmatprep.subr.bf16.mxu0 %v2524
        %3605 = vmatpush1.bf16.msra.mxu0 %v2523
        %3606 = vmatprep.subr.bf16.mxu0 %v2532
        %3607 = vmatpush1.bf16.msra.mxu0 %v2531
        %3608 = vmatprep.subr.bf16.mxu0 %v2540
        %3609 = vmatpush1.bf16.msra.mxu0 %v2539
        %3610 = vmatprep.subr.bf16.mxu0 %v2548
        %3611 = vmatpush1.bf16.msra.mxu0 %v2547
        %3612 = vmatprep.subr.bf16.mxu0 %v2556
        %3613 = vmatpush1.bf16.msra.mxu0 %v2555
        %3614 = vmatprep.subr.bf16.mxu0 %v2564
        %3615 = vmatpush1.bf16.msra.mxu0 %v2563
        %3616 = vmatprep.subr.bf16.mxu0 %v2572
        %3617 = vmatpush1.bf16.msra.mxu0 %v2571
        %3618 = vmatprep.subr.bf16.mxu0 %v2580
        %3619 = vmatpush1.bf16.msra.mxu0 %v2579
        %3620 = vmatprep.subr.bf16.mxu0 %v2588
        %3621 = vmatpush1.bf16.msra.mxu0 %v2587
        %3622 = vmatprep.subr.bf16.mxu0 %v2596
        %3623 = vmatpush1.bf16.msra.mxu0 %v2595
        %3624 = vmatprep.subr.bf16.mxu0 %v2604
        %3625 = vmatpush1.bf16.msra.mxu0 %v2603
        %3626 = vmatprep.subr.bf16.mxu0 %v2612
        %3627 = vmatpush1.bf16.msra.mxu0 %v2611
        %3628 = vmatprep.subr.bf16.mxu0 %v2620
        %3629 = vmatpush1.bf16.msra.mxu0 %v2619
        %3630 = vmatprep.mubr.bf16.mxu0 %v786
        %3631 = vmatmul.mubr.bf16.gmra.mrb[0].mxu0 %v785
        %v3632 = vpop.f32.mrb[0].mxu0
        %v3633 = vadd.f32 %v3592, %v3632
        %v3634 = vpop.f32.mrb[0].mxu0
        %v3635 = vadd.f32 %v3594, %v3634
        %v3636 = vpop.f32.mrb[0].mxu0
        %v3637 = vpop.f32.mrb[0].mxu0
        %3638 = vdwg.mxu0
        %3639 = vmatprep.subr.bf16.mxu0 %v2628
        %3640 = vmatpush1.bf16.msra.mxu0 %v2627
        %3641 = vmatprep.subr.bf16.mxu0 %v2636
        %3642 = vmatpush1.bf16.msra.mxu0 %v2635
        %3643 = vmatprep.subr.bf16.mxu0 %v2644
        %3644 = vmatpush1.bf16.msra.mxu0 %v2643
        %3645 = vmatprep.subr.bf16.mxu0 %v2652
        %3646 = vmatpush1.bf16.msra.mxu0 %v2651
        %3647 = vmatprep.subr.bf16.mxu0 %v2660
        %3648 = vmatpush1.bf16.msra.mxu0 %v2659
        %3649 = vmatprep.subr.bf16.mxu0 %v2668
        %3650 = vmatpush1.bf16.msra.mxu0 %v2667
        %3651 = vmatprep.subr.bf16.mxu0 %v2676
        %3652 = vmatpush1.bf16.msra.mxu0 %v2675
        %3653 = vmatprep.subr.bf16.mxu0 %v2684
        %3654 = vmatpush1.bf16.msra.mxu0 %v2683
        %3655 = vmatprep.subr.bf16.mxu0 %v2692
        %3656 = vmatpush1.bf16.msra.mxu0 %v2691
        %3657 = vmatprep.subr.bf16.mxu0 %v2700
        %3658 = vmatpush1.bf16.msra.mxu0 %v2699
        %3659 = vmatprep.subr.bf16.mxu0 %v2708
        %3660 = vmatpush1.bf16.msra.mxu0 %v2707
        %3661 = vmatprep.subr.bf16.mxu0 %v2716
        %3662 = vmatpush1.bf16.msra.mxu0 %v2715
        %3663 = vmatprep.subr.bf16.mxu0 %v2724
        %3664 = vmatpush1.bf16.msra.mxu0 %v2723
        %3665 = vmatprep.subr.bf16.mxu0 %v2732
        %3666 = vmatpush1.bf16.msra.mxu0 %v2731
        %3667 = vmatprep.subr.bf16.mxu0 %v2740
        %3668 = vmatpush1.bf16.msra.mxu0 %v2739
        %3669 = vmatprep.subr.bf16.mxu0 %v2748
        %3670 = vmatpush1.bf16.msra.mxu0 %v2747
        %3671 = vmatprep.mubr.bf16.mxu0 %v788
        %3672 = vmatmul.mubr.bf16.gmra.mrb[0].mxu0 %v787
        %v3673 = vpop.f32.mrb[0].mxu0
        %v3674 = vadd.f32 %v3633, %v3673
        %v3675 = vpop.f32.mrb[0].mxu0
        %v3676 = vadd.f32 %v3635, %v3675
        %v3677 = vpop.f32.mrb[0].mxu0
        %v3678 = vpop.f32.mrb[0].mxu0
        %3679 = vdwg.mxu0
        %3680 = vmatprep.subr.bf16.mxu0 %v2756
        %3681 = vmatpush1.bf16.msra.mxu0 %v2755
        %3682 = vmatprep.subr.bf16.mxu0 %v2764
        %3683 = vmatpush1.bf16.msra.mxu0 %v2763
        %3684 = vmatprep.subr.bf16.mxu0 %v2772
        %3685 = vmatpush1.bf16.msra.mxu0 %v2771
        %3686 = vmatprep.subr.bf16.mxu0 %v2780
        %3687 = vmatpush1.bf16.msra.mxu0 %v2779
        %3688 = vmatprep.subr.bf16.mxu0 %v2788
        %3689 = vmatpush1.bf16.msra.mxu0 %v2787
        %3690 = vmatprep.subr.bf16.mxu0 %v2796
        %3691 = vmatpush1.bf16.msra.mxu0 %v2795
        %3692 = vmatprep.subr.bf16.mxu0 %v2804
        %3693 = vmatpush1.bf16.msra.mxu0 %v2803
        %3694 = vmatprep.subr.bf16.mxu0 %v2812
        %3695 = vmatpush1.bf16.msra.mxu0 %v2811
        %3696 = vmatprep.subr.bf16.mxu0 %v2820
        %3697 = vmatpush1.bf16.msra.mxu0 %v2819
        %3698 = vmatprep.subr.bf16.mxu0 %v2828
        %3699 = vmatpush1.bf16.msra.mxu0 %v2827
        %3700 = vmatprep.subr.bf16.mxu0 %v2836
        %3701 = vmatpush1.bf16.msra.mxu0 %v2835
        %3702 = vmatprep.subr.bf16.mxu0 %v2844
        %3703 = vmatpush1.bf16.msra.mxu0 %v2843
        %3704 = vmatprep.subr.bf16.mxu0 %v2852
        %3705 = vmatpush1.bf16.msra.mxu0 %v2851
        %3706 = vmatprep.subr.bf16.mxu0 %v2860
        %3707 = vmatpush1.bf16.msra.mxu0 %v2859
        %3708 = vmatprep.subr.bf16.mxu0 %v2868
        %3709 = vmatpush1.bf16.msra.mxu0 %v2867
        %3710 = vmatprep.subr.bf16.mxu0 %v2876
        %3711 = vmatpush1.bf16.msra.mxu0 %v2875
        %3712 = vmatprep.mubr.bf16.mxu0 %v790
        %3713 = vmatmul.mubr.bf16.gmra.mrb[0].mxu0 %v789
        %v3714 = vpop.f32.mrb[0].mxu0
        %v3715 = vadd.f32 %v3674, %v3714
        %v3716 = vpop.f32.mrb[0].mxu0
        %v3717 = vadd.f32 %v3676, %v3716
        %v3718 = vpop.f32.mrb[0].mxu0
        %v3719 = vpop.f32.mrb[0].mxu0
        %3720 = vdwg.mxu0
        %3721 = vmatprep.subr.bf16.mxu0 %v2374
        %3722 = vmatpush1.bf16.msra.mxu0 %v2373
        %3723 = vmatprep.subr.bf16.mxu0 %v2382
        %3724 = vmatpush1.bf16.msra.mxu0 %v2381
        %3725 = vmatprep.subr.bf16.mxu0 %v2390
        %3726 = vmatpush1.bf16.msra.mxu0 %v2389
        %3727 = vmatprep.subr.bf16.mxu0 %v2398
        %3728 = vmatpush1.bf16.msra.mxu0 %v2397
        %3729 = vmatprep.subr.bf16.mxu0 %v2406
        %3730 = vmatpush1.bf16.msra.mxu0 %v2405
        %3731 = vmatprep.subr.bf16.mxu0 %v2414
        %3732 = vmatpush1.bf16.msra.mxu0 %v2413
        %3733 = vmatprep.subr.bf16.mxu0 %v2422
        %3734 = vmatpush1.bf16.msra.mxu0 %v2421
        %3735 = vmatprep.subr.bf16.mxu0 %v2430
        %3736 = vmatpush1.bf16.msra.mxu0 %v2429
        %3737 = vmatprep.subr.bf16.mxu0 %v2438
        %3738 = vmatpush1.bf16.msra.mxu0 %v2437
        %3739 = vmatprep.subr.bf16.mxu0 %v2446
        %3740 = vmatpush1.bf16.msra.mxu0 %v2445
        %3741 = vmatprep.subr.bf16.mxu0 %v2454
        %3742 = vmatpush1.bf16.msra.mxu0 %v2453
        %3743 = vmatprep.subr.bf16.mxu0 %v2462
        %3744 = vmatpush1.bf16.msra.mxu0 %v2461
        %3745 = vmatprep.subr.bf16.mxu0 %v2470
        %3746 = vmatpush1.bf16.msra.mxu0 %v2469
        %3747 = vmatprep.subr.bf16.mxu0 %v2478
        %3748 = vmatpush1.bf16.msra.mxu0 %v2477
        %3749 = vmatprep.subr.bf16.mxu0 %v2486
        %3750 = vmatpush1.bf16.msra.mxu0 %v2485
        %3751 = vmatprep.subr.bf16.mxu0 %v2494
        %3752 = vmatpush1.bf16.msra.mxu0 %v2493
        %3753 = vmatprep.mubr.bf16.mxu0 %v784
        %3754 = vmatmul.mubr.bf16.gmra.mrb[0].mxu0 %v783
        %v3755 = vpop.f32.mrb[0].mxu0
        %v3756 = vadd.f32 %v812, %v3755
        %v3757 = vpop.f32.mrb[0].mxu0
        %v3758 = vadd.f32 %v816, %v3757
        %v3759 = vpop.f32.mrb[0].mxu0
        %v3760 = vpop.f32.mrb[0].mxu0
        %3761 = vdwg.mxu0
        %3762 = vmatprep.subr.bf16.mxu0 %v2502
        %3763 = vmatpush1.bf16.msra.mxu0 %v2501
        %3764 = vmatprep.subr.bf16.mxu0 %v2510
        %3765 = vmatpush1.bf16.msra.mxu0 %v2509
        %3766 = vmatprep.subr.bf16.mxu0 %v2518
        %3767 = vmatpush1.bf16.msra.mxu0 %v2517
        %3768 = vmatprep.subr.bf16.mxu0 %v2526
        %3769 = vmatpush1.bf16.msra.mxu0 %v2525
        %3770 = vmatprep.subr.bf16.mxu0 %v2534
        %3771 = vmatpush1.bf16.msra.mxu0 %v2533
        %3772 = vmatprep.subr.bf16.mxu0 %v2542
        %3773 = vmatpush1.bf16.msra.mxu0 %v2541
        %3774 = vmatprep.subr.bf16.mxu0 %v2550
        %3775 = vmatpush1.bf16.msra.mxu0 %v2549
        %3776 = vmatprep.subr.bf16.mxu0 %v2558
        %3777 = vmatpush1.bf16.msra.mxu0 %v2557
        %3778 = vmatprep.subr.bf16.mxu0 %v2566
        %3779 = vmatpush1.bf16.msra.mxu0 %v2565
        %3780 = vmatprep.subr.bf16.mxu0 %v2574
        %3781 = vmatpush1.bf16.msra.mxu0 %v2573
        %3782 = vmatprep.subr.bf16.mxu0 %v2582
        %3783 = vmatpush1.bf16.msra.mxu0 %v2581
        %3784 = vmatprep.subr.bf16.mxu0 %v2590
        %3785 = vmatpush1.bf16.msra.mxu0 %v2589
        %3786 = vmatprep.subr.bf16.mxu0 %v2598
        %3787 = vmatpush1.bf16.msra.mxu0 %v2597
        %3788 = vmatprep.subr.bf16.mxu0 %v2606
        %3789 = vmatpush1.bf16.msra.mxu0 %v2605
        %3790 = vmatprep.subr.bf16.mxu0 %v2614
        %3791 = vmatpush1.bf16.msra.mxu0 %v2613
        %3792 = vmatprep.subr.bf16.mxu0 %v2622
        %3793 = vmatpush1.bf16.msra.mxu0 %v2621
        %3794 = vmatprep.mubr.bf16.mxu0 %v786
        %3795 = vmatmul.mubr.bf16.gmra.mrb[0].mxu0 %v785
        %v3796 = vpop.f32.mrb[0].mxu0
        %v3797 = vadd.f32 %v3756, %v3796
        %v3798 = vpop.f32.mrb[0].mxu0
        %v3799 = vadd.f32 %v3758, %v3798
        %v3800 = vpop.f32.mrb[0].mxu0
        %v3801 = vpop.f32.mrb[0].mxu0
        %3802 = vdwg.mxu0
        %3803 = vmatprep.subr.bf16.mxu0 %v2630
        %3804 = vmatpush1.bf16.msra.mxu0 %v2629
        %3805 = vmatprep.subr.bf16.mxu0 %v2638
        %3806 = vmatpush1.bf16.msra.mxu0 %v2637
        %3807 = vmatprep.subr.bf16.mxu0 %v2646
        %3808 = vmatpush1.bf16.msra.mxu0 %v2645
        %3809 = vmatprep.subr.bf16.mxu0 %v2654
        %3810 = vmatpush1.bf16.msra.mxu0 %v2653
        %3811 = vmatprep.subr.bf16.mxu0 %v2662
        %3812 = vmatpush1.bf16.msra.mxu0 %v2661
        %3813 = vmatprep.subr.bf16.mxu0 %v2670
        %3814 = vmatpush1.bf16.msra.mxu0 %v2669
        %3815 = vmatprep.subr.bf16.mxu0 %v2678
        %3816 = vmatpush1.bf16.msra.mxu0 %v2677
        %3817 = vmatprep.subr.bf16.mxu0 %v2686
        %3818 = vmatpush1.bf16.msra.mxu0 %v2685
        %3819 = vmatprep.subr.bf16.mxu0 %v2694
        %3820 = vmatpush1.bf16.msra.mxu0 %v2693
        %3821 = vmatprep.subr.bf16.mxu0 %v2702
        %3822 = vmatpush1.bf16.msra.mxu0 %v2701
        %3823 = vmatprep.subr.bf16.mxu0 %v2710
        %3824 = vmatpush1.bf16.msra.mxu0 %v2709
        %3825 = vmatprep.subr.bf16.mxu0 %v2718
        %3826 = vmatpush1.bf16.msra.mxu0 %v2717
        %3827 = vmatprep.subr.bf16.mxu0 %v2726
        %3828 = vmatpush1.bf16.msra.mxu0 %v2725
        %3829 = vmatprep.subr.bf16.mxu0 %v2734
        %3830 = vmatpush1.bf16.msra.mxu0 %v2733
        %3831 = vmatprep.subr.bf16.mxu0 %v2742
        %3832 = vmatpush1.bf16.msra.mxu0 %v2741
        %3833 = vmatprep.subr.bf16.mxu0 %v2750
        %3834 = vmatpush1.bf16.msra.mxu0 %v2749
        %3835 = vmatprep.mubr.bf16.mxu0 %v788
        %3836 = vmatmul.mubr.bf16.gmra.mrb[0].mxu0 %v787
        %v3837 = vpop.f32.mrb[0].mxu0
        %v3838 = vadd.f32 %v3797, %v3837
        %v3839 = vpop.f32.mrb[0].mxu0
        %v3840 = vadd.f32 %v3799, %v3839
        %v3841 = vpop.f32.mrb[0].mxu0
        %v3842 = vpop.f32.mrb[0].mxu0
        %3843 = vdwg.mxu0
        %3844 = vmatprep.subr.bf16.mxu0 %v2758
        %3845 = vmatpush1.bf16.msra.mxu0 %v2757
        %3846 = vmatprep.subr.bf16.mxu0 %v2766
        %3847 = vmatpush1.bf16.msra.mxu0 %v2765
        %3848 = vmatprep.subr.bf16.mxu0 %v2774
        %3849 = vmatpush1.bf16.msra.mxu0 %v2773
        %3850 = vmatprep.subr.bf16.mxu0 %v2782
        %3851 = vmatpush1.bf16.msra.mxu0 %v2781
        %3852 = vmatprep.subr.bf16.mxu0 %v2790
        %3853 = vmatpush1.bf16.msra.mxu0 %v2789
        %3854 = vmatprep.subr.bf16.mxu0 %v2798
        %3855 = vmatpush1.bf16.msra.mxu0 %v2797
        %3856 = vmatprep.subr.bf16.mxu0 %v2806
        %3857 = vmatpush1.bf16.msra.mxu0 %v2805
        %3858 = vmatprep.subr.bf16.mxu0 %v2814
        %3859 = vmatpush1.bf16.msra.mxu0 %v2813
        %3860 = vmatprep.subr.bf16.mxu0 %v2822
        %3861 = vmatpush1.bf16.msra.mxu0 %v2821
        %3862 = vmatprep.subr.bf16.mxu0 %v2830
        %3863 = vmatpush1.bf16.msra.mxu0 %v2829
        %3864 = vmatprep.subr.bf16.mxu0 %v2838
        %3865 = vmatpush1.bf16.msra.mxu0 %v2837
        %3866 = vmatprep.subr.bf16.mxu0 %v2846
        %3867 = vmatpush1.bf16.msra.mxu0 %v2845
        %3868 = vmatprep.subr.bf16.mxu0 %v2854
        %3869 = vmatpush1.bf16.msra.mxu0 %v2853
        %3870 = vmatprep.subr.bf16.mxu0 %v2862
        %3871 = vmatpush1.bf16.msra.mxu0 %v2861
        %3872 = vmatprep.subr.bf16.mxu0 %v2870
        %3873 = vmatpush1.bf16.msra.mxu0 %v2869
        %3874 = vmatprep.subr.bf16.mxu0 %v2878
        %3875 = vmatpush1.bf16.msra.mxu0 %v2877
        %3876 = vmatprep.mubr.bf16.mxu0 %v790
        %3877 = vmatmul.mubr.bf16.gmra.mrb[0].mxu0 %v789
        %v3878 = vpop.f32.mrb[0].mxu0
        %v3879 = vadd.f32 %v3838, %v3878
        %v3880 = vpop.f32.mrb[0].mxu0
        %v3881 = vadd.f32 %v3840, %v3880
        %v3882 = vpop.f32.mrb[0].mxu0
        %v3883 = vpop.f32.mrb[0].mxu0
        %3884 = vdwg.mxu0
        %3885 = vmatprep.subr.bf16.mxu0 %v2376
        %3886 = vmatpush1.bf16.msra.mxu0 %v2375
        %3887 = vmatprep.subr.bf16.mxu0 %v2384
        %3888 = vmatpush1.bf16.msra.mxu0 %v2383
        %3889 = vmatprep.subr.bf16.mxu0 %v2392
        %3890 = vmatpush1.bf16.msra.mxu0 %v2391
        %3891 = vmatprep.subr.bf16.mxu0 %v2400
        %3892 = vmatpush1.bf16.msra.mxu0 %v2399
        %3893 = vmatprep.subr.bf16.mxu0 %v2408
        %3894 = vmatpush1.bf16.msra.mxu0 %v2407
        %3895 = vmatprep.subr.bf16.mxu0 %v2416
        %3896 = vmatpush1.bf16.msra.mxu0 %v2415
        %3897 = vmatprep.subr.bf16.mxu0 %v2424
        %3898 = vmatpush1.bf16.msra.mxu0 %v2423
        %3899 = vmatprep.subr.bf16.mxu0 %v2432
        %3900 = vmatpush1.bf16.msra.mxu0 %v2431
        %3901 = vmatprep.subr.bf16.mxu0 %v2440
        %3902 = vmatpush1.bf16.msra.mxu0 %v2439
        %3903 = vmatprep.subr.bf16.mxu0 %v2448
        %3904 = vmatpush1.bf16.msra.mxu0 %v2447
        %3905 = vmatprep.subr.bf16.mxu0 %v2456
        %3906 = vmatpush1.bf16.msra.mxu0 %v2455
        %3907 = vmatprep.subr.bf16.mxu0 %v2464
        %3908 = vmatpush1.bf16.msra.mxu0 %v2463
        %3909 = vmatprep.subr.bf16.mxu0 %v2472
        %3910 = vmatpush1.bf16.msra.mxu0 %v2471
        %3911 = vmatprep.subr.bf16.mxu0 %v2480
        %3912 = vmatpush1.bf16.msra.mxu0 %v2479
        %3913 = vmatprep.subr.bf16.mxu0 %v2488
        %3914 = vmatpush1.bf16.msra.mxu0 %v2487
        %3915 = vmatprep.subr.bf16.mxu0 %v2496
        %3916 = vmatpush1.bf16.msra.mxu0 %v2495
        %3917 = vmatprep.mubr.bf16.mxu0 %v784
        %3918 = vmatmul.mubr.bf16.gmra.mrb[0].mxu0 %v783
        %v3919 = vpop.f32.mrb[0].mxu0
        %v3920 = vadd.f32 %v820, %v3919
        %v3921 = vpop.f32.mrb[0].mxu0
        %v3922 = vadd.f32 %v824, %v3921
        %v3923 = vpop.f32.mrb[0].mxu0
        %v3924 = vpop.f32.mrb[0].mxu0
        %3925 = vdwg.mxu0
        %3926 = vmatprep.subr.bf16.mxu0 %v2504
        %3927 = vmatpush1.bf16.msra.mxu0 %v2503
        %3928 = vmatprep.subr.bf16.mxu0 %v2512
        %3929 = vmatpush1.bf16.msra.mxu0 %v2511
        %3930 = vmatprep.subr.bf16.mxu0 %v2520
        %3931 = vmatpush1.bf16.msra.mxu0 %v2519
        %3932 = vmatprep.subr.bf16.mxu0 %v2528
        %3933 = vmatpush1.bf16.msra.mxu0 %v2527
        %3934 = vmatprep.subr.bf16.mxu0 %v2536
        %3935 = vmatpush1.bf16.msra.mxu0 %v2535
        %3936 = vmatprep.subr.bf16.mxu0 %v2544
        %3937 = vmatpush1.bf16.msra.mxu0 %v2543
        %3938 = vmatprep.subr.bf16.mxu0 %v2552
        %3939 = vmatpush1.bf16.msra.mxu0 %v2551
        %3940 = vmatprep.subr.bf16.mxu0 %v2560
        %3941 = vmatpush1.bf16.msra.mxu0 %v2559
        %3942 = vmatprep.subr.bf16.mxu0 %v2568
        %3943 = vmatpush1.bf16.msra.mxu0 %v2567
        %3944 = vmatprep.subr.bf16.mxu0 %v2576
        %3945 = vmatpush1.bf16.msra.mxu0 %v2575
        %3946 = vmatprep.subr.bf16.mxu0 %v2584
        %3947 = vmatpush1.bf16.msra.mxu0 %v2583
        %3948 = vmatprep.subr.bf16.mxu0 %v2592
        %3949 = vmatpush1.bf16.msra.mxu0 %v2591
        %3950 = vmatprep.subr.bf16.mxu0 %v2600
        %3951 = vmatpush1.bf16.msra.mxu0 %v2599
        %3952 = vmatprep.subr.bf16.mxu0 %v2608
        %3953 = vmatpush1.bf16.msra.mxu0 %v2607
        %3954 = vmatprep.subr.bf16.mxu0 %v2616
        %3955 = vmatpush1.bf16.msra.mxu0 %v2615
        %3956 = vmatprep.subr.bf16.mxu0 %v2624
        %3957 = vmatpush1.bf16.msra.mxu0 %v2623
        %3958 = vmatprep.mubr.bf16.mxu0 %v786
        %3959 = vmatmul.mubr.bf16.gmra.mrb[0].mxu0 %v785
        %v3960 = vpop.f32.mrb[0].mxu0
        %v3961 = vadd.f32 %v3920, %v3960
        %v3962 = vpop.f32.mrb[0].mxu0
        %v3963 = vadd.f32 %v3922, %v3962
        %v3964 = vpop.f32.mrb[0].mxu0
        %v3965 = vpop.f32.mrb[0].mxu0
        %3966 = vdwg.mxu0
        %3967 = vmatprep.subr.bf16.mxu0 %v2632
        %3968 = vmatpush1.bf16.msra.mxu0 %v2631
        %3969 = vmatprep.subr.bf16.mxu0 %v2640
        %3970 = vmatpush1.bf16.msra.mxu0 %v2639
        %3971 = vmatprep.subr.bf16.mxu0 %v2648
        %3972 = vmatpush1.bf16.msra.mxu0 %v2647
        %3973 = vmatprep.subr.bf16.mxu0 %v2656
        %3974 = vmatpush1.bf16.msra.mxu0 %v2655
        %3975 = vmatprep.subr.bf16.mxu0 %v2664
        %3976 = vmatpush1.bf16.msra.mxu0 %v2663
        %3977 = vmatprep.subr.bf16.mxu0 %v2672
        %3978 = vmatpush1.bf16.msra.mxu0 %v2671
        %3979 = vmatprep.subr.bf16.mxu0 %v2680
        %3980 = vmatpush1.bf16.msra.mxu0 %v2679
        %3981 = vmatprep.subr.bf16.mxu0 %v2688
        %3982 = vmatpush1.bf16.msra.mxu0 %v2687
        %3983 = vmatprep.subr.bf16.mxu0 %v2696
        %3984 = vmatpush1.bf16.msra.mxu0 %v2695
        %3985 = vmatprep.subr.bf16.mxu0 %v2704
        %3986 = vmatpush1.bf16.msra.mxu0 %v2703
        %3987 = vmatprep.subr.bf16.mxu0 %v2712
        %3988 = vmatpush1.bf16.msra.mxu0 %v2711
        %3989 = vmatprep.subr.bf16.mxu0 %v2720
        %3990 = vmatpush1.bf16.msra.mxu0 %v2719
        %3991 = vmatprep.subr.bf16.mxu0 %v2728
        %3992 = vmatpush1.bf16.msra.mxu0 %v2727
        %3993 = vmatprep.subr.bf16.mxu0 %v2736
        %3994 = vmatpush1.bf16.msra.mxu0 %v2735
        %3995 = vmatprep.subr.bf16.mxu0 %v2744
        %3996 = vmatpush1.bf16.msra.mxu0 %v2743
        %3997 = vmatprep.subr.bf16.mxu0 %v2752
        %3998 = vmatpush1.bf16.msra.mxu0 %v2751
        %3999 = vmatprep.mubr.bf16.mxu0 %v788
        %4000 = vmatmul.mubr.bf16.gmra.mrb[0].mxu0 %v787
        %v4001 = vpop.f32.mrb[0].mxu0
        %v4002 = vadd.f32 %v3961, %v4001
        %v4003 = vpop.f32.mrb[0].mxu0
        %v4004 = vadd.f32 %v3963, %v4003
        %v4005 = vpop.f32.mrb[0].mxu0
        %v4006 = vpop.f32.mrb[0].mxu0
        %4007 = vdwg.mxu0
        %4008 = vmatprep.subr.bf16.mxu0 %v2760
        %4009 = vmatpush1.bf16.msra.mxu0 %v2759
        %4010 = vmatprep.subr.bf16.mxu0 %v2768
        %4011 = vmatpush1.bf16.msra.mxu0 %v2767
        %4012 = vmatprep.subr.bf16.mxu0 %v2776
        %4013 = vmatpush1.bf16.msra.mxu0 %v2775
        %4014 = vmatprep.subr.bf16.mxu0 %v2784
        %4015 = vmatpush1.bf16.msra.mxu0 %v2783
        %4016 = vmatprep.subr.bf16.mxu0 %v2792
        %4017 = vmatpush1.bf16.msra.mxu0 %v2791
        %4018 = vmatprep.subr.bf16.mxu0 %v2800
        %4019 = vmatpush1.bf16.msra.mxu0 %v2799
        %4020 = vmatprep.subr.bf16.mxu0 %v2808
        %4021 = vmatpush1.bf16.msra.mxu0 %v2807
        %4022 = vmatprep.subr.bf16.mxu0 %v2816
        %4023 = vmatpush1.bf16.msra.mxu0 %v2815
        %4024 = vmatprep.subr.bf16.mxu0 %v2824
        %4025 = vmatpush1.bf16.msra.mxu0 %v2823
        %4026 = vmatprep.subr.bf16.mxu0 %v2832
        %4027 = vmatpush1.bf16.msra.mxu0 %v2831
        %4028 = vmatprep.subr.bf16.mxu0 %v2840
        %4029 = vmatpush1.bf16.msra.mxu0 %v2839
        %4030 = vmatprep.subr.bf16.mxu0 %v2848
        %4031 = vmatpush1.bf16.msra.mxu0 %v2847
        %4032 = vmatprep.subr.bf16.mxu0 %v2856
        %4033 = vmatpush1.bf16.msra.mxu0 %v2855
        %4034 = vmatprep.subr.bf16.mxu0 %v2864
        %4035 = vmatpush1.bf16.msra.mxu0 %v2863
        %4036 = vmatprep.subr.bf16.mxu0 %v2872
        %4037 = vmatpush1.bf16.msra.mxu0 %v2871
        %4038 = vmatprep.subr.bf16.mxu0 %v2880
        %4039 = vmatpush1.bf16.msra.mxu0 %v2879
        %4040 = vmatprep.mubr.bf16.mxu0 %v790
        %4041 = vmatmul.mubr.bf16.gmra.mrb[0].mxu0 %v789
        %v4042 = vpop.f32.mrb[0].mxu0
        %v4043 = vadd.f32 %v4002, %v4042
        %v4044 = vpop.f32.mrb[0].mxu0
        %v4045 = vadd.f32 %v4004, %v4044
        %v4046 = vpop.f32.mrb[0].mxu0
        %v4047 = vpop.f32.mrb[0].mxu0
        %4048 = vdwg.mxu0
        %vm4049 = vcmp.ge.f32.partialorder %v3551, 0.0
        %vm4050 = vcmp.ge.f32.partialorder %v3553, 0.0
        %vm4051 = vcmp.ge.f32.partialorder %v3715, 0.0
        %vm4052 = vcmp.ge.f32.partialorder %v3717, 0.0
        %vm4053 = vcmp.ge.f32.partialorder %v3879, 0.0
        %vm4054 = vcmp.ge.f32.partialorder %v3881, 0.0
        %vm4055 = vcmp.ge.f32.partialorder %v4043, 0.0
        %vm4056 = vcmp.ge.f32.partialorder %v4045, 0.0
        %v4057 = vmul.f32 %v3551, 0.2
        %v4058 = vmul.f32 %v3553, 0.2
        %v4059 = vmul.f32 %v3715, 0.2
        %v4060 = vmul.f32 %v3717, 0.2
        %v4061 = vmul.f32 %v3879, 0.2
        %v4062 = vmul.f32 %v3881, 0.2
        %v4063 = vmul.f32 %v4043, 0.2
        %v4064 = vmul.f32 %v4045, 0.2
        %v4065 = vsel %vm4049, %v3551, %v4057
        %v4066 = vsel %vm4050, %v3553, %v4058
        %v4067 = vsel %vm4051, %v3715, %v4059
        %v4068 = vsel %vm4052, %v3717, %v4060
        %v4069 = vsel %vm4053, %v3879, %v4061
        %v4070 = vsel %vm4054, %v3881, %v4062
        %v4071 = vsel %vm4055, %v4043, %v4063
        %v4072 = vsel %vm4056, %v4045, %v4064
        %v4073 = vmul.f32 %v4065, 1.4142135
        %v4074 = vmul.f32 %v4066, 1.4142135
        %v4075 = vmul.f32 %v4067, 1.4142135
        %v4076 = vmul.f32 %v4068, 1.4142135
        %v4077 = vmul.f32 %v4069, 1.4142135
        %v4078 = vmul.f32 %v4070, 1.4142135
        %v4079 = vmul.f32 %v4071, 1.4142135
        %v4080 = vmul.f32 %v4072, 1.4142135
        %4081 = vst [vmem:[#allocation2] sm:$0xff] %v4073
        %4082 = vst [vmem:[#allocation2 + $0x8] sm:$0xff] %v4074
        %4083 = vst [vmem:[#allocation2 + $0x10] sm:$0xff] %v4075
        %4084 = vst [vmem:[#allocation2 + $0x18] sm:$0xff] %v4076
        %4085 = vst [vmem:[#allocation2 + $0x20] sm:$0xff] %v4077
        %4086 = vst [vmem:[#allocation2 + $0x28] sm:$0xff] %v4078
        %4087 = vst [vmem:[#allocation2 + $0x30] sm:$0xff] %v4079
        %4088 = vst [vmem:[#allocation2 + $0x38] sm:$0xff] %v4080
        %p4089 = scmp.eq.s32.totalorder %s20, 7
        // Predicated region
        $region45: #{mapper_cat_forward.1} parent=31 // pred_check
          %p4090 = pneg %p4089
        $region46: #{mapper_cat_forward.1} parent=31 // pred_check_branch
          %4092 = sbr.rel (%p4090) target = $region48
        $region47: #{mapper_cat_forward.1} parent=31 // pred_region
          %4093 = vst [vmem:[%s3] sm:$0xff] %v4073
          %4094 = vst [vmem:[%s3 + $0x8] sm:$0xff] %v4074
          %4095 = vst [vmem:[%s3 + $0x10] sm:$0xff] %v4075
          %4096 = vst [vmem:[%s3 + $0x18] sm:$0xff] %v4076
        $region48: #{mapper_cat_forward.1} parent=31 // pred_fallthru
          _
        // Predicated region
        $region49: #{mapper_cat_forward.1} parent=31 // pred_check
          %p4097 = pneg %p106
        $region50: #{mapper_cat_forward.1} parent=31 // pred_check_branch
          %4099 = sbr.rel (%p4097) target = $region52
        $region51: #{mapper_cat_forward.1} parent=31 // pred_region
          _
        $region52: #{mapper_cat_forward.1} parent=31 // pred_fallthru
          _
        // Predicated region
        $region53: #{mapper_cat_forward.1} parent=31 // pred_check
          %p4100 = pneg %p106
        $region54: #{mapper_cat_forward.1} parent=31 // pred_check_branch
          %4102 = sbr.rel (%p4100) target = $region56
        $region55: #{mapper_cat_forward.1} parent=31 // pred_region
          _
        $region56: #{mapper_cat_forward.1} parent=31 // pred_fallthru
          _
      $region32: #{mapper_cat_forward.1} parent=5 // pred_fallthru
        _
      %p4103 = scmp.le.s32.totalorder 2, %s15
      // Predicated region
      $region57: #{mapper_cat_forward.1} parent=5 // pred_check
        %p4104 = pneg %p4103
      $region58: #{mapper_cat_forward.1} parent=5 // pred_check_branch
        %4106 = sbr.rel (%p4104) target = $region60
      $region59: #{mapper_cat_forward.1} parent=5 // pred_region
        %s4107 = ssub.s32 %s15, 2
      $region60: #{mapper_cat_forward.1} parent=5 // pred_fallthru
        _
    $region6: #{mapper_cat_forward.1} parent=1 // loop_footer
      %s19 = sadd.s32 1, %s15
    $region7: #{mapper_cat_forward.1} parent=1 // loop_footer_branch
      %14 = sbr.rel target = $region3
    $region8: #{mapper_cat_forward.1} parent=1 // loop_exit
      _
    %4108 = vsyncpa [#allocation4], 1
    %s4109 = scalar_lea.sflag [#allocation4], 1
    %4110 = vsyncpa %s4109, 1
    %4111 = vsyncpa [#allocation6], 1
    %s4112 = scalar_lea.sflag [#allocation6], 1
    %4113 = vsyncpa %s4112, 1

</llo_original>
